<compile_context>
chip_gen: v6e
topology: v6e:2x2x1
jax: 0.10.0
libtpu: 0.0.40
codegen_flags: <defaults>
</compile_context>

<pallas_src>
import functools

import jax
import jax.numpy as jnp
from jax import lax
from jax.experimental import pallas as pl
from jax.experimental.pallas import tpu as pltpu

NEG_SLOPE = 0.1
BN_EPS = 1e-5


def _round_up(x, m):
    return (x + m - 1) // m * m


def _vmem_limit_bytes():
    """~75% of physical VMEM (≈96 MiB on v5e/v6e, ≈48 MiB on v7x)."""
    try:
        info = pltpu.get_tpu_info()
        cap = getattr(info, "vmem_capacity_bytes", None)
        if cap:
            return int(cap) * 3 // 4
    except Exception:
        pass
    return 48 * 1024 * 1024


def _resblock_kernel(p1_ref, mask_ref, w1_ref, s1_ref, b1_ref,
                     wa_ref, sa_ref, ba_ref, wb_ref, sb_ref, bb_ref,
                     o_ref, y_ref, hb_ref, acc_ref,
                     *, WP, OH, OW, nblocks):
    """Grid = (batch, block).  One ConvolutionBlock per grid step; the entry
    stride-2 conv runs under pl.when(j == 0).  The activation slab y stays
    resident in VMEM scratch for the whole block axis.

    Invariant: only the interior positions of y are ever meaningful; halo
    positions may hold (bounded) garbage.  The only place a zero halo is
    required is hb (the 3x3-conv input), which gets the single mask multiply.
    """
    j = pl.program_id(1)
    M2 = (OH - 1) * WP + OW        # rows touched by the shifted-row-slice conv trick
    off0 = WP + 1                  # padded-flat index of interior position (1, 1)

    def leaky(v):
        return jnp.maximum(v, NEG_SLOPE * v)

    # ---- entry Conv3x3/stride2 + BN + Leaky: one im2col matmul, first step only ----
    @pl.when(j == 0)
    def _():
        y0 = jnp.dot(p1_ref[0], w1_ref[...], preferred_element_type=jnp.float32)
        # Halo rows end up as leaky(shift): harmless garbage (never read as interior).
        y_ref[...] = leaky(y0 * s1_ref[...] + b1_ref[...])

    # ---- one residual ConvolutionBlock per grid step ----
    # Conv1x1 + BN + Leaky; mask so the 3x3 row-shift trick sees zero padding.
    h = jnp.dot(y_ref[...].astype(jnp.bfloat16), wa_ref[0],
                preferred_element_type=jnp.float32)
    h = leaky(h * sa_ref[0] + ba_ref[0]) * mask_ref[...]
    hb_ref[...] = h.astype(jnp.bfloat16)

    # Conv3x3/pad1 on the padded-flat slab: tap (kh,kw) is the contiguous row
    # slice of hb at offset kh*WP+kw -> 9 accumulating matmuls into VMEM scratch.
    acc_ref[...] = jnp.dot(hb_ref[pl.ds(0, M2), :], wb_ref[0, 0],
                           preferred_element_type=jnp.float32)
    for t in range(1, 9):
        kh, kw = divmod(t, 3)
        off = kh * WP + kw         # static; kh*WP is sublane-aligned (WP % 8 == 0)
        acc_ref[...] += jnp.dot(hb_ref[pl.ds(off, M2), :], wb_ref[0, t],
                                preferred_element_type=jnp.float32)
    # TODO(synk): on v5e (128-deep MXU) consider wrapper-side tap grouping into
    # (3*nh, nf) weights to raise contraction depth if measurement shows MXU-bound.

    # BN + Leaky + residual add, written straight back into the resident y slab.
    z = leaky(acc_ref[...] * sb_ref[0] + bb_ref[0])
    y_ref[pl.ds(off0, M2), :] = y_ref[pl.ds(off0, M2), :] + z

    # ---- single lane-dense store (only the OH*WP rows) after the last block ----
    @pl.when(j == nblocks - 1)
    def _():
        o_ref[0] = y_ref[pl.ds(WP, OH * WP), :]


def resblock_pallas(x_nchw, params):
    """Forward pass of `resblock` (inference-mode BN) as one fused Pallas TPU kernel."""
    N, inc, H, W = x_nchw.shape
    w_entry = params["entry"]["w"]                    # (nf, inc, 3, 3)
    nf = w_entry.shape[0]
    nh = nf // 2
    nblocks = len(params["blocks"])
    if nblocks < 1:
        raise ValueError("resblock_pallas requires num_blocks >= 1")

    # ---------------- plain-JAX glue (entry layer only) ----------------
    # F.pad(x, (1, 0, 1, 0)): 1 pixel on top / left, then 3x3 / stride 2 / pad 0.
    x = jnp.transpose(x_nchw, (0, 2, 3, 1))           # NHWC
    x = jnp.pad(x, ((0, 0), (1, 0), (1, 0), (0, 0)))
    Hp, Wp = H + 1, W + 1
    OH = (Hp - 3) // 2 + 1
    OW = (Wp - 3) // 2 + 1

    # Padded-flat slab layout used in the kernel: (HP*WP, C) with a 1-px halo.
    # WP is rounded up to a sublane multiple so tap offsets / the output store
    # stay (mostly) aligned; the extra columns are just more (zeroed) halo.
    HP = OH + 2
    WP = _round_up(OW + 2, 8)
    HPWP = HP * WP
    M2 = (OH - 1) * WP + OW

    # im2col patches for the stride-2 entry conv, in padded-flat row order,
    # contraction dim zero-padded to a lane multiple (lane-dense DMA / MXU feed).
    K1 = 9 * inc
    K1p = _round_up(K1, 128)
    taps = [x[:, kh:kh + 2 * OH - 1:2, kw:kw + 2 * OW - 1:2, :]
            for kh in range(3) for kw in range(3)]
    patches = jnp.concatenate(taps, axis=-1)          # (N, OH, OW, 9*inc)
    patches = jnp.pad(patches,
                      ((0, 0), (1, 1), (1, WP - OW - 1), (0, K1p - K1)))
    p1 = patches.reshape(N, HPWP, K1p).astype(jnp.bfloat16)

    # Interior (non-halo) row mask for the padded-flat layout.
    rows = jnp.arange(HPWP)
    rr, cc = rows // WP, rows % WP
    interior = (rr >= 1) & (rr <= OH) & (cc >= 1) & (cc <= OW)
    mask = interior.astype(jnp.float32).reshape(HPWP, 1)

    # ------------- parameters: bf16 matmul weights + folded f32 BN -------------
    w1 = jnp.transpose(w_entry, (2, 3, 1, 0)).reshape(K1, nf)
    w1 = jnp.pad(w1, ((0, K1p - K1), (0, 0))).astype(jnp.bfloat16)
    s1 = params["entry"]["scale"].reshape(1, nf).astype(jnp.float32)
    b1 = params["entry"]["shift"].reshape(1, nf).astype(jnp.float32)

    blocks = params["blocks"]
    WA = jnp.stack([b["w1"][:, :, 0, 0].T for b in blocks]).astype(jnp.bfloat16)      # (B, nf, nh)
    SA = jnp.stack([b["scale1"].reshape(1, nh) for b in blocks]).astype(jnp.float32)  # (B, 1, nh)
    BA = jnp.stack([b["shift1"].reshape(1, nh) for b in blocks]).astype(jnp.float32)
    WB = jnp.stack([jnp.transpose(b["w2"], (2, 3, 1, 0)).reshape(9, nh, nf)
                    for b in blocks]).astype(jnp.bfloat16)                            # (B, 9, nh, nf)
    SB = jnp.stack([b["scale2"].reshape(1, nf) for b in blocks]).astype(jnp.float32)
    BB = jnp.stack([b["shift2"].reshape(1, nf) for b in blocks]).astype(jnp.float32)

    kernel = functools.partial(_resblock_kernel, WP=WP, OH=OH, OW=OW,
                               nblocks=nblocks)

    # TODO(synk): for very large H*W on v7x (64 MiB VMEM), add a spatial row-tile
    # grid axis (tiles with a 1-row halo overlap, marked "parallel") so the
    # per-step working set shrinks and the second TensorCore gets work at N=1.
    # TODO(synk): constant-index operands (mask, w1, s1, b1) could use
    # pipeline_mode=pl.Buffered(1) to reclaim their second VMEM buffer on v7x.
    out = pl.pallas_call(
        kernel,
        out_shape=jax.ShapeDtypeStruct((N, OH * WP, nf), jnp.float32),
        grid_spec=pltpu.PrefetchScalarGridSpec(
            num_scalar_prefetch=0,
            grid=(N, nblocks),
            in_specs=[
                pl.BlockSpec((1, HPWP, K1p), lambda n, j: (n, 0, 0)),     # p1 (entry patches)
                pl.BlockSpec((HPWP, 1), lambda n, j: (0, 0)),             # interior mask
                pl.BlockSpec((K1p, nf), lambda n, j: (0, 0)),             # entry weight
                pl.BlockSpec((1, nf), lambda n, j: (0, 0)),               # entry BN scale
                pl.BlockSpec((1, nf), lambda n, j: (0, 0)),               # entry BN shift
                pl.BlockSpec((1, nf, nh), lambda n, j: (j, 0, 0)),        # per-block 1x1 W
                pl.BlockSpec((1, 1, nh), lambda n, j: (j, 0, 0)),         # per-block BN1 scale
                pl.BlockSpec((1, 1, nh), lambda n, j: (j, 0, 0)),         # per-block BN1 shift
                pl.BlockSpec((1, 9, nh, nf), lambda n, j: (j, 0, 0, 0)),  # per-block 3x3 W
                pl.BlockSpec((1, 1, nf), lambda n, j: (j, 0, 0)),         # per-block BN2 scale
                pl.BlockSpec((1, 1, nf), lambda n, j: (j, 0, 0)),         # per-block BN2 shift
            ],
            out_specs=pl.BlockSpec((1, OH * WP, nf), lambda n, j: (n, 0, 0)),
            scratch_shapes=[
                pltpu.VMEM((HPWP, nf), jnp.float32),    # resident activation slab y
                pltpu.VMEM((HPWP, nh), jnp.bfloat16),   # hb: 3x3-conv input (zeroed halo)
                pltpu.VMEM((M2, nf), jnp.float32),      # 3x3-conv accumulator
            ],
        ),
        compiler_params=pltpu.CompilerParams(
            dimension_semantics=("parallel", "arbitrary"),
            vmem_limit_bytes=_vmem_limit_bytes(),
        ),
    )(p1, mask, w1, s1, b1, WA, SA, BA, WB, SB, BB)

    # Strip the left/right halo columns and go back to NCHW for the PyTorch interface.
    out = out.reshape(N, OH, WP, nf)[:, :, 1:1 + OW, :]
    return jnp.transpose(out, (0, 3, 1, 2))


def resblock_reference(x_nchw, params):
    """Plain-JAX/XLA reference with the same bf16-operand / f32-accumulation policy."""
    def conv_bn_leaky(x, w, scale, shift, stride, pad):
        y = lax.conv_general_dilated(
            x.astype(jnp.bfloat16), w.astype(jnp.bfloat16),
            window_strides=(stride, stride),
            padding=((pad, pad), (pad, pad)),
            dimension_numbers=("NCHW", "OIHW", "NCHW"),
            preferred_element_type=jnp.float32)
        y = y * scale[None, :, None, None] + shift[None, :, None, None]
        return jnp.maximum(y, NEG_SLOPE * y)

    x = jnp.pad(x_nchw, ((0, 0), (0, 0), (1, 0), (1, 0)))    # F.pad(x, (1,0,1,0))
    y = conv_bn_leaky(x, params["entry"]["w"],
                      params["entry"]["scale"], params["entry"]["shift"], 2, 0)
    for b in params["blocks"]:
        res = y
        h = conv_bn_leaky(y, b["w1"], b["scale1"], b["shift1"], 1, 0)
        z = conv_bn_leaky(h, b["w2"], b["scale2"], b["shift2"], 1, 1)
        y = z + res
    return y


def init_resblock_params(key, inc, num_filters, num_blocks):
    """Deterministic params: PyTorch-style conv weights, BN folded to scale/shift."""
    def conv_w(k, outc, cin, ksz):
        bound = (cin * ksz * ksz) ** -0.5
        return jax.random.uniform(k, (outc, cin, ksz, ksz), jnp.float32, -bound, bound)

    def bn_fold(k, c):
        k1, k2, k3, k4 = jax.random.split(k, 4)
        gamma = jax.random.uniform(k1, (c,), jnp.float32, 0.5, 1.5)
        beta = jax.random.uniform(k2, (c,), jnp.float32, -0.2, 0.2)
        mean = 0.1 * jax.random.normal(k3, (c,), jnp.float32)
        var = jax.random.uniform(k4, (c,), jnp.float32, 0.5, 1.5)
        scale = gamma * lax.rsqrt(var + BN_EPS)
        shift = beta - mean * scale
        return scale, shift

    nf, nh = num_filters, num_filters // 2
    keys = jax.random.split(key, 2 + 4 * num_blocks)
    e_scale, e_shift = bn_fold(keys[1], nf)
    params = {"entry": {"w": conv_w(keys[0], nf, inc, 3), "scale": e_scale, "shift": e_shift},
              "blocks": []}
    for i in range(num_blocks):
        k0, k1, k2, k3 = keys[2 + 4 * i: 6 + 4 * i]
        s1, sh1 = bn_fold(k1, nh)
        s2, sh2 = bn_fold(k3, nf)
        params["blocks"].append({
            "w1": conv_w(k0, nh, nf, 1), "scale1": s1, "shift1": sh1,
            "w2": conv_w(k2, nf, nh, 3), "scale2": s2, "shift2": sh2,
        })
    return params


if __name__ == "__main__":
    key = jax.random.PRNGKey(0)
    kx, kp = jax.random.split(key)

    # Small shapes consistent with the module: resblock(inc=4, num_filters=8, num_blocks=2).
    N, INC, H, W = 2, 4, 16, 16
    NUM_FILTERS, NUM_BLOCKS = 8, 2

    x = jax.random.normal(kx, (N, INC, H, W), jnp.float32)
    params = init_resblock_params(kp, INC, NUM_FILTERS, NUM_BLOCKS)

    out = jax.block_until_ready(jax.jit(resblock_pallas)(x, params))

    ref = resblock_reference(x, params)
    OH = (H - 2) // 2 + 1
    assert out.shape == (N, NUM_FILTERS, OH, OH), out.shape
    err = float(jnp.max(jnp.abs(out - ref)))
    assert jnp.allclose(out, ref, atol=5e-3, rtol=5e-3), f"max abs err {err}"

    print("KERNEL_OK")
</pallas_src>

<mosaic_0001>
module attributes {stable_mosaic.version = 11 : i64} {
  func.func @_resblock_kernel(%arg0: i32, %arg1: i32, %arg2: memref<1x160x128xbf16, #tpu.memory_space<vmem>>, %arg3: memref<160x1xf32, #tpu.memory_space<vmem>>, %arg4: memref<128x8xbf16, #tpu.memory_space<vmem>>, %arg5: memref<1x8xf32, #tpu.memory_space<vmem>>, %arg6: memref<1x8xf32, #tpu.memory_space<vmem>>, %arg7: memref<1x8x4xbf16, #tpu.memory_space<vmem>>, %arg8: memref<1x1x4xf32, #tpu.memory_space<vmem>>, %arg9: memref<1x1x4xf32, #tpu.memory_space<vmem>>, %arg10: memref<1x9x4x8xbf16, #tpu.memory_space<vmem>>, %arg11: memref<1x1x8xf32, #tpu.memory_space<vmem>>, %arg12: memref<1x1x8xf32, #tpu.memory_space<vmem>>, %arg13: memref<1x128x8xf32, #tpu.memory_space<vmem>>, %arg14: memref<160x8xf32, #tpu.memory_space<vmem>>, %arg15: memref<160x4xbf16, #tpu.memory_space<vmem>>, %arg16: memref<120x8xf32, #tpu.memory_space<vmem>>) attributes {dimension_semantics = [#tpu.dimension_semantics<parallel>, #tpu.dimension_semantics<arbitrary>], iteration_bounds = array<i64: 2, 2>, scalar_prefetch = 0 : i64, scratch_operands = 3 : i64, tpu.core_type = #tpu.core_type<tc>, window_params = [{transform_indices = @transform_0, window_bounds = array<i64: 1, 160, 128>}, {pipeline_mode = #tpu.pipeline_mode<synchronous>, transform_indices = @transform_1, window_bounds = array<i64: 160, 1>}, {pipeline_mode = #tpu.pipeline_mode<synchronous>, transform_indices = @transform_2, window_bounds = array<i64: 128, 8>}, {pipeline_mode = #tpu.pipeline_mode<synchronous>, transform_indices = @transform_3, window_bounds = array<i64: 1, 8>}, {pipeline_mode = #tpu.pipeline_mode<synchronous>, transform_indices = @transform_4, window_bounds = array<i64: 1, 8>}, {transform_indices = @transform_5, window_bounds = array<i64: 1, 8, 4>}, {transform_indices = @transform_6, window_bounds = array<i64: 1, 1, 4>}, {transform_indices = @transform_7, window_bounds = array<i64: 1, 1, 4>}, {transform_indices = @transform_8, window_bounds = array<i64: 1, 9, 4, 8>}, {transform_indices = @transform_9, window_bounds = array<i64: 1, 1, 8>}, {transform_indices = @transform_10, window_bounds = array<i64: 1, 1, 8>}, {transform_indices = @transform_11, window_bounds = array<i64: 1, 128, 8>}]} {
    %c0_i32 = arith.constant 0 : i32
    %0 = arith.cmpi eq, %arg1, %c0_i32 : i32
    %1 = arith.extui %0 : i1 to i32
    %c0_i32_0 = arith.constant 0 : i32
    %2 = arith.cmpi ne, %1, %c0_i32_0 : i32
    scf.if %2 {
      %c0_113 = arith.constant 0 : index
      %c0_114 = arith.constant 0 : index
      %c0_115 = arith.constant 0 : index
      %103 = vector.load %arg2[%c0_113, %c0_114, %c0_115] : memref<1x160x128xbf16, #tpu.memory_space<vmem>>, vector<1x160x128xbf16>
      %104 = vector.shape_cast %103 : vector<1x160x128xbf16> to vector<160x128xbf16>
      %c0_116 = arith.constant 0 : index
      %c0_117 = arith.constant 0 : index
      %105 = vector.load %arg4[%c0_116, %c0_117] : memref<128x8xbf16, #tpu.memory_space<vmem>>, vector<128x8xbf16>
      %cst_118 = arith.constant dense<0.000000e+00> : vector<160x8xf32>
      %106 = tpu.matmul %104, %105, %cst_118 {dimension_numbers = #tpu.dot_dimension_numbers<[1], [0], [0], [1], [0, 0, 1, 1], [], []>} : vector<160x128xbf16>, vector<128x8xbf16>, vector<160x8xf32> -> vector<160x8xf32>
      %c0_119 = arith.constant 0 : index
      %c0_120 = arith.constant 0 : index
      %107 = vector.load %arg5[%c0_119, %c0_120] : memref<1x8xf32, #tpu.memory_space<vmem>>, vector<1x8xf32>
      %108 = vector.broadcast %107 : vector<1x8xf32> to vector<160x8xf32>
      %109 = arith.mulf %106, %108 : vector<160x8xf32>
      %c0_121 = arith.constant 0 : index
      %c0_122 = arith.constant 0 : index
      %110 = vector.load %arg6[%c0_121, %c0_122] : memref<1x8xf32, #tpu.memory_space<vmem>>, vector<1x8xf32>
      %111 = vector.broadcast %110 : vector<1x8xf32> to vector<160x8xf32>
      %112 = arith.addf %109, %111 : vector<160x8xf32>
      %cst_123 = arith.constant 1.000000e-01 : f32
      %113 = vector.broadcast %cst_123 : f32 to vector<160x8xf32>
      %114 = arith.mulf %113, %112 : vector<160x8xf32>
      %115 = arith.maximumf %112, %114 : vector<160x8xf32>
      %c0_124 = arith.constant 0 : index
      %c0_125 = arith.constant 0 : index
      %116 = vector.load %arg14[%c0_124, %c0_125] : memref<160x8xf32, #tpu.memory_space<vmem>>, vector<160x8xf32>
      tpu.vector_store %arg14[%c0_124, %c0_125], %115 {strides = array<i32>} : memref<160x8xf32, #tpu.memory_space<vmem>>, vector<160x8xf32>,
    } else {
    }
    %c0 = arith.constant 0 : index
    %c0_1 = arith.constant 0 : index
    %3 = vector.load %arg14[%c0, %c0_1] : memref<160x8xf32, #tpu.memory_space<vmem>>, vector<160x8xf32>
    %4 = arith.truncf %3 : vector<160x8xf32> to vector<160x8xbf16>
    %c0_2 = arith.constant 0 : index
    %c0_3 = arith.constant 0 : index
    %c0_4 = arith.constant 0 : index
    %5 = vector.load %arg7[%c0_2, %c0_3, %c0_4] : memref<1x8x4xbf16, #tpu.memory_space<vmem>>, vector<1x8x4xbf16>
    %6 = vector.shape_cast %5 : vector<1x8x4xbf16> to vector<8x4xbf16>
    %cst = arith.constant dense<0.000000e+00> : vector<160x4xf32>
    %7 = tpu.matmul %4, %6, %cst {dimension_numbers = #tpu.dot_dimension_numbers<[1], [0], [0], [1], [0, 0, 1, 1], [], []>} : vector<160x8xbf16>, vector<8x4xbf16>, vector<160x4xf32> -> vector<160x4xf32>
    %c0_5 = arith.constant 0 : index
    %c0_6 = arith.constant 0 : index
    %c0_7 = arith.constant 0 : index
    %8 = vector.load %arg8[%c0_5, %c0_6, %c0_7] : memref<1x1x4xf32, #tpu.memory_space<vmem>>, vector<1x1x4xf32>
    %9 = vector.shape_cast %8 : vector<1x1x4xf32> to vector<1x4xf32>
    %10 = vector.broadcast %9 : vector<1x4xf32> to vector<160x4xf32>
    %11 = arith.mulf %7, %10 : vector<160x4xf32>
    %c0_8 = arith.constant 0 : index
    %c0_9 = arith.constant 0 : index
    %c0_10 = arith.constant 0 : index
    %12 = vector.load %arg9[%c0_8, %c0_9, %c0_10] : memref<1x1x4xf32, #tpu.memory_space<vmem>>, vector<1x1x4xf32>
    %13 = vector.shape_cast %12 : vector<1x1x4xf32> to vector<1x4xf32>
    %14 = vector.broadcast %13 : vector<1x4xf32> to vector<160x4xf32>
    %15 = arith.addf %11, %14 : vector<160x4xf32>
    %cst_11 = arith.constant 1.000000e-01 : f32
    %16 = vector.broadcast %cst_11 : f32 to vector<160x4xf32>
    %17 = arith.mulf %16, %15 : vector<160x4xf32>
    %18 = arith.maximumf %15, %17 : vector<160x4xf32>
    %c0_12 = arith.constant 0 : index
    %c0_13 = arith.constant 0 : index
    %19 = vector.load %arg3[%c0_12, %c0_13] : memref<160x1xf32, #tpu.memory_space<vmem>>, vector<160x1xf32>
    %20 = vector.broadcast %19 : vector<160x1xf32> to vector<160x4xf32>
    %21 = arith.mulf %18, %20 : vector<160x4xf32>
    %22 = arith.truncf %21 : vector<160x4xf32> to vector<160x4xbf16>
    %c0_14 = arith.constant 0 : index
    %c0_15 = arith.constant 0 : index
    %23 = vector.load %arg15[%c0_14, %c0_15] : memref<160x4xbf16, #tpu.memory_space<vmem>>, vector<160x4xbf16>
    tpu.vector_store %arg15[%c0_14, %c0_15], %22 {strides = array<i32>} : memref<160x4xbf16, #tpu.memory_space<vmem>>, vector<160x4xbf16>,
    %c0_16 = arith.constant 0 : index
    %c0_17 = arith.constant 0 : index
    %24 = vector.load %arg15[%c0_16, %c0_17] : memref<160x4xbf16, #tpu.memory_space<vmem>>, vector<120x4xbf16>
    %c0_18 = arith.constant 0 : index
    %c0_19 = arith.constant 0 : index
    %c0_20 = arith.constant 0 : index
    %c0_21 = arith.constant 0 : index
    %25 = vector.load %arg10[%c0_18, %c0_19, %c0_20, %c0_21] : memref<1x9x4x8xbf16, #tpu.memory_space<vmem>>, vector<1x1x4x8xbf16>
    %26 = vector.shape_cast %25 : vector<1x1x4x8xbf16> to vector<4x8xbf16>
    %cst_22 = arith.constant dense<0.000000e+00> : vector<120x8xf32>
    %27 = tpu.matmul %24, %26, %cst_22 {dimension_numbers = #tpu.dot_dimension_numbers<[1], [0], [0], [1], [0, 0, 1, 1], [], []>} : vector<120x4xbf16>, vector<4x8xbf16>, vector<120x8xf32> -> vector<120x8xf32>
    %c0_23 = arith.constant 0 : index
    %c0_24 = arith.constant 0 : index
    %28 = vector.load %arg16[%c0_23, %c0_24] : memref<120x8xf32, #tpu.memory_space<vmem>>, vector<120x8xf32>
    tpu.vector_store %arg16[%c0_23, %c0_24], %27 {strides = array<i32>} : memref<120x8xf32, #tpu.memory_space<vmem>>, vector<120x8xf32>,
    %c0_25 = arith.constant 0 : index
    %c0_26 = arith.constant 0 : index
    %29 = vector.load %arg16[%c0_25, %c0_26] : memref<120x8xf32, #tpu.memory_space<vmem>>, vector<120x8xf32>
    %c1 = arith.constant 1 : index
    %c0_27 = arith.constant 0 : index
    %30 = vector.load %arg15[%c1, %c0_27] : memref<160x4xbf16, #tpu.memory_space<vmem>>, vector<120x4xbf16>
    %c0_28 = arith.constant 0 : index
    %c1_29 = arith.constant 1 : index
    %c0_30 = arith.constant 0 : index
    %c0_31 = arith.constant 0 : index
    %31 = vector.load %arg10[%c0_28, %c1_29, %c0_30, %c0_31] : memref<1x9x4x8xbf16, #tpu.memory_space<vmem>>, vector<1x1x4x8xbf16>
    %32 = vector.shape_cast %31 : vector<1x1x4x8xbf16> to vector<4x8xbf16>
    %cst_32 = arith.constant dense<0.000000e+00> : vector<120x8xf32>
    %33 = tpu.matmul %30, %32, %cst_32 {dimension_numbers = #tpu.dot_dimension_numbers<[1], [0], [0], [1], [0, 0, 1, 1], [], []>} : vector<120x4xbf16>, vector<4x8xbf16>, vector<120x8xf32> -> vector<120x8xf32>
    %34 = arith.addf %29, %33 : vector<120x8xf32>
    %c0_33 = arith.constant 0 : index
    %c0_34 = arith.constant 0 : index
    %35 = vector.load %arg16[%c0_33, %c0_34] : memref<120x8xf32, #tpu.memory_space<vmem>>, vector<120x8xf32>
    tpu.vector_store %arg16[%c0_33, %c0_34], %34 {strides = array<i32>} : memref<120x8xf32, #tpu.memory_space<vmem>>, vector<120x8xf32>,
    %c0_35 = arith.constant 0 : index
    %c0_36 = arith.constant 0 : index
    %36 = vector.load %arg16[%c0_35, %c0_36] : memref<120x8xf32, #tpu.memory_space<vmem>>, vector<120x8xf32>
    %c2 = arith.constant 2 : index
    %c0_37 = arith.constant 0 : index
    %37 = vector.load %arg15[%c2, %c0_37] : memref<160x4xbf16, #tpu.memory_space<vmem>>, vector<120x4xbf16>
    %c0_38 = arith.constant 0 : index
    %c2_39 = arith.constant 2 : index
    %c0_40 = arith.constant 0 : index
    %c0_41 = arith.constant 0 : index
    %38 = vector.load %arg10[%c0_38, %c2_39, %c0_40, %c0_41] : memref<1x9x4x8xbf16, #tpu.memory_space<vmem>>, vector<1x1x4x8xbf16>
    %39 = vector.shape_cast %38 : vector<1x1x4x8xbf16> to vector<4x8xbf16>
    %cst_42 = arith.constant dense<0.000000e+00> : vector<120x8xf32>
    %40 = tpu.matmul %37, %39, %cst_42 {dimension_numbers = #tpu.dot_dimension_numbers<[1], [0], [0], [1], [0, 0, 1, 1], [], []>} : vector<120x4xbf16>, vector<4x8xbf16>, vector<120x8xf32> -> vector<120x8xf32>
    %41 = arith.addf %36, %40 : vector<120x8xf32>
    %c0_43 = arith.constant 0 : index
    %c0_44 = arith.constant 0 : index
    %42 = vector.load %arg16[%c0_43, %c0_44] : memref<120x8xf32, #tpu.memory_space<vmem>>, vector<120x8xf32>
    tpu.vector_store %arg16[%c0_43, %c0_44], %41 {strides = array<i32>} : memref<120x8xf32, #tpu.memory_space<vmem>>, vector<120x8xf32>,
    %c0_45 = arith.constant 0 : index
    %c0_46 = arith.constant 0 : index
    %43 = vector.load %arg16[%c0_45, %c0_46] : memref<120x8xf32, #tpu.memory_space<vmem>>, vector<120x8xf32>
    %c16 = arith.constant 16 : index
    %c0_47 = arith.constant 0 : index
    %44 = vector.load %arg15[%c16, %c0_47] : memref<160x4xbf16, #tpu.memory_space<vmem>>, vector<120x4xbf16>
    %c0_48 = arith.constant 0 : index
    %c3 = arith.constant 3 : index
    %c0_49 = arith.constant 0 : index
    %c0_50 = arith.constant 0 : index
    %45 = vector.load %arg10[%c0_48, %c3, %c0_49, %c0_50] : memref<1x9x4x8xbf16, #tpu.memory_space<vmem>>, vector<1x1x4x8xbf16>
    %46 = vector.shape_cast %45 : vector<1x1x4x8xbf16> to vector<4x8xbf16>
    %cst_51 = arith.constant dense<0.000000e+00> : vector<120x8xf32>
    %47 = tpu.matmul %44, %46, %cst_51 {dimension_numbers = #tpu.dot_dimension_numbers<[1], [0], [0], [1], [0, 0, 1, 1], [], []>} : vector<120x4xbf16>, vector<4x8xbf16>, vector<120x8xf32> -> vector<120x8xf32>
    %48 = arith.addf %43, %47 : vector<120x8xf32>
    %c0_52 = arith.constant 0 : index
    %c0_53 = arith.constant 0 : index
    %49 = vector.load %arg16[%c0_52, %c0_53] : memref<120x8xf32, #tpu.memory_space<vmem>>, vector<120x8xf32>
    tpu.vector_store %arg16[%c0_52, %c0_53], %48 {strides = array<i32>} : memref<120x8xf32, #tpu.memory_space<vmem>>, vector<120x8xf32>,
    %c0_54 = arith.constant 0 : index
    %c0_55 = arith.constant 0 : index
    %50 = vector.load %arg16[%c0_54, %c0_55] : memref<120x8xf32, #tpu.memory_space<vmem>>, vector<120x8xf32>
    %c17 = arith.constant 17 : index
    %c0_56 = arith.constant 0 : index
    %51 = vector.load %arg15[%c17, %c0_56] : memref<160x4xbf16, #tpu.memory_space<vmem>>, vector<120x4xbf16>
    %c0_57 = arith.constant 0 : index
    %c4 = arith.constant 4 : index
    %c0_58 = arith.constant 0 : index
    %c0_59 = arith.constant 0 : index
    %52 = vector.load %arg10[%c0_57, %c4, %c0_58, %c0_59] : memref<1x9x4x8xbf16, #tpu.memory_space<vmem>>, vector<1x1x4x8xbf16>
    %53 = vector.shape_cast %52 : vector<1x1x4x8xbf16> to vector<4x8xbf16>
    %cst_60 = arith.constant dense<0.000000e+00> : vector<120x8xf32>
    %54 = tpu.matmul %51, %53, %cst_60 {dimension_numbers = #tpu.dot_dimension_numbers<[1], [0], [0], [1], [0, 0, 1, 1], [], []>} : vector<120x4xbf16>, vector<4x8xbf16>, vector<120x8xf32> -> vector<120x8xf32>
    %55 = arith.addf %50, %54 : vector<120x8xf32>
    %c0_61 = arith.constant 0 : index
    %c0_62 = arith.constant 0 : index
    %56 = vector.load %arg16[%c0_61, %c0_62] : memref<120x8xf32, #tpu.memory_space<vmem>>, vector<120x8xf32>
    tpu.vector_store %arg16[%c0_61, %c0_62], %55 {strides = array<i32>} : memref<120x8xf32, #tpu.memory_space<vmem>>, vector<120x8xf32>,
    %c0_63 = arith.constant 0 : index
    %c0_64 = arith.constant 0 : index
    %57 = vector.load %arg16[%c0_63, %c0_64] : memref<120x8xf32, #tpu.memory_space<vmem>>, vector<120x8xf32>
    %c18 = arith.constant 18 : index
    %c0_65 = arith.constant 0 : index
    %58 = vector.load %arg15[%c18, %c0_65] : memref<160x4xbf16, #tpu.memory_space<vmem>>, vector<120x4xbf16>
    %c0_66 = arith.constant 0 : index
    %c5 = arith.constant 5 : index
    %c0_67 = arith.constant 0 : index
    %c0_68 = arith.constant 0 : index
    %59 = vector.load %arg10[%c0_66, %c5, %c0_67, %c0_68] : memref<1x9x4x8xbf16, #tpu.memory_space<vmem>>, vector<1x1x4x8xbf16>
    %60 = vector.shape_cast %59 : vector<1x1x4x8xbf16> to vector<4x8xbf16>
    %cst_69 = arith.constant dense<0.000000e+00> : vector<120x8xf32>
    %61 = tpu.matmul %58, %60, %cst_69 {dimension_numbers = #tpu.dot_dimension_numbers<[1], [0], [0], [1], [0, 0, 1, 1], [], []>} : vector<120x4xbf16>, vector<4x8xbf16>, vector<120x8xf32> -> vector<120x8xf32>
    %62 = arith.addf %57, %61 : vector<120x8xf32>
    %c0_70 = arith.constant 0 : index
    %c0_71 = arith.constant 0 : index
    %63 = vector.load %arg16[%c0_70, %c0_71] : memref<120x8xf32, #tpu.memory_space<vmem>>, vector<120x8xf32>
    tpu.vector_store %arg16[%c0_70, %c0_71], %62 {strides = array<i32>} : memref<120x8xf32, #tpu.memory_space<vmem>>, vector<120x8xf32>,
    %c0_72 = arith.constant 0 : index
    %c0_73 = arith.constant 0 : index
    %64 = vector.load %arg16[%c0_72, %c0_73] : memref<120x8xf32, #tpu.memory_space<vmem>>, vector<120x8xf32>
    %c32 = arith.constant 32 : index
    %c0_74 = arith.constant 0 : index
    %65 = vector.load %arg15[%c32, %c0_74] : memref<160x4xbf16, #tpu.memory_space<vmem>>, vector<120x4xbf16>
    %c0_75 = arith.constant 0 : index
    %c6 = arith.constant 6 : index
    %c0_76 = arith.constant 0 : index
    %c0_77 = arith.constant 0 : index
    %66 = vector.load %arg10[%c0_75, %c6, %c0_76, %c0_77] : memref<1x9x4x8xbf16, #tpu.memory_space<vmem>>, vector<1x1x4x8xbf16>
    %67 = vector.shape_cast %66 : vector<1x1x4x8xbf16> to vector<4x8xbf16>
    %cst_78 = arith.constant dense<0.000000e+00> : vector<120x8xf32>
    %68 = tpu.matmul %65, %67, %cst_78 {dimension_numbers = #tpu.dot_dimension_numbers<[1], [0], [0], [1], [0, 0, 1, 1], [], []>} : vector<120x4xbf16>, vector<4x8xbf16>, vector<120x8xf32> -> vector<120x8xf32>
    %69 = arith.addf %64, %68 : vector<120x8xf32>
    %c0_79 = arith.constant 0 : index
    %c0_80 = arith.constant 0 : index
    %70 = vector.load %arg16[%c0_79, %c0_80] : memref<120x8xf32, #tpu.memory_space<vmem>>, vector<120x8xf32>
    tpu.vector_store %arg16[%c0_79, %c0_80], %69 {strides = array<i32>} : memref<120x8xf32, #tpu.memory_space<vmem>>, vector<120x8xf32>,
    %c0_81 = arith.constant 0 : index
    %c0_82 = arith.constant 0 : index
    %71 = vector.load %arg16[%c0_81, %c0_82] : memref<120x8xf32, #tpu.memory_space<vmem>>, vector<120x8xf32>
    %c33 = arith.constant 33 : index
    %c0_83 = arith.constant 0 : index
    %72 = vector.load %arg15[%c33, %c0_83] : memref<160x4xbf16, #tpu.memory_space<vmem>>, vector<120x4xbf16>
    %c0_84 = arith.constant 0 : index
    %c7 = arith.constant 7 : index
    %c0_85 = arith.constant 0 : index
    %c0_86 = arith.constant 0 : index
    %73 = vector.load %arg10[%c0_84, %c7, %c0_85, %c0_86] : memref<1x9x4x8xbf16, #tpu.memory_space<vmem>>, vector<1x1x4x8xbf16>
    %74 = vector.shape_cast %73 : vector<1x1x4x8xbf16> to vector<4x8xbf16>
    %cst_87 = arith.constant dense<0.000000e+00> : vector<120x8xf32>
    %75 = tpu.matmul %72, %74, %cst_87 {dimension_numbers = #tpu.dot_dimension_numbers<[1], [0], [0], [1], [0, 0, 1, 1], [], []>} : vector<120x4xbf16>, vector<4x8xbf16>, vector<120x8xf32> -> vector<120x8xf32>
    %76 = arith.addf %71, %75 : vector<120x8xf32>
    %c0_88 = arith.constant 0 : index
    %c0_89 = arith.constant 0 : index
    %77 = vector.load %arg16[%c0_88, %c0_89] : memref<120x8xf32, #tpu.memory_space<vmem>>, vector<120x8xf32>
    tpu.vector_store %arg16[%c0_88, %c0_89], %76 {strides = array<i32>} : memref<120x8xf32, #tpu.memory_space<vmem>>, vector<120x8xf32>,
    %c0_90 = arith.constant 0 : index
    %c0_91 = arith.constant 0 : index
    %78 = vector.load %arg16[%c0_90, %c0_91] : memref<120x8xf32, #tpu.memory_space<vmem>>, vector<120x8xf32>
    %c34 = arith.constant 34 : index
    %c0_92 = arith.constant 0 : index
    %79 = vector.load %arg15[%c34, %c0_92] : memref<160x4xbf16, #tpu.memory_space<vmem>>, vector<120x4xbf16>
    %c0_93 = arith.constant 0 : index
    %c8 = arith.constant 8 : index
    %c0_94 = arith.constant 0 : index
    %c0_95 = arith.constant 0 : index
    %80 = vector.load %arg10[%c0_93, %c8, %c0_94, %c0_95] : memref<1x9x4x8xbf16, #tpu.memory_space<vmem>>, vector<1x1x4x8xbf16>
    %81 = vector.shape_cast %80 : vector<1x1x4x8xbf16> to vector<4x8xbf16>
    %cst_96 = arith.constant dense<0.000000e+00> : vector<120x8xf32>
    %82 = tpu.matmul %79, %81, %cst_96 {dimension_numbers = #tpu.dot_dimension_numbers<[1], [0], [0], [1], [0, 0, 1, 1], [], []>} : vector<120x4xbf16>, vector<4x8xbf16>, vector<120x8xf32> -> vector<120x8xf32>
    %83 = arith.addf %78, %82 : vector<120x8xf32>
    %c0_97 = arith.constant 0 : index
    %c0_98 = arith.constant 0 : index
    %84 = vector.load %arg16[%c0_97, %c0_98] : memref<120x8xf32, #tpu.memory_space<vmem>>, vector<120x8xf32>
    tpu.vector_store %arg16[%c0_97, %c0_98], %83 {strides = array<i32>} : memref<120x8xf32, #tpu.memory_space<vmem>>, vector<120x8xf32>,
    %c0_99 = arith.constant 0 : index
    %c0_100 = arith.constant 0 : index
    %85 = vector.load %arg16[%c0_99, %c0_100] : memref<120x8xf32, #tpu.memory_space<vmem>>, vector<120x8xf32>
    %c0_101 = arith.constant 0 : index
    %c0_102 = arith.constant 0 : index
    %c0_103 = arith.constant 0 : index
    %86 = vector.load %arg11[%c0_101, %c0_102, %c0_103] : memref<1x1x8xf32, #tpu.memory_space<vmem>>, vector<1x1x8xf32>
    %87 = vector.shape_cast %86 : vector<1x1x8xf32> to vector<1x8xf32>
    %88 = vector.broadcast %87 : vector<1x8xf32> to vector<120x8xf32>
    %89 = arith.mulf %85, %88 : vector<120x8xf32>
    %c0_104 = arith.constant 0 : index
    %c0_105 = arith.constant 0 : index
    %c0_106 = arith.constant 0 : index
    %90 = vector.load %arg12[%c0_104, %c0_105, %c0_106] : memref<1x1x8xf32, #tpu.memory_space<vmem>>, vector<1x1x8xf32>
    %91 = vector.shape_cast %90 : vector<1x1x8xf32> to vector<1x8xf32>
    %92 = vector.broadcast %91 : vector<1x8xf32> to vector<120x8xf32>
    %93 = arith.addf %89, %92 : vector<120x8xf32>
    %cst_107 = arith.constant 1.000000e-01 : f32
    %94 = vector.broadcast %cst_107 : f32 to vector<120x8xf32>
    %95 = arith.mulf %94, %93 : vector<120x8xf32>
    %96 = arith.maximumf %93, %95 : vector<120x8xf32>
    %c17_108 = arith.constant 17 : index
    %c0_109 = arith.constant 0 : index
    %97 = vector.load %arg14[%c17_108, %c0_109] : memref<160x8xf32, #tpu.memory_space<vmem>>, vector<120x8xf32>
    %98 = arith.addf %97, %96 : vector<120x8xf32>
    %c17_110 = arith.constant 17 : index
    %c0_111 = arith.constant 0 : index
    %99 = vector.load %arg14[%c17_110, %c0_111] : memref<160x8xf32, #tpu.memory_space<vmem>>, vector<120x8xf32>
    tpu.vector_store %arg14[%c17_110, %c0_111], %98 {strides = array<i32>} : memref<160x8xf32, #tpu.memory_space<vmem>>, vector<120x8xf32>,
    %c1_i32 = arith.constant 1 : i32
    %100 = arith.cmpi eq, %arg1, %c1_i32 : i32
    %101 = arith.extui %100 : i1 to i32
    %c0_i32_112 = arith.constant 0 : i32
    %102 = arith.cmpi ne, %101, %c0_i32_112 : i32
    scf.if %102 {
      %c16_113 = arith.constant 16 : index
      %c0_114 = arith.constant 0 : index
      %103 = vector.load %arg14[%c16_113, %c0_114] : memref<160x8xf32, #tpu.memory_space<vmem>>, vector<128x8xf32>
      %c0_115 = arith.constant 0 : index
      %c0_116 = arith.constant 0 : index
      %c0_117 = arith.constant 0 : index
      %104 = vector.load %arg13[%c0_115, %c0_116, %c0_117] : memref<1x128x8xf32, #tpu.memory_space<vmem>>, vector<1x128x8xf32>
      %105 = vector.shape_cast %104 : vector<1x128x8xf32> to vector<128x8xf32>
      %106 = vector.shape_cast %103 : vector<128x8xf32> to vector<1x128x8xf32>
      tpu.vector_store %arg13[%c0_115, %c0_116, %c0_117], %106 {strides = array<i32>} : memref<1x128x8xf32, #tpu.memory_space<vmem>>, vector<1x128x8xf32>,
    } else {
    }
    return
  }
  func.func @transform_0(%arg0: i32, %arg1: i32) -> (i32, i32, i32) {
    %c0_i32 = arith.constant 0 : i32
    %c0_i32_0 = arith.constant 0 : i32
    %c0_i32_1 = arith.constant 0 : i32
    return %arg0, %c0_i32, %c0_i32_0 : i32, i32, i32
  }
  func.func @transform_1(%arg0: i32, %arg1: i32) -> (i32, i32) {
    %c0_i32 = arith.constant 0 : i32
    %c0_i32_0 = arith.constant 0 : i32
    %c0_i32_1 = arith.constant 0 : i32
    return %c0_i32, %c0_i32_0 : i32, i32
  }
  func.func @transform_2(%arg0: i32, %arg1: i32) -> (i32, i32) {
    %c0_i32 = arith.constant 0 : i32
    %c0_i32_0 = arith.constant 0 : i32
    %c0_i32_1 = arith.constant 0 : i32
    return %c0_i32, %c0_i32_0 : i32, i32
  }
  func.func @transform_3(%arg0: i32, %arg1: i32) -> (i32, i32) {
    %c0_i32 = arith.constant 0 : i32
    %c0_i32_0 = arith.constant 0 : i32
    %c0_i32_1 = arith.constant 0 : i32
    return %c0_i32, %c0_i32_0 : i32, i32
  }
  func.func @transform_4(%arg0: i32, %arg1: i32) -> (i32, i32) {
    %c0_i32 = arith.constant 0 : i32
    %c0_i32_0 = arith.constant 0 : i32
    %c0_i32_1 = arith.constant 0 : i32
    return %c0_i32, %c0_i32_0 : i32, i32
  }
  func.func @transform_5(%arg0: i32, %arg1: i32) -> (i32, i32, i32) {
    %c0_i32 = arith.constant 0 : i32
    %c0_i32_0 = arith.constant 0 : i32
    %c0_i32_1 = arith.constant 0 : i32
    return %arg1, %c0_i32, %c0_i32_0 : i32, i32, i32
  }
  func.func @transform_6(%arg0: i32, %arg1: i32) -> (i32, i32, i32) {
    %c0_i32 = arith.constant 0 : i32
    %c0_i32_0 = arith.constant 0 : i32
    %c0_i32_1 = arith.constant 0 : i32
    return %arg1, %c0_i32, %c0_i32_0 : i32, i32, i32
  }
  func.func @transform_7(%arg0: i32, %arg1: i32) -> (i32, i32, i32) {
    %c0_i32 = arith.constant 0 : i32
    %c0_i32_0 = arith.constant 0 : i32
    %c0_i32_1 = arith.constant 0 : i32
    return %arg1, %c0_i32, %c0_i32_0 : i32, i32, i32
  }
  func.func @transform_8(%arg0: i32, %arg1: i32) -> (i32, i32, i32, i32) {
    %c0_i32 = arith.constant 0 : i32
    %c0_i32_0 = arith.constant 0 : i32
    %c0_i32_1 = arith.constant 0 : i32
    %c0_i32_2 = arith.constant 0 : i32
    return %arg1, %c0_i32, %c0_i32_0, %c0_i32_1 : i32, i32, i32, i32
  }
  func.func @transform_9(%arg0: i32, %arg1: i32) -> (i32, i32, i32) {
    %c0_i32 = arith.constant 0 : i32
    %c0_i32_0 = arith.constant 0 : i32
    %c0_i32_1 = arith.constant 0 : i32
    return %arg1, %c0_i32, %c0_i32_0 : i32, i32, i32
  }
  func.func @transform_10(%arg0: i32, %arg1: i32) -> (i32, i32, i32) {
    %c0_i32 = arith.constant 0 : i32
    %c0_i32_0 = arith.constant 0 : i32
    %c0_i32_1 = arith.constant 0 : i32
    return %arg1, %c0_i32, %c0_i32_0 : i32, i32, i32
  }
  func.func @transform_11(%arg0: i32, %arg1: i32) -> (i32, i32, i32) {
    %c0_i32 = arith.constant 0 : i32
    %c0_i32_0 = arith.constant 0 : i32
    %c0_i32_1 = arith.constant 0 : i32
    return %arg0, %c0_i32, %c0_i32_0 : i32, i32, i32
  }
}

</mosaic_0001>

<llo_original>
// kernel: resblock_pallas.1
$region0: #{resblock_pallas.1}
  #allocation0 [shape = 'u32[]', space=smem, size = 0x4, offset = 0x4, fixed_abs, tag = 'smem constant byte address 0x4 - core index']
  #allocation1 [shape = 'u32[144,128]{1,0:T(1,128)}', space=vmem, size = 0x12000, scoped, tag = 'internal scratch']
  #allocation2 [shape = 'f32[160,8]{1,0:T(8,128)}', space=vmem, size = 0x14000, scoped, tag = 'scratch operand']
  #allocation3 [shape = 'bf16[160,4]{1,0:T(8,128)(2,1)}', space=vmem, size = 0xa000, scoped, tag = 'scratch operand']
  #allocation4 [shape = 'f32[120,8]{1,0:T(8,128)}', space=vmem, size = 0xf000, scoped, tag = 'scratch operand']
  %s0 = inlined_call_operand.vmem [shape: bf16[2,160,128], index: 0, kind: input, shape index: {}]
  %s1 = inlined_call_operand.vmem [shape: f32[160,1], index: 1, kind: input, shape index: {}]
  %s2 = inlined_call_operand.vmem [shape: bf16[128,8], index: 2, kind: input, shape index: {}]
  %s3 = inlined_call_operand.vmem [shape: f32[1,8], index: 3, kind: input, shape index: {}]
  %s4 = inlined_call_operand.vmem [shape: f32[1,8], index: 4, kind: input, shape index: {}]
  %s5 = inlined_call_operand.vmem [shape: bf16[2,8,4], index: 5, kind: input, shape index: {}]
  %s6 = inlined_call_operand.vmem [shape: f32[2,1,4], index: 6, kind: input, shape index: {}]
  %s7 = inlined_call_operand.vmem [shape: f32[2,1,4], index: 7, kind: input, shape index: {}]
  %s8 = inlined_call_operand.vmem [shape: bf16[2,9,4,8], index: 8, kind: input, shape index: {}]
  %s9 = inlined_call_operand.vmem [shape: f32[2,1,8], index: 9, kind: input, shape index: {}]
  %s10 = inlined_call_operand.vmem [shape: f32[2,1,8], index: 10, kind: input, shape index: {}]
  %s11 = inlined_call_operand.vmem [shape: f32[2,128,8], index: 11, kind: output, shape index: {}]
  %s12 = sld [smem:[#allocation0]]
  $region85: #{resblock_pallas.1} parent=0
    _
  %s14 = ssub.s32 1, %s12
  %s15 = scalar_select 0, %s14, %s12
  loop: start=0, step=1, limit=6
  $region2: #{resblock_pallas.1} parent=0 // loop_pre_header
    _
  $region3: #{resblock_pallas.1} parent=0 // loop_header
    %s17 = sphi 0, %s21
    %p18 = scmp.ge.s32.totalorder %s17, 6
    %s24 = sphi 0, %s36
    %s25 = sphi 0, %s32
    %s26 = sphi 0, %s24
    %s27 = sphi 0, %s25
    %s28 = sphi 0, %s26
    %s29 = sphi 0, %s27
    %s39 = sphi 0, %s41
    %s42 = sphi 0, %s39
    %s43 = sphi 0, %s42
    %s59 = sphi 0, %s43
    %s63 = sphi 0, %s63
    %s65 = sphi 0, %s63
    %s66 = sphi 0, %s65
    %s80 = sphi 0, %s66
    %s84 = sphi 0, %s84
    %s86 = sphi 0, %s84
    %s87 = sphi 0, %s86
    %s101 = sphi 0, %s87
    %s105 = sphi 0, %s105
    %s107 = sphi 0, %s105
    %s108 = sphi 0, %s107
    %s122 = sphi 0, %s108
    %s126 = sphi 0, %s126
    %s128 = sphi 0, %s126
    %s129 = sphi 0, %s128
    %s143 = sphi 0, %s129
    %s149 = sphi 0, %s151
    %s152 = sphi 0, %s149
    %s153 = sphi 0, %s152
    %s169 = sphi 0, %s153
    %s175 = sphi 0, %s177
    %s178 = sphi 0, %s175
    %s179 = sphi 0, %s178
    %s195 = sphi 0, %s179
    %s201 = sphi 0, %s203
    %s204 = sphi 0, %s201
    %s205 = sphi 0, %s204
    %s221 = sphi 0, %s205
    %s227 = sphi 0, %s229
    %s230 = sphi 0, %s227
    %s231 = sphi 0, %s230
    %s247 = sphi 0, %s231
    %s253 = sphi 0, %s255
    %s256 = sphi 0, %s253
    %s257 = sphi 0, %s256
    %s273 = sphi 0, %s257
    %s279 = sphi 0, %s281
    %s282 = sphi 0, %s279
    %s283 = sphi 0, %s282
    %s299 = sphi 0, %s283
    %s305 = sphi 0, %s307
    %s308 = sphi 0, %s305
    %s309 = sphi 0, %s308
    %s325 = sphi 0, %s309
  $region4: #{resblock_pallas.1} parent=0 // loop_header_branch
    %20 = sbr.rel (%p18) target = $region8
  $region5: #{resblock_pallas.1} parent=0 // loop_body
    %s22 = ssub.s32 %s17, 1
    %s23 = ssub.s32 %s17, 2
    %s30 = sadd.s32 1, %s25
    %p31 = scmp.ge.s32.totalorder %s30, 2
    %s32 = scalar_select %p31, 0, %s30
    %s33 = sadd.s32 1, %s24
    %s34 = scalar_select %p31, %s33, %s24
    %p35 = scmp.ge.s32.totalorder %s34, 2
    %s36 = scalar_select %p35, 0, %s34
    %s37 = ssub.s32 %s24, %s36
    %p38 = scmp.eq.s32.totalorder %s37, 0
    %s40 = sadd.s32 %s39, 1
    %s41 = scalar_select %p38, %s39, %s40
    %p44 = pneg %p38
    %p45 = scmp.eq.s32.totalorder %s17, 3
    %p46 = por %p44, %p45
    %p47 = scmp.ne.s32.totalorder %s39, %s42
    %p48 = scmp.eq.s32.totalorder %s17, 0
    %p49 = por %p47, %p48
    %p50 = scmp.ne.s32.totalorder %s39, %s42
    %p51 = scmp.eq.s32.totalorder %s22, 3
    %p52 = por %p50, %p51
    %p53 = scmp.ne.s32.totalorder %s42, %s43
    %p54 = scmp.eq.s32.totalorder %s22, 0
    %p55 = por %p53, %p54
    %p56 = scmp.ne.s32.totalorder %s42, %s43
    %p57 = scmp.eq.s32.totalorder %s23, 3
    %p58 = por %p56, %p57
    %p60 = scmp.ne.s32.totalorder %s43, %s59
    %p61 = scmp.eq.s32.totalorder %s23, 0
    %p62 = por %p60, %p61
    %s64 = sadd.s32 %s63, 1
    %p67 = scmp.eq.s32.totalorder %s17, 3
    %p68 = scmp.ne.s32.totalorder %s63, %s65
    %p69 = scmp.eq.s32.totalorder %s17, 0
    %p70 = por %p68, %p69
    %p71 = scmp.ne.s32.totalorder %s63, %s65
    %p72 = scmp.eq.s32.totalorder %s22, 3
    %p73 = por %p71, %p72
    %p74 = scmp.ne.s32.totalorder %s65, %s66
    %p75 = scmp.eq.s32.totalorder %s22, 0
    %p76 = por %p74, %p75
    %p77 = scmp.ne.s32.totalorder %s65, %s66
    %p78 = scmp.eq.s32.totalorder %s23, 3
    %p79 = por %p77, %p78
    %p81 = scmp.ne.s32.totalorder %s66, %s80
    %p82 = scmp.eq.s32.totalorder %s23, 0
    %p83 = por %p81, %p82
    %s85 = sadd.s32 %s84, 1
    %p88 = scmp.eq.s32.totalorder %s17, 3
    %p89 = scmp.ne.s32.totalorder %s84, %s86
    %p90 = scmp.eq.s32.totalorder %s17, 0
    %p91 = por %p89, %p90
    %p92 = scmp.ne.s32.totalorder %s84, %s86
    %p93 = scmp.eq.s32.totalorder %s22, 3
    %p94 = por %p92, %p93
    %p95 = scmp.ne.s32.totalorder %s86, %s87
    %p96 = scmp.eq.s32.totalorder %s22, 0
    %p97 = por %p95, %p96
    %p98 = scmp.ne.s32.totalorder %s86, %s87
    %p99 = scmp.eq.s32.totalorder %s23, 3
    %p100 = por %p98, %p99
    %p102 = scmp.ne.s32.totalorder %s87, %s101
    %p103 = scmp.eq.s32.totalorder %s23, 0
    %p104 = por %p102, %p103
    %s106 = sadd.s32 %s105, 1
    %p109 = scmp.eq.s32.totalorder %s17, 3
    %p110 = scmp.ne.s32.totalorder %s105, %s107
    %p111 = scmp.eq.s32.totalorder %s17, 0
    %p112 = por %p110, %p111
    %p113 = scmp.ne.s32.totalorder %s105, %s107
    %p114 = scmp.eq.s32.totalorder %s22, 3
    %p115 = por %p113, %p114
    %p116 = scmp.ne.s32.totalorder %s107, %s108
    %p117 = scmp.eq.s32.totalorder %s22, 0
    %p118 = por %p116, %p117
    %p119 = scmp.ne.s32.totalorder %s107, %s108
    %p120 = scmp.eq.s32.totalorder %s23, 3
    %p121 = por %p119, %p120
    %p123 = scmp.ne.s32.totalorder %s108, %s122
    %p124 = scmp.eq.s32.totalorder %s23, 0
    %p125 = por %p123, %p124
    %s127 = sadd.s32 %s126, 1
    %p130 = scmp.eq.s32.totalorder %s17, 3
    %p131 = scmp.ne.s32.totalorder %s126, %s128
    %p132 = scmp.eq.s32.totalorder %s17, 0
    %p133 = por %p131, %p132
    %p134 = scmp.ne.s32.totalorder %s126, %s128
    %p135 = scmp.eq.s32.totalorder %s22, 3
    %p136 = por %p134, %p135
    %p137 = scmp.ne.s32.totalorder %s128, %s129
    %p138 = scmp.eq.s32.totalorder %s22, 0
    %p139 = por %p137, %p138
    %p140 = scmp.ne.s32.totalorder %s128, %s129
    %p141 = scmp.eq.s32.totalorder %s23, 3
    %p142 = por %p140, %p141
    %p144 = scmp.ne.s32.totalorder %s129, %s143
    %p145 = scmp.eq.s32.totalorder %s23, 0
    %p146 = por %p144, %p145
    %s147 = ssub.s32 %s25, %s32
    %p148 = scmp.eq.s32.totalorder %s147, 0
    %s150 = sadd.s32 %s149, 1
    %s151 = scalar_select %p148, %s149, %s150
    %p154 = pneg %p148
    %p155 = scmp.eq.s32.totalorder %s17, 3
    %p156 = por %p154, %p155
    %p157 = scmp.ne.s32.totalorder %s149, %s152
    %p158 = scmp.eq.s32.totalorder %s17, 0
    %p159 = por %p157, %p158
    %p160 = scmp.ne.s32.totalorder %s149, %s152
    %p161 = scmp.eq.s32.totalorder %s22, 3
    %p162 = por %p160, %p161
    %p163 = scmp.ne.s32.totalorder %s152, %s153
    %p164 = scmp.eq.s32.totalorder %s22, 0
    %p165 = por %p163, %p164
    %p166 = scmp.ne.s32.totalorder %s152, %s153
    %p167 = scmp.eq.s32.totalorder %s23, 3
    %p168 = por %p166, %p167
    %p170 = scmp.ne.s32.totalorder %s153, %s169
    %p171 = scmp.eq.s32.totalorder %s23, 0
    %p172 = por %p170, %p171
    %s173 = ssub.s32 %s25, %s32
    %p174 = scmp.eq.s32.totalorder %s173, 0
    %s176 = sadd.s32 %s175, 1
    %s177 = scalar_select %p174, %s175, %s176
    %p180 = pneg %p174
    %p181 = scmp.eq.s32.totalorder %s17, 3
    %p182 = por %p180, %p181
    %p183 = scmp.ne.s32.totalorder %s175, %s178
    %p184 = scmp.eq.s32.totalorder %s17, 0
    %p185 = por %p183, %p184
    %p186 = scmp.ne.s32.totalorder %s175, %s178
    %p187 = scmp.eq.s32.totalorder %s22, 3
    %p188 = por %p186, %p187
    %p189 = scmp.ne.s32.totalorder %s178, %s179
    %p190 = scmp.eq.s32.totalorder %s22, 0
    %p191 = por %p189, %p190
    %p192 = scmp.ne.s32.totalorder %s178, %s179
    %p193 = scmp.eq.s32.totalorder %s23, 3
    %p194 = por %p192, %p193
    %p196 = scmp.ne.s32.totalorder %s179, %s195
    %p197 = scmp.eq.s32.totalorder %s23, 0
    %p198 = por %p196, %p197
    %s199 = ssub.s32 %s25, %s32
    %p200 = scmp.eq.s32.totalorder %s199, 0
    %s202 = sadd.s32 %s201, 1
    %s203 = scalar_select %p200, %s201, %s202
    %p206 = pneg %p200
    %p207 = scmp.eq.s32.totalorder %s17, 3
    %p208 = por %p206, %p207
    %p209 = scmp.ne.s32.totalorder %s201, %s204
    %p210 = scmp.eq.s32.totalorder %s17, 0
    %p211 = por %p209, %p210
    %p212 = scmp.ne.s32.totalorder %s201, %s204
    %p213 = scmp.eq.s32.totalorder %s22, 3
    %p214 = por %p212, %p213
    %p215 = scmp.ne.s32.totalorder %s204, %s205
    %p216 = scmp.eq.s32.totalorder %s22, 0
    %p217 = por %p215, %p216
    %p218 = scmp.ne.s32.totalorder %s204, %s205
    %p219 = scmp.eq.s32.totalorder %s23, 3
    %p220 = por %p218, %p219
    %p222 = scmp.ne.s32.totalorder %s205, %s221
    %p223 = scmp.eq.s32.totalorder %s23, 0
    %p224 = por %p222, %p223
    %s225 = ssub.s32 %s25, %s32
    %p226 = scmp.eq.s32.totalorder %s225, 0
    %s228 = sadd.s32 %s227, 1
    %s229 = scalar_select %p226, %s227, %s228
    %p232 = pneg %p226
    %p233 = scmp.eq.s32.totalorder %s17, 3
    %p234 = por %p232, %p233
    %p235 = scmp.ne.s32.totalorder %s227, %s230
    %p236 = scmp.eq.s32.totalorder %s17, 0
    %p237 = por %p235, %p236
    %p238 = scmp.ne.s32.totalorder %s227, %s230
    %p239 = scmp.eq.s32.totalorder %s22, 3
    %p240 = por %p238, %p239
    %p241 = scmp.ne.s32.totalorder %s230, %s231
    %p242 = scmp.eq.s32.totalorder %s22, 0
    %p243 = por %p241, %p242
    %p244 = scmp.ne.s32.totalorder %s230, %s231
    %p245 = scmp.eq.s32.totalorder %s23, 3
    %p246 = por %p244, %p245
    %p248 = scmp.ne.s32.totalorder %s231, %s247
    %p249 = scmp.eq.s32.totalorder %s23, 0
    %p250 = por %p248, %p249
    %s251 = ssub.s32 %s25, %s32
    %p252 = scmp.eq.s32.totalorder %s251, 0
    %s254 = sadd.s32 %s253, 1
    %s255 = scalar_select %p252, %s253, %s254
    %p258 = pneg %p252
    %p259 = scmp.eq.s32.totalorder %s17, 3
    %p260 = por %p258, %p259
    %p261 = scmp.ne.s32.totalorder %s253, %s256
    %p262 = scmp.eq.s32.totalorder %s17, 0
    %p263 = por %p261, %p262
    %p264 = scmp.ne.s32.totalorder %s253, %s256
    %p265 = scmp.eq.s32.totalorder %s22, 3
    %p266 = por %p264, %p265
    %p267 = scmp.ne.s32.totalorder %s256, %s257
    %p268 = scmp.eq.s32.totalorder %s22, 0
    %p269 = por %p267, %p268
    %p270 = scmp.ne.s32.totalorder %s256, %s257
    %p271 = scmp.eq.s32.totalorder %s23, 3
    %p272 = por %p270, %p271
    %p274 = scmp.ne.s32.totalorder %s257, %s273
    %p275 = scmp.eq.s32.totalorder %s23, 0
    %p276 = por %p274, %p275
    %s277 = ssub.s32 %s25, %s32
    %p278 = scmp.eq.s32.totalorder %s277, 0
    %s280 = sadd.s32 %s279, 1
    %s281 = scalar_select %p278, %s279, %s280
    %p284 = pneg %p278
    %p285 = scmp.eq.s32.totalorder %s17, 3
    %p286 = por %p284, %p285
    %p287 = scmp.ne.s32.totalorder %s279, %s282
    %p288 = scmp.eq.s32.totalorder %s17, 0
    %p289 = por %p287, %p288
    %p290 = scmp.ne.s32.totalorder %s279, %s282
    %p291 = scmp.eq.s32.totalorder %s22, 3
    %p292 = por %p290, %p291
    %p293 = scmp.ne.s32.totalorder %s282, %s283
    %p294 = scmp.eq.s32.totalorder %s22, 0
    %p295 = por %p293, %p294
    %p296 = scmp.ne.s32.totalorder %s282, %s283
    %p297 = scmp.eq.s32.totalorder %s23, 3
    %p298 = por %p296, %p297
    %p300 = scmp.ne.s32.totalorder %s283, %s299
    %p301 = scmp.eq.s32.totalorder %s23, 0
    %p302 = por %p300, %p301
    %s303 = ssub.s32 %s24, %s36
    %p304 = scmp.eq.s32.totalorder %s303, 0
    %s306 = sadd.s32 %s305, 1
    %s307 = scalar_select %p304, %s305, %s306
    %p310 = pneg %p304
    %p311 = scmp.eq.s32.totalorder %s17, 3
    %p312 = por %p310, %p311
    %p313 = scmp.ne.s32.totalorder %s305, %s308
    %p314 = scmp.eq.s32.totalorder %s17, 0
    %p315 = por %p313, %p314
    %p316 = scmp.ne.s32.totalorder %s305, %s308
    %p317 = scmp.eq.s32.totalorder %s22, 3
    %p318 = por %p316, %p317
    %p319 = scmp.ne.s32.totalorder %s308, %s309
    %p320 = scmp.eq.s32.totalorder %s22, 0
    %p321 = por %p319, %p320
    %p322 = scmp.ne.s32.totalorder %s308, %s309
    %p323 = scmp.eq.s32.totalorder %s23, 3
    %p324 = por %p322, %p323
    %p326 = scmp.ne.s32.totalorder %s309, %s325
    %p327 = scmp.eq.s32.totalorder %s23, 0
    %p328 = por %p326, %p327
    %p329 = scmp.le.s32.totalorder 1, %s17
    %p330 = scmp.lt.s32.totalorder %s17, 5
    %p331 = pnand %p329, %p330
    %p332 = pneg %p331
    // Predicated region
    $region9: #{resblock_pallas.1} parent=5 // pred_check
      _
    $region10: #{resblock_pallas.1} parent=5 // pred_check_branch
      %334 = sbr.rel (%p331) target = $region12
    $region11: #{resblock_pallas.1} parent=5 // pred_region
      %s335 = ssub.s32 %s17, 1
      // Predicated region
      $region13: #{resblock_pallas.1} parent=11 // pred_check
        %p336 = pneg %p76
      $region14: #{resblock_pallas.1} parent=11 // pred_check_branch
        %338 = sbr.rel (%p336) target = $region16
      $region15: #{resblock_pallas.1} parent=11 // pred_region
        _
      $region16: #{resblock_pallas.1} parent=11 // pred_fallthru
        _
      // Predicated region
      $region17: #{resblock_pallas.1} parent=11 // pred_check
        %p339 = pneg %p97
      $region18: #{resblock_pallas.1} parent=11 // pred_check_branch
        %341 = sbr.rel (%p339) target = $region20
      $region19: #{resblock_pallas.1} parent=11 // pred_region
        _
      $region20: #{resblock_pallas.1} parent=11 // pred_fallthru
        _
      // Predicated region
      $region21: #{resblock_pallas.1} parent=11 // pred_check
        %p342 = pneg %p118
      $region22: #{resblock_pallas.1} parent=11 // pred_check_branch
        %344 = sbr.rel (%p342) target = $region24
      $region23: #{resblock_pallas.1} parent=11 // pred_region
        _
      $region24: #{resblock_pallas.1} parent=11 // pred_fallthru
        _
      // Predicated region
      $region25: #{resblock_pallas.1} parent=11 // pred_check
        %p345 = pneg %p139
      $region26: #{resblock_pallas.1} parent=11 // pred_check_branch
        %347 = sbr.rel (%p345) target = $region28
      $region27: #{resblock_pallas.1} parent=11 // pred_region
        _
      $region28: #{resblock_pallas.1} parent=11 // pred_fallthru
        _
    $region12: #{resblock_pallas.1} parent=5 // pred_fallthru
      _
    %p348 = scmp.lt.s32.totalorder %s17, 4
    // Predicated region
    $region29: #{resblock_pallas.1} parent=5 // pred_check
      %p349 = pneg %p348
    $region30: #{resblock_pallas.1} parent=5 // pred_check_branch
      %351 = sbr.rel (%p349) target = $region32
    $region31: #{resblock_pallas.1} parent=5 // pred_region
      // Predicated region
      $region33: #{resblock_pallas.1} parent=31 // pred_check
        %p352 = pneg %p49
      $region34: #{resblock_pallas.1} parent=31 // pred_check_branch
        %354 = sbr.rel (%p352) target = $region36
      $region35: #{resblock_pallas.1} parent=31 // pred_region
        %p355 = scmp.lt.s32.totalorder %s24, 1
        %s356 = scalar_select %p355, %s24, 1
        %s357 = smul.addr %s356, 20
        %s358 = smul.addr %s357, 4
        %s359 = scalar_lea.vmem %s0, %s358
      $region36: #{resblock_pallas.1} parent=31 // pred_fallthru
        _
      // Predicated region
      $region37: #{resblock_pallas.1} parent=31 // pred_check
        %p360 = pneg %p159
      $region38: #{resblock_pallas.1} parent=31 // pred_check_branch
        %362 = sbr.rel (%p360) target = $region40
      $region39: #{resblock_pallas.1} parent=31 // pred_region
        %p363 = scmp.lt.s32.totalorder %s25, 1
        %s364 = scalar_select %p363, %s25, 1
        %s365 = smul.addr %s364, 4
        %s366 = scalar_lea.vmem %s5, %s365
      $region40: #{resblock_pallas.1} parent=31 // pred_fallthru
        _
      // Predicated region
      $region41: #{resblock_pallas.1} parent=31 // pred_check
        %p367 = pneg %p185
      $region42: #{resblock_pallas.1} parent=31 // pred_check_branch
        %369 = sbr.rel (%p367) target = $region44
      $region43: #{resblock_pallas.1} parent=31 // pred_region
        %p370 = scmp.lt.s32.totalorder %s25, 1
        %s371 = scalar_select %p370, %s25, 1
        %s372 = scalar_lea.vmem %s6, %s371
      $region44: #{resblock_pallas.1} parent=31 // pred_fallthru
        _
      // Predicated region
      $region45: #{resblock_pallas.1} parent=31 // pred_check
        %p373 = pneg %p211
      $region46: #{resblock_pallas.1} parent=31 // pred_check_branch
        %375 = sbr.rel (%p373) target = $region48
      $region47: #{resblock_pallas.1} parent=31 // pred_region
        %p376 = scmp.lt.s32.totalorder %s25, 1
        %s377 = scalar_select %p376, %s25, 1
        %s378 = scalar_lea.vmem %s7, %s377
      $region48: #{resblock_pallas.1} parent=31 // pred_fallthru
        _
      // Predicated region
      $region49: #{resblock_pallas.1} parent=31 // pred_check
        %p379 = pneg %p237
      $region50: #{resblock_pallas.1} parent=31 // pred_check_branch
        %381 = sbr.rel (%p379) target = $region52
      $region51: #{resblock_pallas.1} parent=31 // pred_region
        %p382 = scmp.lt.s32.totalorder %s25, 1
        %s383 = scalar_select %p382, %s25, 1
        %s384 = smul.addr %s383, 9
        %s385 = smul.addr %s384, 2
        %s386 = scalar_lea.vmem %s8, %s385
      $region52: #{resblock_pallas.1} parent=31 // pred_fallthru
        _
      // Predicated region
      $region53: #{resblock_pallas.1} parent=31 // pred_check
        %p387 = pneg %p263
      $region54: #{resblock_pallas.1} parent=31 // pred_check_branch
        %389 = sbr.rel (%p387) target = $region56
      $region55: #{resblock_pallas.1} parent=31 // pred_region
        %p390 = scmp.lt.s32.totalorder %s25, 1
        %s391 = scalar_select %p390, %s25, 1
        %s392 = scalar_lea.vmem %s9, %s391
      $region56: #{resblock_pallas.1} parent=31 // pred_fallthru
        _
      // Predicated region
      $region57: #{resblock_pallas.1} parent=31 // pred_check
        %p393 = pneg %p289
      $region58: #{resblock_pallas.1} parent=31 // pred_check_branch
        %395 = sbr.rel (%p393) target = $region60
      $region59: #{resblock_pallas.1} parent=31 // pred_region
        %p396 = scmp.lt.s32.totalorder %s25, 1
        %s397 = scalar_select %p396, %s25, 1
        %s398 = scalar_lea.vmem %s10, %s397
      $region60: #{resblock_pallas.1} parent=31 // pred_fallthru
        _
    $region32: #{resblock_pallas.1} parent=5 // pred_fallthru
      _
    %p399 = scmp.le.s32.totalorder 1, %s17
    %p400 = scmp.lt.s32.totalorder %s17, 5
    %p401 = pnand %p399, %p400
    %p402 = pneg %p401
    // Predicated region
    $region61: #{resblock_pallas.1} parent=5 // pred_check
      _
    $region62: #{resblock_pallas.1} parent=5 // pred_check_branch
      %404 = sbr.rel (%p401) target = $region64
    $region63: #{resblock_pallas.1} parent=5 // pred_region
      %s405 = ssub.s32 %s17, 1
      %p406 = scmp.lt.s32.totalorder %s26, 1
      %s407 = scalar_select %p406, %s26, 1
      %s408 = smul.addr %s407, 20
      %s409 = smul.addr %s408, 4
      %s410 = scalar_lea.vmem %s0, %s409
      %p411 = pneg %p55
      %p412 = pneg %p52
      %p413 = pneg %p76
      %p414 = pneg %p73
      %p415 = pneg %p97
      %p416 = pneg %p94
      %p417 = pneg %p118
      %p418 = pneg %p115
      %p419 = pneg %p139
      %p420 = pneg %p136
      %p421 = scmp.lt.s32.totalorder %s27, 1
      %s422 = scalar_select %p421, %s27, 1
      %s423 = smul.addr %s422, 4
      %s424 = scalar_lea.vmem %s5, %s423
      %p425 = pneg %p165
      %p426 = pneg %p162
      %p427 = scmp.lt.s32.totalorder %s27, 1
      %s428 = scalar_select %p427, %s27, 1
      %s429 = scalar_lea.vmem %s6, %s428
      %p430 = pneg %p191
      %p431 = pneg %p188
      %p432 = scmp.lt.s32.totalorder %s27, 1
      %s433 = scalar_select %p432, %s27, 1
      %s434 = scalar_lea.vmem %s7, %s433
      %p435 = pneg %p217
      %p436 = pneg %p214
      %p437 = scmp.lt.s32.totalorder %s27, 1
      %s438 = scalar_select %p437, %s27, 1
      %s439 = smul.addr %s438, 9
      %s440 = smul.addr %s439, 2
      %s441 = scalar_lea.vmem %s8, %s440
      %p442 = pneg %p243
      %p443 = pneg %p240
      %p444 = scmp.lt.s32.totalorder %s27, 1
      %s445 = scalar_select %p444, %s27, 1
      %s446 = scalar_lea.vmem %s9, %s445
      %p447 = pneg %p269
      %p448 = pneg %p266
      %p449 = scmp.lt.s32.totalorder %s27, 1
      %s450 = scalar_select %p449, %s27, 1
      %s451 = scalar_lea.vmem %s10, %s450
      %p452 = pneg %p295
      %p453 = pneg %p292
      %p454 = pneg %p321
      %p455 = pneg %p318
      %p456 = scmp.lt.s32.totalorder %s26, 1
      %s457 = scalar_select %p456, %s26, 1
      %s458 = smul.addr %s457, 16
      %s459 = smul.addr %s458, 8
      %s460 = scalar_lea.vmem %s11, %s459
      %p461 = scmp.lt.s32.totalorder %s26, 1
      %s462 = scalar_select %p461, %s26, 1
      %s463 = smul.addr %s462, 20
      %s464 = smul.addr %s463, 4
      %s465 = scalar_lea.vmem %s0, %s464
      %p466 = scmp.lt.s32.totalorder %s27, 1
      %s467 = scalar_select %p466, %s27, 1
      %s468 = smul.addr %s467, 4
      %s469 = scalar_lea.vmem %s5, %s468
      %p470 = scmp.lt.s32.totalorder %s27, 1
      %s471 = scalar_select %p470, %s27, 1
      %s472 = scalar_lea.vmem %s6, %s471
      %p473 = scmp.lt.s32.totalorder %s27, 1
      %s474 = scalar_select %p473, %s27, 1
      %s475 = scalar_lea.vmem %s7, %s474
      %p476 = scmp.lt.s32.totalorder %s27, 1
      %s477 = scalar_select %p476, %s27, 1
      %s478 = smul.addr %s477, 9
      %s479 = smul.addr %s478, 2
      %s480 = scalar_lea.vmem %s8, %s479
      %p481 = scmp.lt.s32.totalorder %s27, 1
      %s482 = scalar_select %p481, %s27, 1
      %s483 = scalar_lea.vmem %s9, %s482
      %p484 = scmp.lt.s32.totalorder %s27, 1
      %s485 = scalar_select %p484, %s27, 1
      %s486 = scalar_lea.vmem %s10, %s485
      %p487 = scmp.lt.s32.totalorder %s26, 1
      %s488 = scalar_select %p487, %s26, 1
      %s489 = smul.addr %s488, 16
      %s490 = smul.addr %s489, 8
      %s491 = scalar_lea.vmem %s11, %s490
      %p493 = scmp.eq.s32.totalorder %s27, 0
      // Predicated region
      $region65: #{resblock_pallas.1} parent=63 // pred_check
        %p494 = pneg %p493
      $region66: #{resblock_pallas.1} parent=63 // pred_check_branch
        %496 = sbr.rel (%p494) target = $region68
      $region67: #{resblock_pallas.1} parent=63 // pred_region
        %v497 = vld [vmem:[%s465] sm:$0xf]
        %v498 = vld [vmem:[%s465 + $0x4] sm:$0xf]
        %v499 = vld [vmem:[%s465 + $0x8] sm:$0xf]
        %v500 = vld [vmem:[%s465 + $0xc] sm:$0xf]
        %v501 = vld [vmem:[%s465 + $0x10] sm:$0xf]
        %v502 = vld [vmem:[%s465 + $0x14] sm:$0xf]
        %v503 = vld [vmem:[%s465 + $0x18] sm:$0xf]
        %v504 = vld [vmem:[%s465 + $0x1c] sm:$0xf]
        %v505 = vld [vmem:[%s465 + $0x20] sm:$0xf]
        %v506 = vld [vmem:[%s465 + $0x24] sm:$0xf]
        %v507 = vld [vmem:[%s465 + $0x28] sm:$0xf]
        %v508 = vld [vmem:[%s465 + $0x2c] sm:$0xf]
        %v509 = vld [vmem:[%s465 + $0x30] sm:$0xf]
        %v510 = vld [vmem:[%s465 + $0x34] sm:$0xf]
        %v511 = vld [vmem:[%s465 + $0x38] sm:$0xf]
        %v512 = vld [vmem:[%s465 + $0x3c] sm:$0xf]
        %v513 = vld [vmem:[%s465 + $0x40] sm:$0xf]
        %v514 = vld [vmem:[%s465 + $0x44] sm:$0xf]
        %v515 = vld [vmem:[%s465 + $0x48] sm:$0xf]
        %v516 = vld [vmem:[%s465 + $0x4c] sm:$0xf]
        %v517 = vld [vmem:[%s2] sm:$0xf]
        %v518 = vld [vmem:[%s2 + $0x4] sm:$0xf]
        %v519 = vld [vmem:[%s2 + $0x8] sm:$0xf]
        %v520 = vld [vmem:[%s2 + $0xc] sm:$0xf]
        %v521 = vld [vmem:[%s2 + $0x10] sm:$0xf]
        %v522 = vld [vmem:[%s2 + $0x14] sm:$0xf]
        %v523 = vld [vmem:[%s2 + $0x18] sm:$0xf]
        %v524 = vld [vmem:[%s2 + $0x1c] sm:$0xf]
        %v525 = vld [vmem:[%s2 + $0x20] sm:$0xf]
        %v526 = vld [vmem:[%s2 + $0x24] sm:$0xf]
        %v527 = vld [vmem:[%s2 + $0x28] sm:$0xf]
        %v528 = vld [vmem:[%s2 + $0x2c] sm:$0xf]
        %v529 = vld [vmem:[%s2 + $0x30] sm:$0xf]
        %v530 = vld [vmem:[%s2 + $0x34] sm:$0xf]
        %v531 = vld [vmem:[%s2 + $0x38] sm:$0xf]
        %v532 = vld [vmem:[%s2 + $0x3c] sm:$0xf]
        %v553 = vunpack.c.l.b16 %v497
        %v554 = vunpack.c.l.b16 %v498
        %v555 = vunpack.c.l.b16 %v499
        %v556 = vunpack.c.l.b16 %v500
        %v557 = vunpack.c.l.b16 %v501
        %v558 = vunpack.c.l.b16 %v502
        %v559 = vunpack.c.l.b16 %v503
        %v560 = vunpack.c.l.b16 %v504
        %v561 = vunpack.c.l.b16 %v505
        %v562 = vunpack.c.l.b16 %v506
        %v563 = vunpack.c.l.b16 %v507
        %v564 = vunpack.c.l.b16 %v508
        %v565 = vunpack.c.l.b16 %v509
        %v566 = vunpack.c.l.b16 %v510
        %v567 = vunpack.c.l.b16 %v511
        %v568 = vunpack.c.l.b16 %v512
        %v569 = vunpack.c.l.b16 %v513
        %v570 = vunpack.c.l.b16 %v514
        %v571 = vunpack.c.l.b16 %v515
        %v572 = vunpack.c.l.b16 %v516
        %v573 = vpack.c.b16 %v554, %v553
        %v574 = vpack.c.b16 %v556, %v555
        %v575 = vpack.c.b16 %v558, %v557
        %v576 = vpack.c.b16 %v560, %v559
        %v577 = vpack.c.b16 %v562, %v561
        %v578 = vpack.c.b16 %v564, %v563
        %v579 = vpack.c.b16 %v566, %v565
        %v580 = vpack.c.b16 %v568, %v567
        %v581 = vpack.c.b16 %v570, %v569
        %v582 = vpack.c.b16 %v572, %v571
        %v609 = vunpack.c.l.b16 %v517
        %v610 = vunpack.c.l.b16 %v518
        %v611 = vunpack.c.l.b16 %v519
        %v612 = vunpack.c.l.b16 %v520
        %v613 = vunpack.c.l.b16 %v521
        %v614 = vunpack.c.l.b16 %v522
        %v615 = vunpack.c.l.b16 %v523
        %v616 = vunpack.c.l.b16 %v524
        %v617 = vunpack.c.l.b16 %v525
        %v618 = vunpack.c.l.b16 %v526
        %v619 = vunpack.c.l.b16 %v527
        %v620 = vunpack.c.l.b16 %v528
        %v621 = vunpack.c.l.b16 %v529
        %v622 = vunpack.c.l.b16 %v530
        %v623 = vunpack.c.l.b16 %v531
        %v624 = vunpack.c.l.b16 %v532
        %v625 = vpack.c.b16 %v610, %v609
        %v626 = vpack.c.b16 %v612, %v611
        %v627 = vpack.c.b16 %v614, %v613
        %v628 = vpack.c.b16 %v616, %v615
        %v629 = vpack.c.b16 %v618, %v617
        %v630 = vpack.c.b16 %v620, %v619
        %v631 = vpack.c.b16 %v622, %v621
        %v632 = vpack.c.b16 %v624, %v623
        %641 = vmatprep.subr.bf16.mxu0 0
        %642 = vmatpush1.bf16.msra.mxu0 %v632
        %643 = vmatprep.subr.bf16.mxu0 0
        %644 = vmatpush1.bf16.msra.mxu0 %v631
        %645 = vmatprep.subr.bf16.mxu0 0
        %646 = vmatpush1.bf16.msra.mxu0 %v630
        %647 = vmatprep.subr.bf16.mxu0 0
        %648 = vmatpush1.bf16.msra.mxu0 %v629
        %649 = vmatprep.subr.bf16.mxu0 0
        %650 = vmatpush1.bf16.msra.mxu0 %v628
        %651 = vmatprep.subr.bf16.mxu0 0
        %652 = vmatpush1.bf16.msra.mxu0 %v627
        %653 = vmatprep.subr.bf16.mxu0 0
        %654 = vmatpush1.bf16.msra.mxu0 %v626
        %655 = vmatprep.subr.bf16.mxu0 0
        %656 = vmatpush1.bf16.msra.mxu0 %v625
        %657 = vmatprep.subr.bf16.mxu0 0
        %658 = vmatpush2.bf16.msra.mxu0 0
        %659 = vmatprep.subr.bf16.mxu0 0
        %660 = vmatpush2.bf16.msra.mxu0 0
        %661 = vmatprep.subr.bf16.mxu0 0
        %662 = vmatpush2.bf16.msra.mxu0 0
        %663 = vmatprep.subr.bf16.mxu0 0
        %664 = vmatpush2.bf16.msra.mxu0 0
        %665 = vmatprep.subr.bf16.mxu0 0
        %666 = vmatpush2.bf16.msra.mxu0 0
        %667 = vmatprep.subr.bf16.mxu0 0
        %668 = vmatpush2.bf16.msra.mxu0 0
        %669 = vmatprep.subr.bf16.mxu0 0
        %670 = vmatpush2.bf16.msra.mxu0 0
        %671 = vmatprep.subr.bf16.mxu0 0
        %672 = vmatpush2.bf16.msra.mxu0 0
        %673 = vmatprep.mubr.bf16.mxu0 0
        %674 = vmatmul.mubr.bf16.gmra.mxu0 %v573
        %v675 = vpop.f32.mrf.mxu0
        %v676 = vadd.f32 0.0, %v675
        %v677 = vpop.f32.mrf.mxu0
        %v678 = vpop.f32.mrf.mxu0
        %v679 = vadd.f32 0.0, %v678
        %v680 = vpop.f32.mrf.mxu0
        %681 = vmatprep.mubr.bf16.mxu0 0
        %682 = vmatmul.mubr.bf16.gmra.mxu0 %v574
        %v683 = vpop.f32.mrf.mxu0
        %v684 = vadd.f32 0.0, %v683
        %v685 = vpop.f32.mrf.mxu0
        %v686 = vpop.f32.mrf.mxu0
        %v687 = vadd.f32 0.0, %v686
        %v688 = vpop.f32.mrf.mxu0
        %689 = vmatprep.mubr.bf16.mxu0 0
        %690 = vmatmul.mubr.bf16.gmra.mxu0 %v575
        %v691 = vpop.f32.mrf.mxu0
        %v692 = vadd.f32 0.0, %v691
        %v693 = vpop.f32.mrf.mxu0
        %v694 = vpop.f32.mrf.mxu0
        %v695 = vadd.f32 0.0, %v694
        %v696 = vpop.f32.mrf.mxu0
        %697 = vmatprep.mubr.bf16.mxu0 0
        %698 = vmatmul.mubr.bf16.gmra.mxu0 %v576
        %v699 = vpop.f32.mrf.mxu0
        %v700 = vadd.f32 0.0, %v699
        %v701 = vpop.f32.mrf.mxu0
        %v702 = vpop.f32.mrf.mxu0
        %v703 = vadd.f32 0.0, %v702
        %v704 = vpop.f32.mrf.mxu0
        %705 = vmatprep.mubr.bf16.mxu0 0
        %706 = vmatmul.mubr.bf16.gmra.mxu0 %v577
        %v707 = vpop.f32.mrf.mxu0
        %v708 = vadd.f32 0.0, %v707
        %v709 = vpop.f32.mrf.mxu0
        %v710 = vpop.f32.mrf.mxu0
        %v711 = vadd.f32 0.0, %v710
        %v712 = vpop.f32.mrf.mxu0
        %713 = vmatprep.mubr.bf16.mxu0 0
        %714 = vmatmul.mubr.bf16.gmra.mxu0 %v578
        %v715 = vpop.f32.mrf.mxu0
        %v716 = vadd.f32 0.0, %v715
        %v717 = vpop.f32.mrf.mxu0
        %v718 = vpop.f32.mrf.mxu0
        %v719 = vadd.f32 0.0, %v718
        %v720 = vpop.f32.mrf.mxu0
        %721 = vmatprep.mubr.bf16.mxu0 0
        %722 = vmatmul.mubr.bf16.gmra.mxu0 %v579
        %v723 = vpop.f32.mrf.mxu0
        %v724 = vadd.f32 0.0, %v723
        %v725 = vpop.f32.mrf.mxu0
        %v726 = vpop.f32.mrf.mxu0
        %v727 = vadd.f32 0.0, %v726
        %v728 = vpop.f32.mrf.mxu0
        %729 = vmatprep.mubr.bf16.mxu0 0
        %730 = vmatmul.mubr.bf16.gmra.mxu0 %v580
        %v731 = vpop.f32.mrf.mxu0
        %v732 = vadd.f32 0.0, %v731
        %v733 = vpop.f32.mrf.mxu0
        %v734 = vpop.f32.mrf.mxu0
        %v735 = vadd.f32 0.0, %v734
        %v736 = vpop.f32.mrf.mxu0
        %737 = vmatprep.mubr.bf16.mxu0 0
        %738 = vmatmul.mubr.bf16.gmra.mxu0 %v581
        %v739 = vpop.f32.mrf.mxu0
        %v740 = vadd.f32 0.0, %v739
        %v741 = vpop.f32.mrf.mxu0
        %v742 = vpop.f32.mrf.mxu0
        %v743 = vadd.f32 0.0, %v742
        %v744 = vpop.f32.mrf.mxu0
        %745 = vmatprep.mubr.bf16.mxu0 0
        %746 = vmatmul.mubr.bf16.gmra.mxu0 %v582
        %v747 = vpop.f32.mrf.mxu0
        %v748 = vadd.f32 0.0, %v747
        %v749 = vpop.f32.mrf.mxu0
        %v750 = vpop.f32.mrf.mxu0
        %v751 = vadd.f32 0.0, %v750
        %v752 = vpop.f32.mrf.mxu0
        %753 = vdwg.mxu0
        %v754 = vld [vmem:[%s3] sm:$0x1]
        %v756 = vlaneseq
        %v757 = vshrl.u32 %v756, 7
        %v758 = vsub.s32 0, %v757
        %v759 = vrot.slane %v754, %v758
        %v761 = vmul.f32 %v676, %v759
        %v762 = vmul.f32 %v679, %v759
        %v763 = vmul.f32 %v684, %v759
        %v764 = vmul.f32 %v687, %v759
        %v765 = vmul.f32 %v692, %v759
        %v766 = vmul.f32 %v695, %v759
        %v767 = vmul.f32 %v700, %v759
        %v768 = vmul.f32 %v703, %v759
        %v769 = vmul.f32 %v708, %v759
        %v770 = vmul.f32 %v711, %v759
        %v771 = vmul.f32 %v716, %v759
        %v772 = vmul.f32 %v719, %v759
        %v773 = vmul.f32 %v724, %v759
        %v774 = vmul.f32 %v727, %v759
        %v775 = vmul.f32 %v732, %v759
        %v776 = vmul.f32 %v735, %v759
        %v777 = vmul.f32 %v740, %v759
        %v778 = vmul.f32 %v743, %v759
        %v779 = vmul.f32 %v748, %v759
        %v780 = vmul.f32 %v751, %v759
        %v781 = vld [vmem:[%s4] sm:$0x1]
        %v783 = vlaneseq
        %v784 = vshrl.u32 %v783, 7
        %v785 = vsub.s32 0, %v784
        %v786 = vrot.slane %v781, %v785
        %v788 = vadd.f32 %v761, %v786
        %v789 = vadd.f32 %v762, %v786
        %v790 = vadd.f32 %v763, %v786
        %v791 = vadd.f32 %v764, %v786
        %v792 = vadd.f32 %v765, %v786
        %v793 = vadd.f32 %v766, %v786
        %v794 = vadd.f32 %v767, %v786
        %v795 = vadd.f32 %v768, %v786
        %v796 = vadd.f32 %v769, %v786
        %v797 = vadd.f32 %v770, %v786
        %v798 = vadd.f32 %v771, %v786
        %v799 = vadd.f32 %v772, %v786
        %v800 = vadd.f32 %v773, %v786
        %v801 = vadd.f32 %v774, %v786
        %v802 = vadd.f32 %v775, %v786
        %v803 = vadd.f32 %v776, %v786
        %v804 = vadd.f32 %v777, %v786
        %v805 = vadd.f32 %v778, %v786
        %v806 = vadd.f32 %v779, %v786
        %v807 = vadd.f32 %v780, %v786
        %v808 = vmul.f32 %v788, 0.1
        %v809 = vmul.f32 %v789, 0.1
        %v810 = vmul.f32 %v790, 0.1
        %v811 = vmul.f32 %v791, 0.1
        %v812 = vmul.f32 %v792, 0.1
        %v813 = vmul.f32 %v793, 0.1
        %v814 = vmul.f32 %v794, 0.1
        %v815 = vmul.f32 %v795, 0.1
        %v816 = vmul.f32 %v796, 0.1
        %v817 = vmul.f32 %v797, 0.1
        %v818 = vmul.f32 %v798, 0.1
        %v819 = vmul.f32 %v799, 0.1
        %v820 = vmul.f32 %v800, 0.1
        %v821 = vmul.f32 %v801, 0.1
        %v822 = vmul.f32 %v802, 0.1
        %v823 = vmul.f32 %v803, 0.1
        %v824 = vmul.f32 %v804, 0.1
        %v825 = vmul.f32 %v805, 0.1
        %v826 = vmul.f32 %v806, 0.1
        %v827 = vmul.f32 %v807, 0.1
        %v828 = vmax.f32 %v788, %v808
        %v829 = vmax.f32 %v789, %v809
        %v830 = vmax.f32 %v790, %v810
        %v831 = vmax.f32 %v791, %v811
        %v832 = vmax.f32 %v792, %v812
        %v833 = vmax.f32 %v793, %v813
        %v834 = vmax.f32 %v794, %v814
        %v835 = vmax.f32 %v795, %v815
        %v836 = vmax.f32 %v796, %v816
        %v837 = vmax.f32 %v797, %v817
        %v838 = vmax.f32 %v798, %v818
        %v839 = vmax.f32 %v799, %v819
        %v840 = vmax.f32 %v800, %v820
        %v841 = vmax.f32 %v801, %v821
        %v842 = vmax.f32 %v802, %v822
        %v843 = vmax.f32 %v803, %v823
        %v844 = vmax.f32 %v804, %v824
        %v845 = vmax.f32 %v805, %v825
        %v846 = vmax.f32 %v806, %v826
        %v847 = vmax.f32 %v807, %v827
        %vm848 = vcmask 64512
        %849 = vst.msk [vmem:[#allocation2] sm:$0xff] %vm848, %v828
        %850 = vst.msk [vmem:[#allocation2 + $0x8] sm:$0xff] %vm848, %v829
        %851 = vst.msk [vmem:[#allocation2 + $0x10] sm:$0xff] %vm848, %v830
        %852 = vst.msk [vmem:[#allocation2 + $0x18] sm:$0xff] %vm848, %v831
        %853 = vst.msk [vmem:[#allocation2 + $0x20] sm:$0xff] %vm848, %v832
        %854 = vst.msk [vmem:[#allocation2 + $0x28] sm:$0xff] %vm848, %v833
        %855 = vst.msk [vmem:[#allocation2 + $0x30] sm:$0xff] %vm848, %v834
        %856 = vst.msk [vmem:[#allocation2 + $0x38] sm:$0xff] %vm848, %v835
        %857 = vst.msk [vmem:[#allocation2 + $0x40] sm:$0xff] %vm848, %v836
        %858 = vst.msk [vmem:[#allocation2 + $0x48] sm:$0xff] %vm848, %v837
        %859 = vst.msk [vmem:[#allocation2 + $0x50] sm:$0xff] %vm848, %v838
        %860 = vst.msk [vmem:[#allocation2 + $0x58] sm:$0xff] %vm848, %v839
        %861 = vst.msk [vmem:[#allocation2 + $0x60] sm:$0xff] %vm848, %v840
        %862 = vst.msk [vmem:[#allocation2 + $0x68] sm:$0xff] %vm848, %v841
        %863 = vst.msk [vmem:[#allocation2 + $0x70] sm:$0xff] %vm848, %v842
        %864 = vst.msk [vmem:[#allocation2 + $0x78] sm:$0xff] %vm848, %v843
        %865 = vst.msk [vmem:[#allocation2 + $0x80] sm:$0xff] %vm848, %v844
        %866 = vst.msk [vmem:[#allocation2 + $0x88] sm:$0xff] %vm848, %v845
        %867 = vst.msk [vmem:[#allocation2 + $0x90] sm:$0xff] %vm848, %v846
        %868 = vst.msk [vmem:[#allocation2 + $0x98] sm:$0xff] %vm848, %v847
      $region68: #{resblock_pallas.1} parent=63 // pred_fallthru
        _
      %v869 = vld [vmem:[#allocation2] sm:$0xff]
      %v870 = vld [vmem:[#allocation2 + $0x8] sm:$0xff]
      %v871 = vld [vmem:[#allocation2 + $0x10] sm:$0xff]
      %v872 = vld [vmem:[#allocation2 + $0x18] sm:$0xff]
      %v873 = vld [vmem:[#allocation2 + $0x20] sm:$0xff]
      %v874 = vld [vmem:[#allocation2 + $0x28] sm:$0xff]
      %v875 = vld [vmem:[#allocation2 + $0x30] sm:$0xff]
      %v876 = vld [vmem:[#allocation2 + $0x38] sm:$0xff]
      %v877 = vld [vmem:[#allocation2 + $0x40] sm:$0xff]
      %v878 = vld [vmem:[#allocation2 + $0x48] sm:$0xff]
      %v879 = vld [vmem:[#allocation2 + $0x50] sm:$0xff]
      %v880 = vld [vmem:[#allocation2 + $0x58] sm:$0xff]
      %v881 = vld [vmem:[#allocation2 + $0x60] sm:$0xff]
      %v882 = vld [vmem:[#allocation2 + $0x68] sm:$0xff]
      %v883 = vld [vmem:[#allocation2 + $0x70] sm:$0xff]
      %v884 = vld [vmem:[#allocation2 + $0x78] sm:$0xff]
      %v885 = vld [vmem:[#allocation2 + $0x80] sm:$0xff]
      %v886 = vld [vmem:[#allocation2 + $0x88] sm:$0xff]
      %v887 = vld [vmem:[#allocation2 + $0x90] sm:$0xff]
      %v888 = vld [vmem:[#allocation2 + $0x98] sm:$0xff]
      %v889 = vpack.c.bf16 %v870, %v869
      %v890 = vpack.c.bf16 %v872, %v871
      %v891 = vpack.c.bf16 %v874, %v873
      %v892 = vpack.c.bf16 %v876, %v875
      %v893 = vpack.c.bf16 %v878, %v877
      %v894 = vpack.c.bf16 %v880, %v879
      %v895 = vpack.c.bf16 %v882, %v881
      %v896 = vpack.c.bf16 %v884, %v883
      %v897 = vpack.c.bf16 %v886, %v885
      %v898 = vpack.c.bf16 %v888, %v887
      %v899 = vld [vmem:[%s469] sm:$0xf]
      %vm900 = vcmask 64512
      %v902 = vsel %vm900, %v889, 0
      %v905 = vsel %vm900, %v890, 0
      %v908 = vsel %vm900, %v891, 0
      %v911 = vsel %vm900, %v892, 0
      %v914 = vsel %vm900, %v893, 0
      %v917 = vsel %vm900, %v894, 0
      %v920 = vsel %vm900, %v895, 0
      %v923 = vsel %vm900, %v896, 0
      %v926 = vsel %vm900, %v897, 0
      %v929 = vsel %vm900, %v898, 0
      %vm931 = vcmask 1043456
      %v933 = vsel %vm931, %v899, 0
      %935 = vmatprep.subr.bf16.mxu0 0
      %936 = vmatpush1.bf16.msra.mxu0 0
      %937 = vmatprep.subr.bf16.mxu0 0
      %938 = vmatpush1.bf16.msra.mxu0 0
      %939 = vmatprep.subr.bf16.mxu0 0
      %940 = vmatpush1.bf16.msra.mxu0 0
      %941 = vmatprep.subr.bf16.mxu0 0
      %942 = vmatpush1.bf16.msra.mxu0 0
      %943 = vmatprep.subr.bf16.mxu0 0
      %944 = vmatpush1.bf16.msra.mxu0 0
      %945 = vmatprep.subr.bf16.mxu0 0
      %946 = vmatpush1.bf16.msra.mxu0 0
      %947 = vmatprep.subr.bf16.mxu0 0
      %948 = vmatpush1.bf16.msra.mxu0 0
      %949 = vmatprep.subr.bf16.mxu0 0
      %950 = vmatpush1.bf16.msra.mxu0 %v933
      %951 = vmatprep.subr.bf16.mxu0 0
      %952 = vmatpush2.bf16.msra.mxu0 0
      %953 = vmatprep.subr.bf16.mxu0 0
      %954 = vmatpush2.bf16.msra.mxu0 0
      %955 = vmatprep.subr.bf16.mxu0 0
      %956 = vmatpush2.bf16.msra.mxu0 0
      %957 = vmatprep.subr.bf16.mxu0 0
      %958 = vmatpush2.bf16.msra.mxu0 0
      %959 = vmatprep.subr.bf16.mxu0 0
      %960 = vmatpush2.bf16.msra.mxu0 0
      %961 = vmatprep.subr.bf16.mxu0 0
      %962 = vmatpush2.bf16.msra.mxu0 0
      %963 = vmatprep.subr.bf16.mxu0 0
      %964 = vmatpush2.bf16.msra.mxu0 0
      %965 = vmatprep.subr.bf16.mxu0 0
      %966 = vmatpush2.bf16.msra.mxu0 0
      %967 = vmatprep.mubr.bf16.mxu0 0
      %968 = vmatmul.mubr.bf16.gmra.mxu0 %v902
      %v969 = vpop.f32.mrf.mxu0
      %v970 = vadd.f32 0.0, %v969
      %v971 = vpop.f32.mrf.mxu0
      %v972 = vpop.f32.mrf.mxu0
      %v973 = vadd.f32 0.0, %v972
      %v974 = vpop.f32.mrf.mxu0
      %975 = vmatprep.mubr.bf16.mxu0 0
      %976 = vmatmul.mubr.bf16.gmra.mxu0 %v905
      %v977 = vpop.f32.mrf.mxu0
      %v978 = vadd.f32 0.0, %v977
      %v979 = vpop.f32.mrf.mxu0
      %v980 = vpop.f32.mrf.mxu0
      %v981 = vadd.f32 0.0, %v980
      %v982 = vpop.f32.mrf.mxu0
      %983 = vmatprep.mubr.bf16.mxu0 0
      %984 = vmatmul.mubr.bf16.gmra.mxu0 %v908
      %v985 = vpop.f32.mrf.mxu0
      %v986 = vadd.f32 0.0, %v985
      %v987 = vpop.f32.mrf.mxu0
      %v988 = vpop.f32.mrf.mxu0
      %v989 = vadd.f32 0.0, %v988
      %v990 = vpop.f32.mrf.mxu0
      %991 = vmatprep.mubr.bf16.mxu0 0
      %992 = vmatmul.mubr.bf16.gmra.mxu0 %v911
      %v993 = vpop.f32.mrf.mxu0
      %v994 = vadd.f32 0.0, %v993
      %v995 = vpop.f32.mrf.mxu0
      %v996 = vpop.f32.mrf.mxu0
      %v997 = vadd.f32 0.0, %v996
      %v998 = vpop.f32.mrf.mxu0
      %999 = vmatprep.mubr.bf16.mxu0 0
      %1000 = vmatmul.mubr.bf16.gmra.mxu0 %v914
      %v1001 = vpop.f32.mrf.mxu0
      %v1002 = vadd.f32 0.0, %v1001
      %v1003 = vpop.f32.mrf.mxu0
      %v1004 = vpop.f32.mrf.mxu0
      %v1005 = vadd.f32 0.0, %v1004
      %v1006 = vpop.f32.mrf.mxu0
      %1007 = vmatprep.mubr.bf16.mxu0 0
      %1008 = vmatmul.mubr.bf16.gmra.mxu0 %v917
      %v1009 = vpop.f32.mrf.mxu0
      %v1010 = vadd.f32 0.0, %v1009
      %v1011 = vpop.f32.mrf.mxu0
      %v1012 = vpop.f32.mrf.mxu0
      %v1013 = vadd.f32 0.0, %v1012
      %v1014 = vpop.f32.mrf.mxu0
      %1015 = vmatprep.mubr.bf16.mxu0 0
      %1016 = vmatmul.mubr.bf16.gmra.mxu0 %v920
      %v1017 = vpop.f32.mrf.mxu0
      %v1018 = vadd.f32 0.0, %v1017
      %v1019 = vpop.f32.mrf.mxu0
      %v1020 = vpop.f32.mrf.mxu0
      %v1021 = vadd.f32 0.0, %v1020
      %v1022 = vpop.f32.mrf.mxu0
      %1023 = vmatprep.mubr.bf16.mxu0 0
      %1024 = vmatmul.mubr.bf16.gmra.mxu0 %v923
      %v1025 = vpop.f32.mrf.mxu0
      %v1026 = vadd.f32 0.0, %v1025
      %v1027 = vpop.f32.mrf.mxu0
      %v1028 = vpop.f32.mrf.mxu0
      %v1029 = vadd.f32 0.0, %v1028
      %v1030 = vpop.f32.mrf.mxu0
      %1031 = vmatprep.mubr.bf16.mxu0 0
      %1032 = vmatmul.mubr.bf16.gmra.mxu0 %v926
      %v1033 = vpop.f32.mrf.mxu0
      %v1034 = vadd.f32 0.0, %v1033
      %v1035 = vpop.f32.mrf.mxu0
      %v1036 = vpop.f32.mrf.mxu0
      %v1037 = vadd.f32 0.0, %v1036
      %v1038 = vpop.f32.mrf.mxu0
      %1039 = vmatprep.mubr.bf16.mxu0 0
      %1040 = vmatmul.mubr.bf16.gmra.mxu0 %v929
      %v1041 = vpop.f32.mrf.mxu0
      %v1042 = vadd.f32 0.0, %v1041
      %v1043 = vpop.f32.mrf.mxu0
      %v1044 = vpop.f32.mrf.mxu0
      %v1045 = vadd.f32 0.0, %v1044
      %v1046 = vpop.f32.mrf.mxu0
      %1047 = vdwg.mxu0
      %v1048 = vld [vmem:[%s472] sm:$0x1]
      %v1050 = vlaneseq
      %v1051 = vshrl.u32 %v1050, 7
      %v1052 = vsub.s32 0, %v1051
      %v1053 = vrot.slane %v1048, %v1052
      %v1055 = vmul.f32 %v970, %v1053
      %v1056 = vmul.f32 %v973, %v1053
      %v1057 = vmul.f32 %v978, %v1053
      %v1058 = vmul.f32 %v981, %v1053
      %v1059 = vmul.f32 %v986, %v1053
      %v1060 = vmul.f32 %v989, %v1053
      %v1061 = vmul.f32 %v994, %v1053
      %v1062 = vmul.f32 %v997, %v1053
      %v1063 = vmul.f32 %v1002, %v1053
      %v1064 = vmul.f32 %v1005, %v1053
      %v1065 = vmul.f32 %v1010, %v1053
      %v1066 = vmul.f32 %v1013, %v1053
      %v1067 = vmul.f32 %v1018, %v1053
      %v1068 = vmul.f32 %v1021, %v1053
      %v1069 = vmul.f32 %v1026, %v1053
      %v1070 = vmul.f32 %v1029, %v1053
      %v1071 = vmul.f32 %v1034, %v1053
      %v1072 = vmul.f32 %v1037, %v1053
      %v1073 = vmul.f32 %v1042, %v1053
      %v1074 = vmul.f32 %v1045, %v1053
      %v1075 = vld [vmem:[%s475] sm:$0x1]
      %v1077 = vlaneseq
      %v1078 = vshrl.u32 %v1077, 7
      %v1079 = vsub.s32 0, %v1078
      %v1080 = vrot.slane %v1075, %v1079
      %v1082 = vadd.f32 %v1055, %v1080
      %v1083 = vadd.f32 %v1056, %v1080
      %v1084 = vadd.f32 %v1057, %v1080
      %v1085 = vadd.f32 %v1058, %v1080
      %v1086 = vadd.f32 %v1059, %v1080
      %v1087 = vadd.f32 %v1060, %v1080
      %v1088 = vadd.f32 %v1061, %v1080
      %v1089 = vadd.f32 %v1062, %v1080
      %v1090 = vadd.f32 %v1063, %v1080
      %v1091 = vadd.f32 %v1064, %v1080
      %v1092 = vadd.f32 %v1065, %v1080
      %v1093 = vadd.f32 %v1066, %v1080
      %v1094 = vadd.f32 %v1067, %v1080
      %v1095 = vadd.f32 %v1068, %v1080
      %v1096 = vadd.f32 %v1069, %v1080
      %v1097 = vadd.f32 %v1070, %v1080
      %v1098 = vadd.f32 %v1071, %v1080
      %v1099 = vadd.f32 %v1072, %v1080
      %v1100 = vadd.f32 %v1073, %v1080
      %v1101 = vadd.f32 %v1074, %v1080
      %v1102 = vmul.f32 %v1082, 0.1
      %v1103 = vmul.f32 %v1083, 0.1
      %v1104 = vmul.f32 %v1084, 0.1
      %v1105 = vmul.f32 %v1085, 0.1
      %v1106 = vmul.f32 %v1086, 0.1
      %v1107 = vmul.f32 %v1087, 0.1
      %v1108 = vmul.f32 %v1088, 0.1
      %v1109 = vmul.f32 %v1089, 0.1
      %v1110 = vmul.f32 %v1090, 0.1
      %v1111 = vmul.f32 %v1091, 0.1
      %v1112 = vmul.f32 %v1092, 0.1
      %v1113 = vmul.f32 %v1093, 0.1
      %v1114 = vmul.f32 %v1094, 0.1
      %v1115 = vmul.f32 %v1095, 0.1
      %v1116 = vmul.f32 %v1096, 0.1
      %v1117 = vmul.f32 %v1097, 0.1
      %v1118 = vmul.f32 %v1098, 0.1
      %v1119 = vmul.f32 %v1099, 0.1
      %v1120 = vmul.f32 %v1100, 0.1
      %v1121 = vmul.f32 %v1101, 0.1
      %v1122 = vmax.f32 %v1082, %v1102
      %v1123 = vmax.f32 %v1083, %v1103
      %v1124 = vmax.f32 %v1084, %v1104
      %v1125 = vmax.f32 %v1085, %v1105
      %v1126 = vmax.f32 %v1086, %v1106
      %v1127 = vmax.f32 %v1087, %v1107
      %v1128 = vmax.f32 %v1088, %v1108
      %v1129 = vmax.f32 %v1089, %v1109
      %v1130 = vmax.f32 %v1090, %v1110
      %v1131 = vmax.f32 %v1091, %v1111
      %v1132 = vmax.f32 %v1092, %v1112
      %v1133 = vmax.f32 %v1093, %v1113
      %v1134 = vmax.f32 %v1094, %v1114
      %v1135 = vmax.f32 %v1095, %v1115
      %v1136 = vmax.f32 %v1096, %v1116
      %v1137 = vmax.f32 %v1097, %v1117
      %v1138 = vmax.f32 %v1098, %v1118
      %v1139 = vmax.f32 %v1099, %v1119
      %v1140 = vmax.f32 %v1100, %v1120
      %v1141 = vmax.f32 %v1101, %v1121
      %v1142 = vld [vmem:[%s1] sm:$0xff]
      %v1143 = vld [vmem:[%s1 + $0x8] sm:$0xff]
      %v1144 = vld [vmem:[%s1 + $0x10] sm:$0xff]
      %v1145 = vld [vmem:[%s1 + $0x18] sm:$0xff]
      %v1146 = vld [vmem:[%s1 + $0x20] sm:$0xff]
      %v1147 = vld [vmem:[%s1 + $0x28] sm:$0xff]
      %v1148 = vld [vmem:[%s1 + $0x30] sm:$0xff]
      %v1149 = vld [vmem:[%s1 + $0x38] sm:$0xff]
      %v1150 = vld [vmem:[%s1 + $0x40] sm:$0xff]
      %v1151 = vld [vmem:[%s1 + $0x48] sm:$0xff]
      %v1152 = vld [vmem:[%s1 + $0x50] sm:$0xff]
      %v1153 = vld [vmem:[%s1 + $0x58] sm:$0xff]
      %v1154 = vld [vmem:[%s1 + $0x60] sm:$0xff]
      %v1155 = vld [vmem:[%s1 + $0x68] sm:$0xff]
      %v1156 = vld [vmem:[%s1 + $0x70] sm:$0xff]
      %v1157 = vld [vmem:[%s1 + $0x78] sm:$0xff]
      %v1158 = vld [vmem:[%s1 + $0x80] sm:$0xff]
      %v1159 = vld [vmem:[%s1 + $0x88] sm:$0xff]
      %v1160 = vld [vmem:[%s1 + $0x90] sm:$0xff]
      %v1161 = vld [vmem:[%s1 + $0x98] sm:$0xff]
      %1163 = vset.pattern.permute.xlu0 0
      %1164 = vperm.xlu0 %1163, %v1142
      %v1165 = vpop.permute.xlu0 %1164
      %1168 = vset.pattern.permute.xlu0 0
      %1169 = vperm.xlu0 %1168, %v1143
      %v1170 = vpop.permute.xlu0 %1169
      %1173 = vset.pattern.permute.xlu0 0
      %1174 = vperm.xlu0 %1173, %v1144
      %v1175 = vpop.permute.xlu0 %1174
      %1178 = vset.pattern.permute.xlu0 0
      %1179 = vperm.xlu0 %1178, %v1145
      %v1180 = vpop.permute.xlu0 %1179
      %1183 = vset.pattern.permute.xlu0 0
      %1184 = vperm.xlu0 %1183, %v1146
      %v1185 = vpop.permute.xlu0 %1184
      %1188 = vset.pattern.permute.xlu0 0
      %1189 = vperm.xlu0 %1188, %v1147
      %v1190 = vpop.permute.xlu0 %1189
      %1193 = vset.pattern.permute.xlu0 0
      %1194 = vperm.xlu0 %1193, %v1148
      %v1195 = vpop.permute.xlu0 %1194
      %1198 = vset.pattern.permute.xlu0 0
      %1199 = vperm.xlu0 %1198, %v1149
      %v1200 = vpop.permute.xlu0 %1199
      %1203 = vset.pattern.permute.xlu0 0
      %1204 = vperm.xlu0 %1203, %v1150
      %v1205 = vpop.permute.xlu0 %1204
      %1208 = vset.pattern.permute.xlu0 0
      %1209 = vperm.xlu0 %1208, %v1151
      %v1210 = vpop.permute.xlu0 %1209
      %1213 = vset.pattern.permute.xlu0 0
      %1214 = vperm.xlu0 %1213, %v1152
      %v1215 = vpop.permute.xlu0 %1214
      %1218 = vset.pattern.permute.xlu0 0
      %1219 = vperm.xlu0 %1218, %v1153
      %v1220 = vpop.permute.xlu0 %1219
      %1223 = vset.pattern.permute.xlu0 0
      %1224 = vperm.xlu0 %1223, %v1154
      %v1225 = vpop.permute.xlu0 %1224
      %1228 = vset.pattern.permute.xlu0 0
      %1229 = vperm.xlu0 %1228, %v1155
      %v1230 = vpop.permute.xlu0 %1229
      %1233 = vset.pattern.permute.xlu0 0
      %1234 = vperm.xlu0 %1233, %v1156
      %v1235 = vpop.permute.xlu0 %1234
      %1238 = vset.pattern.permute.xlu0 0
      %1239 = vperm.xlu0 %1238, %v1157
      %v1240 = vpop.permute.xlu0 %1239
      %1243 = vset.pattern.permute.xlu0 0
      %1244 = vperm.xlu0 %1243, %v1158
      %v1245 = vpop.permute.xlu0 %1244
      %1248 = vset.pattern.permute.xlu0 0
      %1249 = vperm.xlu0 %1248, %v1159
      %v1250 = vpop.permute.xlu0 %1249
      %1253 = vset.pattern.permute.xlu0 0
      %1254 = vperm.xlu0 %1253, %v1160
      %v1255 = vpop.permute.xlu0 %1254
      %1258 = vset.pattern.permute.xlu0 0
      %1259 = vperm.xlu0 %1258, %v1161
      %v1260 = vpop.permute.xlu0 %1259
      %v1262 = vmul.f32 %v1122, %v1165
      %v1263 = vmul.f32 %v1123, %v1170
      %v1264 = vmul.f32 %v1124, %v1175
      %v1265 = vmul.f32 %v1125, %v1180
      %v1266 = vmul.f32 %v1126, %v1185
      %v1267 = vmul.f32 %v1127, %v1190
      %v1268 = vmul.f32 %v1128, %v1195
      %v1269 = vmul.f32 %v1129, %v1200
      %v1270 = vmul.f32 %v1130, %v1205
      %v1271 = vmul.f32 %v1131, %v1210
      %v1272 = vmul.f32 %v1132, %v1215
      %v1273 = vmul.f32 %v1133, %v1220
      %v1274 = vmul.f32 %v1134, %v1225
      %v1275 = vmul.f32 %v1135, %v1230
      %v1276 = vmul.f32 %v1136, %v1235
      %v1277 = vmul.f32 %v1137, %v1240
      %v1278 = vmul.f32 %v1138, %v1245
      %v1279 = vmul.f32 %v1139, %v1250
      %v1280 = vmul.f32 %v1140, %v1255
      %v1281 = vmul.f32 %v1141, %v1260
      %v1282 = vpack.c.bf16 %v1263, %v1262
      %v1283 = vpack.c.bf16 %v1265, %v1264
      %v1284 = vpack.c.bf16 %v1267, %v1266
      %v1285 = vpack.c.bf16 %v1269, %v1268
      %v1286 = vpack.c.bf16 %v1271, %v1270
      %v1287 = vpack.c.bf16 %v1273, %v1272
      %v1288 = vpack.c.bf16 %v1275, %v1274
      %v1289 = vpack.c.bf16 %v1277, %v1276
      %v1290 = vpack.c.bf16 %v1279, %v1278
      %v1291 = vpack.c.bf16 %v1281, %v1280
      %v1302 = vunpack.c.l.b16 %v1282
      %v1303 = vunpack.c.h.b16 %v1282
      %v1304 = vunpack.c.l.b16 %v1283
      %v1305 = vunpack.c.h.b16 %v1283
      %v1306 = vunpack.c.l.b16 %v1284
      %v1307 = vunpack.c.h.b16 %v1284
      %v1308 = vunpack.c.l.b16 %v1285
      %v1309 = vunpack.c.h.b16 %v1285
      %v1310 = vunpack.c.l.b16 %v1286
      %v1311 = vunpack.c.h.b16 %v1286
      %v1312 = vunpack.c.l.b16 %v1287
      %v1313 = vunpack.c.h.b16 %v1287
      %v1314 = vunpack.c.l.b16 %v1288
      %v1315 = vunpack.c.h.b16 %v1288
      %v1316 = vunpack.c.l.b16 %v1289
      %v1317 = vunpack.c.h.b16 %v1289
      %v1318 = vunpack.c.l.b16 %v1290
      %v1319 = vunpack.c.h.b16 %v1290
      %v1320 = vunpack.c.l.b16 %v1291
      %v1321 = vunpack.c.h.b16 %v1291
      %v1322 = vpack.c.b16 %v1302, %v1302
      %v1323 = vpack.c.b16 %v1303, %v1303
      %v1324 = vpack.c.b16 %v1304, %v1304
      %v1325 = vpack.c.b16 %v1305, %v1305
      %v1326 = vpack.c.b16 %v1306, %v1306
      %v1327 = vpack.c.b16 %v1307, %v1307
      %v1328 = vpack.c.b16 %v1308, %v1308
      %v1329 = vpack.c.b16 %v1309, %v1309
      %v1330 = vpack.c.b16 %v1310, %v1310
      %v1331 = vpack.c.b16 %v1311, %v1311
      %v1332 = vpack.c.b16 %v1312, %v1312
      %v1333 = vpack.c.b16 %v1313, %v1313
      %v1334 = vpack.c.b16 %v1314, %v1314
      %v1335 = vpack.c.b16 %v1315, %v1315
      %v1336 = vpack.c.b16 %v1316, %v1316
      %v1337 = vpack.c.b16 %v1317, %v1317
      %v1338 = vpack.c.b16 %v1318, %v1318
      %v1339 = vpack.c.b16 %v1319, %v1319
      %v1340 = vpack.c.b16 %v1320, %v1320
      %v1341 = vpack.c.b16 %v1321, %v1321
      %vm1362 = vcmask 27648
      %1363 = vst.msk [vmem:[#allocation3] sm:$0xf] %vm1362, %v1322
      %1364 = vst.msk [vmem:[#allocation3 + $0x4] sm:$0xf] %vm1362, %v1323
      %1365 = vst.msk [vmem:[#allocation3 + $0x8] sm:$0xf] %vm1362, %v1324
      %1366 = vst.msk [vmem:[#allocation3 + $0xc] sm:$0xf] %vm1362, %v1325
      %1367 = vst.msk [vmem:[#allocation3 + $0x10] sm:$0xf] %vm1362, %v1326
      %1368 = vst.msk [vmem:[#allocation3 + $0x14] sm:$0xf] %vm1362, %v1327
      %1369 = vst.msk [vmem:[#allocation3 + $0x18] sm:$0xf] %vm1362, %v1328
      %1370 = vst.msk [vmem:[#allocation3 + $0x1c] sm:$0xf] %vm1362, %v1329
      %1371 = vst.msk [vmem:[#allocation3 + $0x20] sm:$0xf] %vm1362, %v1330
      %1372 = vst.msk [vmem:[#allocation3 + $0x24] sm:$0xf] %vm1362, %v1331
      %1373 = vst.msk [vmem:[#allocation3 + $0x28] sm:$0xf] %vm1362, %v1332
      %1374 = vst.msk [vmem:[#allocation3 + $0x2c] sm:$0xf] %vm1362, %v1333
      %1375 = vst.msk [vmem:[#allocation3 + $0x30] sm:$0xf] %vm1362, %v1334
      %1376 = vst.msk [vmem:[#allocation3 + $0x34] sm:$0xf] %vm1362, %v1335
      %1377 = vst.msk [vmem:[#allocation3 + $0x38] sm:$0xf] %vm1362, %v1336
      %1378 = vst.msk [vmem:[#allocation3 + $0x3c] sm:$0xf] %vm1362, %v1337
      %1379 = vst.msk [vmem:[#allocation3 + $0x40] sm:$0xf] %vm1362, %v1338
      %1380 = vst.msk [vmem:[#allocation3 + $0x44] sm:$0xf] %vm1362, %v1339
      %1381 = vst.msk [vmem:[#allocation3 + $0x48] sm:$0xf] %vm1362, %v1340
      %1382 = vst.msk [vmem:[#allocation3 + $0x4c] sm:$0xf] %vm1362, %v1341
      %v1383 = vld [vmem:[#allocation3] sm:$0xf]
      %v1384 = vld [vmem:[#allocation3 + $0x4] sm:$0xf]
      %v1385 = vld [vmem:[#allocation3 + $0x8] sm:$0xf]
      %v1386 = vld [vmem:[#allocation3 + $0xc] sm:$0xf]
      %v1387 = vld [vmem:[#allocation3 + $0x10] sm:$0xf]
      %v1388 = vld [vmem:[#allocation3 + $0x14] sm:$0xf]
      %v1389 = vld [vmem:[#allocation3 + $0x18] sm:$0xf]
      %v1390 = vld [vmem:[#allocation3 + $0x1c] sm:$0xf]
      %v1391 = vld [vmem:[#allocation3 + $0x20] sm:$0xf]
      %v1392 = vld [vmem:[#allocation3 + $0x24] sm:$0xf]
      %v1393 = vld [vmem:[#allocation3 + $0x28] sm:$0xf]
      %v1394 = vld [vmem:[#allocation3 + $0x2c] sm:$0xf]
      %v1395 = vld [vmem:[#allocation3 + $0x30] sm:$0xf]
      %v1396 = vld [vmem:[#allocation3 + $0x34] sm:$0xf]
      %v1397 = vld [vmem:[#allocation3 + $0x38] sm:$0xf]
      %v1398 = vld [vmem:[%s480] sm:$0x3]
      %v1414 = vunpack.c.l.b16 %v1383
      %v1415 = vunpack.c.l.b16 %v1384
      %v1416 = vunpack.c.l.b16 %v1385
      %v1417 = vunpack.c.l.b16 %v1386
      %v1418 = vunpack.c.l.b16 %v1387
      %v1419 = vunpack.c.l.b16 %v1388
      %v1420 = vunpack.c.l.b16 %v1389
      %v1421 = vunpack.c.l.b16 %v1390
      %v1422 = vunpack.c.l.b16 %v1391
      %v1423 = vunpack.c.l.b16 %v1392
      %v1424 = vunpack.c.l.b16 %v1393
      %v1425 = vunpack.c.l.b16 %v1394
      %v1426 = vunpack.c.l.b16 %v1395
      %v1427 = vunpack.c.l.b16 %v1396
      %v1428 = vunpack.c.l.b16 %v1397
      %v1429 = vpack.c.b16 %v1415, %v1414
      %v1430 = vpack.c.b16 %v1417, %v1416
      %v1431 = vpack.c.b16 %v1419, %v1418
      %v1432 = vpack.c.b16 %v1421, %v1420
      %v1433 = vpack.c.b16 %v1423, %v1422
      %v1434 = vpack.c.b16 %v1425, %v1424
      %v1435 = vpack.c.b16 %v1427, %v1426
      %v1436 = vpack.c.b16 %v1428, %v1428
      %vm1437 = vcmask 31744
      %v1439 = vsel %vm1437, %v1429, 0
      %v1442 = vsel %vm1437, %v1430, 0
      %v1445 = vsel %vm1437, %v1431, 0
      %v1448 = vsel %vm1437, %v1432, 0
      %v1451 = vsel %vm1437, %v1433, 0
      %v1454 = vsel %vm1437, %v1434, 0
      %v1457 = vsel %vm1437, %v1435, 0
      %v1460 = vsel %vm1437, %v1436, 0
      %vm1462 = vcmask 1041408
      %v1464 = vsel %vm1462, %v1398, 0
      %1466 = vmatprep.subr.bf16.mxu0 0
      %1467 = vmatpush1.bf16.msra.mxu0 0
      %1468 = vmatprep.subr.bf16.mxu0 0
      %1469 = vmatpush1.bf16.msra.mxu0 0
      %1470 = vmatprep.subr.bf16.mxu0 0
      %1471 = vmatpush1.bf16.msra.mxu0 0
      %1472 = vmatprep.subr.bf16.mxu0 0
      %1473 = vmatpush1.bf16.msra.mxu0 0
      %1474 = vmatprep.subr.bf16.mxu0 0
      %1475 = vmatpush1.bf16.msra.mxu0 0
      %1476 = vmatprep.subr.bf16.mxu0 0
      %1477 = vmatpush1.bf16.msra.mxu0 0
      %1478 = vmatprep.subr.bf16.mxu0 0
      %1479 = vmatpush1.bf16.msra.mxu0 0
      %1480 = vmatprep.subr.bf16.mxu0 0
      %1481 = vmatpush1.bf16.msra.mxu0 %v1464
      %1482 = vmatprep.subr.bf16.mxu0 0
      %1483 = vmatpush2.bf16.msra.mxu0 0
      %1484 = vmatprep.subr.bf16.mxu0 0
      %1485 = vmatpush2.bf16.msra.mxu0 0
      %1486 = vmatprep.subr.bf16.mxu0 0
      %1487 = vmatpush2.bf16.msra.mxu0 0
      %1488 = vmatprep.subr.bf16.mxu0 0
      %1489 = vmatpush2.bf16.msra.mxu0 0
      %1490 = vmatprep.subr.bf16.mxu0 0
      %1491 = vmatpush2.bf16.msra.mxu0 0
      %1492 = vmatprep.subr.bf16.mxu0 0
      %1493 = vmatpush2.bf16.msra.mxu0 0
      %1494 = vmatprep.subr.bf16.mxu0 0
      %1495 = vmatpush2.bf16.msra.mxu0 0
      %1496 = vmatprep.subr.bf16.mxu0 0
      %1497 = vmatpush2.bf16.msra.mxu0 0
      %1498 = vmatprep.mubr.bf16.mxu0 0
      %1499 = vmatmul.mubr.bf16.gmra.mxu0 %v1439
      %v1500 = vpop.f32.mrf.mxu0
      %v1501 = vadd.f32 0.0, %v1500
      %v1502 = vpop.f32.mrf.mxu0
      %v1503 = vpop.f32.mrf.mxu0
      %v1504 = vadd.f32 0.0, %v1503
      %v1505 = vpop.f32.mrf.mxu0
      %1506 = vmatprep.mubr.bf16.mxu0 0
      %1507 = vmatmul.mubr.bf16.gmra.mxu0 %v1442
      %v1508 = vpop.f32.mrf.mxu0
      %v1509 = vadd.f32 0.0, %v1508
      %v1510 = vpop.f32.mrf.mxu0
      %v1511 = vpop.f32.mrf.mxu0
      %v1512 = vadd.f32 0.0, %v1511
      %v1513 = vpop.f32.mrf.mxu0
      %1514 = vmatprep.mubr.bf16.mxu0 0
      %1515 = vmatmul.mubr.bf16.gmra.mxu0 %v1445
      %v1516 = vpop.f32.mrf.mxu0
      %v1517 = vadd.f32 0.0, %v1516
      %v1518 = vpop.f32.mrf.mxu0
      %v1519 = vpop.f32.mrf.mxu0
      %v1520 = vadd.f32 0.0, %v1519
      %v1521 = vpop.f32.mrf.mxu0
      %1522 = vmatprep.mubr.bf16.mxu0 0
      %1523 = vmatmul.mubr.bf16.gmra.mxu0 %v1448
      %v1524 = vpop.f32.mrf.mxu0
      %v1525 = vadd.f32 0.0, %v1524
      %v1526 = vpop.f32.mrf.mxu0
      %v1527 = vpop.f32.mrf.mxu0
      %v1528 = vadd.f32 0.0, %v1527
      %v1529 = vpop.f32.mrf.mxu0
      %1530 = vmatprep.mubr.bf16.mxu0 0
      %1531 = vmatmul.mubr.bf16.gmra.mxu0 %v1451
      %v1532 = vpop.f32.mrf.mxu0
      %v1533 = vadd.f32 0.0, %v1532
      %v1534 = vpop.f32.mrf.mxu0
      %v1535 = vpop.f32.mrf.mxu0
      %v1536 = vadd.f32 0.0, %v1535
      %v1537 = vpop.f32.mrf.mxu0
      %1538 = vmatprep.mubr.bf16.mxu0 0
      %1539 = vmatmul.mubr.bf16.gmra.mxu0 %v1454
      %v1540 = vpop.f32.mrf.mxu0
      %v1541 = vadd.f32 0.0, %v1540
      %v1542 = vpop.f32.mrf.mxu0
      %v1543 = vpop.f32.mrf.mxu0
      %v1544 = vadd.f32 0.0, %v1543
      %v1545 = vpop.f32.mrf.mxu0
      %1546 = vmatprep.mubr.bf16.mxu0 0
      %1547 = vmatmul.mubr.bf16.gmra.mxu0 %v1457
      %v1548 = vpop.f32.mrf.mxu0
      %v1549 = vadd.f32 0.0, %v1548
      %v1550 = vpop.f32.mrf.mxu0
      %v1551 = vpop.f32.mrf.mxu0
      %v1552 = vadd.f32 0.0, %v1551
      %v1553 = vpop.f32.mrf.mxu0
      %1554 = vmatprep.mubr.bf16.mxu0 0
      %1555 = vmatmul.mubr.bf16.gmra.mxu0 %v1460
      %v1556 = vpop.f32.mrf.mxu0
      %v1557 = vadd.f32 0.0, %v1556
      %v1558 = vpop.f32.mrf.mxu0
      %v1559 = vpop.f32.mrf.mxu0
      %v1560 = vpop.f32.mrf.mxu0
      %1561 = vdwg.mxu0
      %1562 = vst.msk [vmem:[#allocation4] sm:$0xff] %vm900, %v1501
      %1563 = vst.msk [vmem:[#allocation4 + $0x8] sm:$0xff] %vm900, %v1504
      %1564 = vst.msk [vmem:[#allocation4 + $0x10] sm:$0xff] %vm900, %v1509
      %1565 = vst.msk [vmem:[#allocation4 + $0x18] sm:$0xff] %vm900, %v1512
      %1566 = vst.msk [vmem:[#allocation4 + $0x20] sm:$0xff] %vm900, %v1517
      %1567 = vst.msk [vmem:[#allocation4 + $0x28] sm:$0xff] %vm900, %v1520
      %1568 = vst.msk [vmem:[#allocation4 + $0x30] sm:$0xff] %vm900, %v1525
      %1569 = vst.msk [vmem:[#allocation4 + $0x38] sm:$0xff] %vm900, %v1528
      %1570 = vst.msk [vmem:[#allocation4 + $0x40] sm:$0xff] %vm900, %v1533
      %1571 = vst.msk [vmem:[#allocation4 + $0x48] sm:$0xff] %vm900, %v1536
      %1572 = vst.msk [vmem:[#allocation4 + $0x50] sm:$0xff] %vm900, %v1541
      %1573 = vst.msk [vmem:[#allocation4 + $0x58] sm:$0xff] %vm900, %v1544
      %1574 = vst.msk [vmem:[#allocation4 + $0x60] sm:$0xff] %vm900, %v1549
      %1575 = vst.msk [vmem:[#allocation4 + $0x68] sm:$0xff] %vm900, %v1552
      %1576 = vst.msk [vmem:[#allocation4 + $0x70] sm:$0xff] %vm900, %v1557
      %v1577 = vld [vmem:[#allocation4] sm:$0xff]
      %v1578 = vld [vmem:[#allocation4 + $0x8] sm:$0xff]
      %v1579 = vld [vmem:[#allocation4 + $0x10] sm:$0xff]
      %v1580 = vld [vmem:[#allocation4 + $0x18] sm:$0xff]
      %v1581 = vld [vmem:[#allocation4 + $0x20] sm:$0xff]
      %v1582 = vld [vmem:[#allocation4 + $0x28] sm:$0xff]
      %v1583 = vld [vmem:[#allocation4 + $0x30] sm:$0xff]
      %v1584 = vld [vmem:[#allocation4 + $0x38] sm:$0xff]
      %v1585 = vld [vmem:[#allocation4 + $0x40] sm:$0xff]
      %v1586 = vld [vmem:[#allocation4 + $0x48] sm:$0xff]
      %v1587 = vld [vmem:[#allocation4 + $0x50] sm:$0xff]
      %v1588 = vld [vmem:[#allocation4 + $0x58] sm:$0xff]
      %v1589 = vld [vmem:[#allocation4 + $0x60] sm:$0xff]
      %v1590 = vld [vmem:[#allocation4 + $0x68] sm:$0xff]
      %v1591 = vld [vmem:[#allocation4 + $0x70] sm:$0xff]
      %v1592 = vld [vmem:[#allocation3] sm:$0xf]
      %v1593 = vld [vmem:[#allocation3 + $0x4] sm:$0xf]
      %v1594 = vld [vmem:[#allocation3 + $0x8] sm:$0xf]
      %v1595 = vld [vmem:[#allocation3 + $0xc] sm:$0xf]
      %v1596 = vld [vmem:[#allocation3 + $0x10] sm:$0xf]
      %v1597 = vld [vmem:[#allocation3 + $0x14] sm:$0xf]
      %v1598 = vld [vmem:[#allocation3 + $0x18] sm:$0xf]
      %v1599 = vld [vmem:[#allocation3 + $0x1c] sm:$0xf]
      %v1600 = vld [vmem:[#allocation3 + $0x20] sm:$0xf]
      %v1601 = vld [vmem:[#allocation3 + $0x24] sm:$0xf]
      %v1602 = vld [vmem:[#allocation3 + $0x28] sm:$0xf]
      %v1603 = vld [vmem:[#allocation3 + $0x2c] sm:$0xf]
      %v1604 = vld [vmem:[#allocation3 + $0x30] sm:$0xf]
      %v1605 = vld [vmem:[#allocation3 + $0x34] sm:$0xf]
      %v1606 = vld [vmem:[#allocation3 + $0x38] sm:$0xf]
      %v1607 = vld [vmem:[#allocation3 + $0x3c] sm:$0x1]
      %s1608 = scalar_lea.vmem %s480, 2
      %v1609 = vld [vmem:[%s1608] sm:$0x3]
      %v1626 = vunpack.c.l.b16 %v1592
      %v1627 = vunpack.c.l.b16 %v1593
      %v1628 = vunpack.c.l.b16 %v1594
      %v1629 = vunpack.c.l.b16 %v1595
      %v1630 = vunpack.c.l.b16 %v1596
      %v1631 = vunpack.c.l.b16 %v1597
      %v1632 = vunpack.c.l.b16 %v1598
      %v1633 = vunpack.c.l.b16 %v1599
      %v1634 = vunpack.c.l.b16 %v1600
      %v1635 = vunpack.c.l.b16 %v1601
      %v1636 = vunpack.c.l.b16 %v1602
      %v1637 = vunpack.c.l.b16 %v1603
      %v1638 = vunpack.c.l.b16 %v1604
      %v1639 = vunpack.c.l.b16 %v1605
      %v1640 = vunpack.c.l.b16 %v1606
      %v1641 = vunpack.c.l.b16 %v1607
      %v1642 = vpack.c.b16 %v1627, %v1626
      %v1643 = vpack.c.b16 %v1629, %v1628
      %v1644 = vpack.c.b16 %v1631, %v1630
      %v1645 = vpack.c.b16 %v1633, %v1632
      %v1646 = vpack.c.b16 %v1635, %v1634
      %v1647 = vpack.c.b16 %v1637, %v1636
      %v1648 = vpack.c.b16 %v1639, %v1638
      %v1649 = vpack.c.b16 %v1641, %v1640
      %vm1650 = vsmask.f32 7424
      %v1652 = vshrl.u32 %v1642, 16
      %v1654 = vshll.u32 %v1642, 16
      %v1656 = vrot.slane %v1654, 1
      %v1657 = vor.u32 %v1652, %v1656
      %v1659 = vshll.u32 %v1643, 16
      %v1661 = vrot.slane %v1659, 1
      %v1662 = vsel %vm1650, %v1657, %v1661
      %v1663 = vshrl.u32 %v1643, 16
      %v1665 = vor.u32 %v1663, %v1661
      %v1667 = vshll.u32 %v1644, 16
      %v1669 = vrot.slane %v1667, 1
      %v1670 = vsel %vm1650, %v1665, %v1669
      %v1671 = vshrl.u32 %v1644, 16
      %v1673 = vor.u32 %v1671, %v1669
      %v1675 = vshll.u32 %v1645, 16
      %v1677 = vrot.slane %v1675, 1
      %v1678 = vsel %vm1650, %v1673, %v1677
      %v1679 = vshrl.u32 %v1645, 16
      %v1681 = vor.u32 %v1679, %v1677
      %v1683 = vshll.u32 %v1646, 16
      %v1685 = vrot.slane %v1683, 1
      %v1686 = vsel %vm1650, %v1681, %v1685
      %v1687 = vshrl.u32 %v1646, 16
      %v1689 = vor.u32 %v1687, %v1685
      %v1691 = vshll.u32 %v1647, 16
      %v1693 = vrot.slane %v1691, 1
      %v1694 = vsel %vm1650, %v1689, %v1693
      %v1695 = vshrl.u32 %v1647, 16
      %v1697 = vor.u32 %v1695, %v1693
      %v1699 = vshll.u32 %v1648, 16
      %v1701 = vrot.slane %v1699, 1
      %v1702 = vsel %vm1650, %v1697, %v1701
      %v1703 = vshrl.u32 %v1648, 16
      %v1705 = vor.u32 %v1703, %v1701
      %v1707 = vshll.u32 %v1649, 16
      %v1709 = vrot.slane %v1707, 1
      %v1710 = vsel %vm1650, %v1705, %v1709
      %v1711 = vshrl.u32 %v1649, 16
      %v1713 = vor.u32 %v1711, %v1709
      %v1715 = vsel %vm1437, %v1662, 0
      %v1718 = vsel %vm1437, %v1670, 0
      %v1721 = vsel %vm1437, %v1678, 0
      %v1724 = vsel %vm1437, %v1686, 0
      %v1727 = vsel %vm1437, %v1694, 0
      %v1730 = vsel %vm1437, %v1702, 0
      %v1733 = vsel %vm1437, %v1710, 0
      %v1736 = vsel %vm1437, %v1713, 0
      %v1739 = vsel %vm1462, %v1609, 0
      %1741 = vmatprep.subr.bf16.mxu0 0
      %1742 = vmatpush1.bf16.msra.mxu0 0
      %1743 = vmatprep.subr.bf16.mxu0 0
      %1744 = vmatpush1.bf16.msra.mxu0 0
      %1745 = vmatprep.subr.bf16.mxu0 0
      %1746 = vmatpush1.bf16.msra.mxu0 0
      %1747 = vmatprep.subr.bf16.mxu0 0
      %1748 = vmatpush1.bf16.msra.mxu0 0
      %1749 = vmatprep.subr.bf16.mxu0 0
      %1750 = vmatpush1.bf16.msra.mxu0 0
      %1751 = vmatprep.subr.bf16.mxu0 0
      %1752 = vmatpush1.bf16.msra.mxu0 0
      %1753 = vmatprep.subr.bf16.mxu0 0
      %1754 = vmatpush1.bf16.msra.mxu0 0
      %1755 = vmatprep.subr.bf16.mxu0 0
      %1756 = vmatpush1.bf16.msra.mxu0 %v1739
      %1757 = vmatprep.subr.bf16.mxu0 0
      %1758 = vmatpush2.bf16.msra.mxu0 0
      %1759 = vmatprep.subr.bf16.mxu0 0
      %1760 = vmatpush2.bf16.msra.mxu0 0
      %1761 = vmatprep.subr.bf16.mxu0 0
      %1762 = vmatpush2.bf16.msra.mxu0 0
      %1763 = vmatprep.subr.bf16.mxu0 0
      %1764 = vmatpush2.bf16.msra.mxu0 0
      %1765 = vmatprep.subr.bf16.mxu0 0
      %1766 = vmatpush2.bf16.msra.mxu0 0
      %1767 = vmatprep.subr.bf16.mxu0 0
      %1768 = vmatpush2.bf16.msra.mxu0 0
      %1769 = vmatprep.subr.bf16.mxu0 0
      %1770 = vmatpush2.bf16.msra.mxu0 0
      %1771 = vmatprep.subr.bf16.mxu0 0
      %1772 = vmatpush2.bf16.msra.mxu0 0
      %1773 = vmatprep.mubr.bf16.mxu0 0
      %1774 = vmatmul.mubr.bf16.gmra.mxu0 %v1715
      %v1775 = vpop.f32.mrf.mxu0
      %v1776 = vadd.f32 0.0, %v1775
      %v1777 = vpop.f32.mrf.mxu0
      %v1778 = vpop.f32.mrf.mxu0
      %v1779 = vadd.f32 0.0, %v1778
      %v1780 = vpop.f32.mrf.mxu0
      %1781 = vmatprep.mubr.bf16.mxu0 0
      %1782 = vmatmul.mubr.bf16.gmra.mxu0 %v1718
      %v1783 = vpop.f32.mrf.mxu0
      %v1784 = vadd.f32 0.0, %v1783
      %v1785 = vpop.f32.mrf.mxu0
      %v1786 = vpop.f32.mrf.mxu0
      %v1787 = vadd.f32 0.0, %v1786
      %v1788 = vpop.f32.mrf.mxu0
      %1789 = vmatprep.mubr.bf16.mxu0 0
      %1790 = vmatmul.mubr.bf16.gmra.mxu0 %v1721
      %v1791 = vpop.f32.mrf.mxu0
      %v1792 = vadd.f32 0.0, %v1791
      %v1793 = vpop.f32.mrf.mxu0
      %v1794 = vpop.f32.mrf.mxu0
      %v1795 = vadd.f32 0.0, %v1794
      %v1796 = vpop.f32.mrf.mxu0
      %1797 = vmatprep.mubr.bf16.mxu0 0
      %1798 = vmatmul.mubr.bf16.gmra.mxu0 %v1724
      %v1799 = vpop.f32.mrf.mxu0
      %v1800 = vadd.f32 0.0, %v1799
      %v1801 = vpop.f32.mrf.mxu0
      %v1802 = vpop.f32.mrf.mxu0
      %v1803 = vadd.f32 0.0, %v1802
      %v1804 = vpop.f32.mrf.mxu0
      %1805 = vmatprep.mubr.bf16.mxu0 0
      %1806 = vmatmul.mubr.bf16.gmra.mxu0 %v1727
      %v1807 = vpop.f32.mrf.mxu0
      %v1808 = vadd.f32 0.0, %v1807
      %v1809 = vpop.f32.mrf.mxu0
      %v1810 = vpop.f32.mrf.mxu0
      %v1811 = vadd.f32 0.0, %v1810
      %v1812 = vpop.f32.mrf.mxu0
      %1813 = vmatprep.mubr.bf16.mxu0 0
      %1814 = vmatmul.mubr.bf16.gmra.mxu0 %v1730
      %v1815 = vpop.f32.mrf.mxu0
      %v1816 = vadd.f32 0.0, %v1815
      %v1817 = vpop.f32.mrf.mxu0
      %v1818 = vpop.f32.mrf.mxu0
      %v1819 = vadd.f32 0.0, %v1818
      %v1820 = vpop.f32.mrf.mxu0
      %1821 = vmatprep.mubr.bf16.mxu0 0
      %1822 = vmatmul.mubr.bf16.gmra.mxu0 %v1733
      %v1823 = vpop.f32.mrf.mxu0
      %v1824 = vadd.f32 0.0, %v1823
      %v1825 = vpop.f32.mrf.mxu0
      %v1826 = vpop.f32.mrf.mxu0
      %v1827 = vadd.f32 0.0, %v1826
      %v1828 = vpop.f32.mrf.mxu0
      %1829 = vmatprep.mubr.bf16.mxu0 0
      %1830 = vmatmul.mubr.bf16.gmra.mxu0 %v1736
      %v1831 = vpop.f32.mrf.mxu0
      %v1832 = vadd.f32 0.0, %v1831
      %v1833 = vpop.f32.mrf.mxu0
      %v1834 = vpop.f32.mrf.mxu0
      %v1835 = vpop.f32.mrf.mxu0
      %1836 = vdwg.mxu0
      %v1837 = vadd.f32 %v1577, %v1776
      %v1838 = vadd.f32 %v1578, %v1779
      %v1839 = vadd.f32 %v1579, %v1784
      %v1840 = vadd.f32 %v1580, %v1787
      %v1841 = vadd.f32 %v1581, %v1792
      %v1842 = vadd.f32 %v1582, %v1795
      %v1843 = vadd.f32 %v1583, %v1800
      %v1844 = vadd.f32 %v1584, %v1803
      %v1845 = vadd.f32 %v1585, %v1808
      %v1846 = vadd.f32 %v1586, %v1811
      %v1847 = vadd.f32 %v1587, %v1816
      %v1848 = vadd.f32 %v1588, %v1819
      %v1849 = vadd.f32 %v1589, %v1824
      %v1850 = vadd.f32 %v1590, %v1827
      %v1851 = vadd.f32 %v1591, %v1832
      %1852 = vst.msk [vmem:[#allocation4] sm:$0xff] %vm900, %v1837
      %1853 = vst.msk [vmem:[#allocation4 + $0x8] sm:$0xff] %vm900, %v1838
      %1854 = vst.msk [vmem:[#allocation4 + $0x10] sm:$0xff] %vm900, %v1839
      %1855 = vst.msk [vmem:[#allocation4 + $0x18] sm:$0xff] %vm900, %v1840
      %1856 = vst.msk [vmem:[#allocation4 + $0x20] sm:$0xff] %vm900, %v1841
      %1857 = vst.msk [vmem:[#allocation4 + $0x28] sm:$0xff] %vm900, %v1842
      %1858 = vst.msk [vmem:[#allocation4 + $0x30] sm:$0xff] %vm900, %v1843
      %1859 = vst.msk [vmem:[#allocation4 + $0x38] sm:$0xff] %vm900, %v1844
      %1860 = vst.msk [vmem:[#allocation4 + $0x40] sm:$0xff] %vm900, %v1845
      %1861 = vst.msk [vmem:[#allocation4 + $0x48] sm:$0xff] %vm900, %v1846
      %1862 = vst.msk [vmem:[#allocation4 + $0x50] sm:$0xff] %vm900, %v1847
      %1863 = vst.msk [vmem:[#allocation4 + $0x58] sm:$0xff] %vm900, %v1848
      %1864 = vst.msk [vmem:[#allocation4 + $0x60] sm:$0xff] %vm900, %v1849
      %1865 = vst.msk [vmem:[#allocation4 + $0x68] sm:$0xff] %vm900, %v1850
      %1866 = vst.msk [vmem:[#allocation4 + $0x70] sm:$0xff] %vm900, %v1851
      %v1867 = vld [vmem:[#allocation4] sm:$0xff]
      %v1868 = vld [vmem:[#allocation4 + $0x8] sm:$0xff]
      %v1869 = vld [vmem:[#allocation4 + $0x10] sm:$0xff]
      %v1870 = vld [vmem:[#allocation4 + $0x18] sm:$0xff]
      %v1871 = vld [vmem:[#allocation4 + $0x20] sm:$0xff]
      %v1872 = vld [vmem:[#allocation4 + $0x28] sm:$0xff]
      %v1873 = vld [vmem:[#allocation4 + $0x30] sm:$0xff]
      %v1874 = vld [vmem:[#allocation4 + $0x38] sm:$0xff]
      %v1875 = vld [vmem:[#allocation4 + $0x40] sm:$0xff]
      %v1876 = vld [vmem:[#allocation4 + $0x48] sm:$0xff]
      %v1877 = vld [vmem:[#allocation4 + $0x50] sm:$0xff]
      %v1878 = vld [vmem:[#allocation4 + $0x58] sm:$0xff]
      %v1879 = vld [vmem:[#allocation4 + $0x60] sm:$0xff]
      %v1880 = vld [vmem:[#allocation4 + $0x68] sm:$0xff]
      %v1881 = vld [vmem:[#allocation4 + $0x70] sm:$0xff]
      %v1882 = vld [vmem:[#allocation3] sm:$0xe]
      %v1883 = vld [vmem:[#allocation3 + $0x4] sm:$0xf]
      %v1884 = vld [vmem:[#allocation3 + $0x8] sm:$0xf]
      %v1885 = vld [vmem:[#allocation3 + $0xc] sm:$0xf]
      %v1886 = vld [vmem:[#allocation3 + $0x10] sm:$0xf]
      %v1887 = vld [vmem:[#allocation3 + $0x14] sm:$0xf]
      %v1888 = vld [vmem:[#allocation3 + $0x18] sm:$0xf]
      %v1889 = vld [vmem:[#allocation3 + $0x1c] sm:$0xf]
      %v1890 = vld [vmem:[#allocation3 + $0x20] sm:$0xf]
      %v1891 = vld [vmem:[#allocation3 + $0x24] sm:$0xf]
      %v1892 = vld [vmem:[#allocation3 + $0x28] sm:$0xf]
      %v1893 = vld [vmem:[#allocation3 + $0x2c] sm:$0xf]
      %v1894 = vld [vmem:[#allocation3 + $0x30] sm:$0xf]
      %v1895 = vld [vmem:[#allocation3 + $0x34] sm:$0xf]
      %v1896 = vld [vmem:[#allocation3 + $0x38] sm:$0xf]
      %v1897 = vld [vmem:[#allocation3 + $0x3c] sm:$0x1]
      %s1898 = scalar_lea.vmem %s480, 4
      %v1899 = vld [vmem:[%s1898] sm:$0x3]
      %v1916 = vunpack.c.l.b16 %v1882
      %v1917 = vunpack.c.l.b16 %v1883
      %v1918 = vunpack.c.l.b16 %v1884
      %v1919 = vunpack.c.l.b16 %v1885
      %v1920 = vunpack.c.l.b16 %v1886
      %v1921 = vunpack.c.l.b16 %v1887
      %v1922 = vunpack.c.l.b16 %v1888
      %v1923 = vunpack.c.l.b16 %v1889
      %v1924 = vunpack.c.l.b16 %v1890
      %v1925 = vunpack.c.l.b16 %v1891
      %v1926 = vunpack.c.l.b16 %v1892
      %v1927 = vunpack.c.l.b16 %v1893
      %v1928 = vunpack.c.l.b16 %v1894
      %v1929 = vunpack.c.l.b16 %v1895
      %v1930 = vunpack.c.l.b16 %v1896
      %v1931 = vunpack.c.l.b16 %v1897
      %v1932 = vpack.c.b16 %v1917, %v1916
      %v1933 = vpack.c.b16 %v1919, %v1918
      %v1934 = vpack.c.b16 %v1921, %v1920
      %v1935 = vpack.c.b16 %v1923, %v1922
      %v1936 = vpack.c.b16 %v1925, %v1924
      %v1937 = vpack.c.b16 %v1927, %v1926
      %v1938 = vpack.c.b16 %v1929, %v1928
      %v1939 = vpack.c.b16 %v1931, %v1930
      %vm1940 = vcmask 1046528
      %v1941 = vrot.slane %v1932, 1
      %v1942 = vrot.slane %v1933, 1
      %v1943 = vsel %vm1940, %v1941, %v1942
      %v1944 = vrot.slane %v1934, 1
      %v1945 = vsel %vm1940, %v1942, %v1944
      %v1946 = vrot.slane %v1935, 1
      %v1947 = vsel %vm1940, %v1944, %v1946
      %v1948 = vrot.slane %v1936, 1
      %v1949 = vsel %vm1940, %v1946, %v1948
      %v1950 = vrot.slane %v1937, 1
      %v1951 = vsel %vm1940, %v1948, %v1950
      %v1952 = vrot.slane %v1938, 1
      %v1953 = vsel %vm1940, %v1950, %v1952
      %v1954 = vrot.slane %v1939, 1
      %v1955 = vsel %vm1940, %v1952, %v1954
      %v1957 = vsel %vm1437, %v1943, 0
      %v1960 = vsel %vm1437, %v1945, 0
      %v1963 = vsel %vm1437, %v1947, 0
      %v1966 = vsel %vm1437, %v1949, 0
      %v1969 = vsel %vm1437, %v1951, 0
      %v1972 = vsel %vm1437, %v1953, 0
      %v1975 = vsel %vm1437, %v1955, 0
      %v1978 = vsel %vm1437, %v1954, 0
      %v1981 = vsel %vm1462, %v1899, 0
      %1983 = vmatprep.subr.bf16.mxu0 0
      %1984 = vmatpush1.bf16.msra.mxu0 0
      %1985 = vmatprep.subr.bf16.mxu0 0
      %1986 = vmatpush1.bf16.msra.mxu0 0
      %1987 = vmatprep.subr.bf16.mxu0 0
      %1988 = vmatpush1.bf16.msra.mxu0 0
      %1989 = vmatprep.subr.bf16.mxu0 0
      %1990 = vmatpush1.bf16.msra.mxu0 0
      %1991 = vmatprep.subr.bf16.mxu0 0
      %1992 = vmatpush1.bf16.msra.mxu0 0
      %1993 = vmatprep.subr.bf16.mxu0 0
      %1994 = vmatpush1.bf16.msra.mxu0 0
      %1995 = vmatprep.subr.bf16.mxu0 0
      %1996 = vmatpush1.bf16.msra.mxu0 0
      %1997 = vmatprep.subr.bf16.mxu0 0
      %1998 = vmatpush1.bf16.msra.mxu0 %v1981
      %1999 = vmatprep.subr.bf16.mxu0 0
      %2000 = vmatpush2.bf16.msra.mxu0 0
      %2001 = vmatprep.subr.bf16.mxu0 0
      %2002 = vmatpush2.bf16.msra.mxu0 0
      %2003 = vmatprep.subr.bf16.mxu0 0
      %2004 = vmatpush2.bf16.msra.mxu0 0
      %2005 = vmatprep.subr.bf16.mxu0 0
      %2006 = vmatpush2.bf16.msra.mxu0 0
      %2007 = vmatprep.subr.bf16.mxu0 0
      %2008 = vmatpush2.bf16.msra.mxu0 0
      %2009 = vmatprep.subr.bf16.mxu0 0
      %2010 = vmatpush2.bf16.msra.mxu0 0
      %2011 = vmatprep.subr.bf16.mxu0 0
      %2012 = vmatpush2.bf16.msra.mxu0 0
      %2013 = vmatprep.subr.bf16.mxu0 0
      %2014 = vmatpush2.bf16.msra.mxu0 0
      %2015 = vmatprep.mubr.bf16.mxu0 0
      %2016 = vmatmul.mubr.bf16.gmra.mxu0 %v1957
      %v2017 = vpop.f32.mrf.mxu0
      %v2018 = vadd.f32 0.0, %v2017
      %v2019 = vpop.f32.mrf.mxu0
      %v2020 = vpop.f32.mrf.mxu0
      %v2021 = vadd.f32 0.0, %v2020
      %v2022 = vpop.f32.mrf.mxu0
      %2023 = vmatprep.mubr.bf16.mxu0 0
      %2024 = vmatmul.mubr.bf16.gmra.mxu0 %v1960
      %v2025 = vpop.f32.mrf.mxu0
      %v2026 = vadd.f32 0.0, %v2025
      %v2027 = vpop.f32.mrf.mxu0
      %v2028 = vpop.f32.mrf.mxu0
      %v2029 = vadd.f32 0.0, %v2028
      %v2030 = vpop.f32.mrf.mxu0
      %2031 = vmatprep.mubr.bf16.mxu0 0
      %2032 = vmatmul.mubr.bf16.gmra.mxu0 %v1963
      %v2033 = vpop.f32.mrf.mxu0
      %v2034 = vadd.f32 0.0, %v2033
      %v2035 = vpop.f32.mrf.mxu0
      %v2036 = vpop.f32.mrf.mxu0
      %v2037 = vadd.f32 0.0, %v2036
      %v2038 = vpop.f32.mrf.mxu0
      %2039 = vmatprep.mubr.bf16.mxu0 0
      %2040 = vmatmul.mubr.bf16.gmra.mxu0 %v1966
      %v2041 = vpop.f32.mrf.mxu0
      %v2042 = vadd.f32 0.0, %v2041
      %v2043 = vpop.f32.mrf.mxu0
      %v2044 = vpop.f32.mrf.mxu0
      %v2045 = vadd.f32 0.0, %v2044
      %v2046 = vpop.f32.mrf.mxu0
      %2047 = vmatprep.mubr.bf16.mxu0 0
      %2048 = vmatmul.mubr.bf16.gmra.mxu0 %v1969
      %v2049 = vpop.f32.mrf.mxu0
      %v2050 = vadd.f32 0.0, %v2049
      %v2051 = vpop.f32.mrf.mxu0
      %v2052 = vpop.f32.mrf.mxu0
      %v2053 = vadd.f32 0.0, %v2052
      %v2054 = vpop.f32.mrf.mxu0
      %2055 = vmatprep.mubr.bf16.mxu0 0
      %2056 = vmatmul.mubr.bf16.gmra.mxu0 %v1972
      %v2057 = vpop.f32.mrf.mxu0
      %v2058 = vadd.f32 0.0, %v2057
      %v2059 = vpop.f32.mrf.mxu0
      %v2060 = vpop.f32.mrf.mxu0
      %v2061 = vadd.f32 0.0, %v2060
      %v2062 = vpop.f32.mrf.mxu0
      %2063 = vmatprep.mubr.bf16.mxu0 0
      %2064 = vmatmul.mubr.bf16.gmra.mxu0 %v1975
      %v2065 = vpop.f32.mrf.mxu0
      %v2066 = vadd.f32 0.0, %v2065
      %v2067 = vpop.f32.mrf.mxu0
      %v2068 = vpop.f32.mrf.mxu0
      %v2069 = vadd.f32 0.0, %v2068
      %v2070 = vpop.f32.mrf.mxu0
      %2071 = vmatprep.mubr.bf16.mxu0 0
      %2072 = vmatmul.mubr.bf16.gmra.mxu0 %v1978
      %v2073 = vpop.f32.mrf.mxu0
      %v2074 = vadd.f32 0.0, %v2073
      %v2075 = vpop.f32.mrf.mxu0
      %v2076 = vpop.f32.mrf.mxu0
      %v2077 = vpop.f32.mrf.mxu0
      %2078 = vdwg.mxu0
      %v2079 = vadd.f32 %v1867, %v2018
      %v2080 = vadd.f32 %v1868, %v2021
      %v2081 = vadd.f32 %v1869, %v2026
      %v2082 = vadd.f32 %v1870, %v2029
      %v2083 = vadd.f32 %v1871, %v2034
      %v2084 = vadd.f32 %v1872, %v2037
      %v2085 = vadd.f32 %v1873, %v2042
      %v2086 = vadd.f32 %v1874, %v2045
      %v2087 = vadd.f32 %v1875, %v2050
      %v2088 = vadd.f32 %v1876, %v2053
      %v2089 = vadd.f32 %v1877, %v2058
      %v2090 = vadd.f32 %v1878, %v2061
      %v2091 = vadd.f32 %v1879, %v2066
      %v2092 = vadd.f32 %v1880, %v2069
      %v2093 = vadd.f32 %v1881, %v2074
      %2094 = vst.msk [vmem:[#allocation4] sm:$0xff] %vm900, %v2079
      %2095 = vst.msk [vmem:[#allocation4 + $0x8] sm:$0xff] %vm900, %v2080
      %2096 = vst.msk [vmem:[#allocation4 + $0x10] sm:$0xff] %vm900, %v2081
      %2097 = vst.msk [vmem:[#allocation4 + $0x18] sm:$0xff] %vm900, %v2082
      %2098 = vst.msk [vmem:[#allocation4 + $0x20] sm:$0xff] %vm900, %v2083
      %2099 = vst.msk [vmem:[#allocation4 + $0x28] sm:$0xff] %vm900, %v2084
      %2100 = vst.msk [vmem:[#allocation4 + $0x30] sm:$0xff] %vm900, %v2085
      %2101 = vst.msk [vmem:[#allocation4 + $0x38] sm:$0xff] %vm900, %v2086
      %2102 = vst.msk [vmem:[#allocation4 + $0x40] sm:$0xff] %vm900, %v2087
      %2103 = vst.msk [vmem:[#allocation4 + $0x48] sm:$0xff] %vm900, %v2088
      %2104 = vst.msk [vmem:[#allocation4 + $0x50] sm:$0xff] %vm900, %v2089
      %2105 = vst.msk [vmem:[#allocation4 + $0x58] sm:$0xff] %vm900, %v2090
      %2106 = vst.msk [vmem:[#allocation4 + $0x60] sm:$0xff] %vm900, %v2091
      %2107 = vst.msk [vmem:[#allocation4 + $0x68] sm:$0xff] %vm900, %v2092
      %2108 = vst.msk [vmem:[#allocation4 + $0x70] sm:$0xff] %vm900, %v2093
      %v2109 = vld [vmem:[#allocation4] sm:$0xff]
      %v2110 = vld [vmem:[#allocation4 + $0x8] sm:$0xff]
      %v2111 = vld [vmem:[#allocation4 + $0x10] sm:$0xff]
      %v2112 = vld [vmem:[#allocation4 + $0x18] sm:$0xff]
      %v2113 = vld [vmem:[#allocation4 + $0x20] sm:$0xff]
      %v2114 = vld [vmem:[#allocation4 + $0x28] sm:$0xff]
      %v2115 = vld [vmem:[#allocation4 + $0x30] sm:$0xff]
      %v2116 = vld [vmem:[#allocation4 + $0x38] sm:$0xff]
      %v2117 = vld [vmem:[#allocation4 + $0x40] sm:$0xff]
      %v2118 = vld [vmem:[#allocation4 + $0x48] sm:$0xff]
      %v2119 = vld [vmem:[#allocation4 + $0x50] sm:$0xff]
      %v2120 = vld [vmem:[#allocation4 + $0x58] sm:$0xff]
      %v2121 = vld [vmem:[#allocation4 + $0x60] sm:$0xff]
      %v2122 = vld [vmem:[#allocation4 + $0x68] sm:$0xff]
      %v2123 = vld [vmem:[#allocation4 + $0x70] sm:$0xff]
      %v2124 = vld [vmem:[#allocation3 + $0x8] sm:$0xf]
      %v2125 = vld [vmem:[#allocation3 + $0xc] sm:$0xf]
      %v2126 = vld [vmem:[#allocation3 + $0x10] sm:$0xf]
      %v2127 = vld [vmem:[#allocation3 + $0x14] sm:$0xf]
      %v2128 = vld [vmem:[#allocation3 + $0x18] sm:$0xf]
      %v2129 = vld [vmem:[#allocation3 + $0x1c] sm:$0xf]
      %v2130 = vld [vmem:[#allocation3 + $0x20] sm:$0xf]
      %v2131 = vld [vmem:[#allocation3 + $0x24] sm:$0xf]
      %v2132 = vld [vmem:[#allocation3 + $0x28] sm:$0xf]
      %v2133 = vld [vmem:[#allocation3 + $0x2c] sm:$0xf]
      %v2134 = vld [vmem:[#allocation3 + $0x30] sm:$0xf]
      %v2135 = vld [vmem:[#allocation3 + $0x34] sm:$0xf]
      %v2136 = vld [vmem:[#allocation3 + $0x38] sm:$0xf]
      %v2137 = vld [vmem:[#allocation3 + $0x3c] sm:$0xf]
      %v2138 = vld [vmem:[#allocation3 + $0x40] sm:$0xf]
      %s2139 = scalar_lea.vmem %s480, 6
      %v2140 = vld [vmem:[%s2139] sm:$0x3]
      %v2156 = vunpack.c.l.b16 %v2124
      %v2157 = vunpack.c.l.b16 %v2125
      %v2158 = vunpack.c.l.b16 %v2126
      %v2159 = vunpack.c.l.b16 %v2127
      %v2160 = vunpack.c.l.b16 %v2128
      %v2161 = vunpack.c.l.b16 %v2129
      %v2162 = vunpack.c.l.b16 %v2130
      %v2163 = vunpack.c.l.b16 %v2131
      %v2164 = vunpack.c.l.b16 %v2132
      %v2165 = vunpack.c.l.b16 %v2133
      %v2166 = vunpack.c.l.b16 %v2134
      %v2167 = vunpack.c.l.b16 %v2135
      %v2168 = vunpack.c.l.b16 %v2136
      %v2169 = vunpack.c.l.b16 %v2137
      %v2170 = vunpack.c.l.b16 %v2138
      %v2171 = vpack.c.b16 %v2157, %v2156
      %v2172 = vpack.c.b16 %v2159, %v2158
      %v2173 = vpack.c.b16 %v2161, %v2160
      %v2174 = vpack.c.b16 %v2163, %v2162
      %v2175 = vpack.c.b16 %v2165, %v2164
      %v2176 = vpack.c.b16 %v2167, %v2166
      %v2177 = vpack.c.b16 %v2169, %v2168
      %v2178 = vpack.c.b16 %v2170, %v2170
      %v2180 = vsel %vm1437, %v2171, 0
      %v2183 = vsel %vm1437, %v2172, 0
      %v2186 = vsel %vm1437, %v2173, 0
      %v2189 = vsel %vm1437, %v2174, 0
      %v2192 = vsel %vm1437, %v2175, 0
      %v2195 = vsel %vm1437, %v2176, 0
      %v2198 = vsel %vm1437, %v2177, 0
      %v2201 = vsel %vm1437, %v2178, 0
      %v2204 = vsel %vm1462, %v2140, 0
      %2206 = vmatprep.subr.bf16.mxu0 0
      %2207 = vmatpush1.bf16.msra.mxu0 0
      %2208 = vmatprep.subr.bf16.mxu0 0
      %2209 = vmatpush1.bf16.msra.mxu0 0
      %2210 = vmatprep.subr.bf16.mxu0 0
      %2211 = vmatpush1.bf16.msra.mxu0 0
      %2212 = vmatprep.subr.bf16.mxu0 0
      %2213 = vmatpush1.bf16.msra.mxu0 0
      %2214 = vmatprep.subr.bf16.mxu0 0
      %2215 = vmatpush1.bf16.msra.mxu0 0
      %2216 = vmatprep.subr.bf16.mxu0 0
      %2217 = vmatpush1.bf16.msra.mxu0 0
      %2218 = vmatprep.subr.bf16.mxu0 0
      %2219 = vmatpush1.bf16.msra.mxu0 0
      %2220 = vmatprep.subr.bf16.mxu0 0
      %2221 = vmatpush1.bf16.msra.mxu0 %v2204
      %2222 = vmatprep.subr.bf16.mxu0 0
      %2223 = vmatpush2.bf16.msra.mxu0 0
      %2224 = vmatprep.subr.bf16.mxu0 0
      %2225 = vmatpush2.bf16.msra.mxu0 0
      %2226 = vmatprep.subr.bf16.mxu0 0
      %2227 = vmatpush2.bf16.msra.mxu0 0
      %2228 = vmatprep.subr.bf16.mxu0 0
      %2229 = vmatpush2.bf16.msra.mxu0 0
      %2230 = vmatprep.subr.bf16.mxu0 0
      %2231 = vmatpush2.bf16.msra.mxu0 0
      %2232 = vmatprep.subr.bf16.mxu0 0
      %2233 = vmatpush2.bf16.msra.mxu0 0
      %2234 = vmatprep.subr.bf16.mxu0 0
      %2235 = vmatpush2.bf16.msra.mxu0 0
      %2236 = vmatprep.subr.bf16.mxu0 0
      %2237 = vmatpush2.bf16.msra.mxu0 0
      %2238 = vmatprep.mubr.bf16.mxu0 0
      %2239 = vmatmul.mubr.bf16.gmra.mxu0 %v2180
      %v2240 = vpop.f32.mrf.mxu0
      %v2241 = vadd.f32 0.0, %v2240
      %v2242 = vpop.f32.mrf.mxu0
      %v2243 = vpop.f32.mrf.mxu0
      %v2244 = vadd.f32 0.0, %v2243
      %v2245 = vpop.f32.mrf.mxu0
      %2246 = vmatprep.mubr.bf16.mxu0 0
      %2247 = vmatmul.mubr.bf16.gmra.mxu0 %v2183
      %v2248 = vpop.f32.mrf.mxu0
      %v2249 = vadd.f32 0.0, %v2248
      %v2250 = vpop.f32.mrf.mxu0
      %v2251 = vpop.f32.mrf.mxu0
      %v2252 = vadd.f32 0.0, %v2251
      %v2253 = vpop.f32.mrf.mxu0
      %2254 = vmatprep.mubr.bf16.mxu0 0
      %2255 = vmatmul.mubr.bf16.gmra.mxu0 %v2186
      %v2256 = vpop.f32.mrf.mxu0
      %v2257 = vadd.f32 0.0, %v2256
      %v2258 = vpop.f32.mrf.mxu0
      %v2259 = vpop.f32.mrf.mxu0
      %v2260 = vadd.f32 0.0, %v2259
      %v2261 = vpop.f32.mrf.mxu0
      %2262 = vmatprep.mubr.bf16.mxu0 0
      %2263 = vmatmul.mubr.bf16.gmra.mxu0 %v2189
      %v2264 = vpop.f32.mrf.mxu0
      %v2265 = vadd.f32 0.0, %v2264
      %v2266 = vpop.f32.mrf.mxu0
      %v2267 = vpop.f32.mrf.mxu0
      %v2268 = vadd.f32 0.0, %v2267
      %v2269 = vpop.f32.mrf.mxu0
      %2270 = vmatprep.mubr.bf16.mxu0 0
      %2271 = vmatmul.mubr.bf16.gmra.mxu0 %v2192
      %v2272 = vpop.f32.mrf.mxu0
      %v2273 = vadd.f32 0.0, %v2272
      %v2274 = vpop.f32.mrf.mxu0
      %v2275 = vpop.f32.mrf.mxu0
      %v2276 = vadd.f32 0.0, %v2275
      %v2277 = vpop.f32.mrf.mxu0
      %2278 = vmatprep.mubr.bf16.mxu0 0
      %2279 = vmatmul.mubr.bf16.gmra.mxu0 %v2195
      %v2280 = vpop.f32.mrf.mxu0
      %v2281 = vadd.f32 0.0, %v2280
      %v2282 = vpop.f32.mrf.mxu0
      %v2283 = vpop.f32.mrf.mxu0
      %v2284 = vadd.f32 0.0, %v2283
      %v2285 = vpop.f32.mrf.mxu0
      %2286 = vmatprep.mubr.bf16.mxu0 0
      %2287 = vmatmul.mubr.bf16.gmra.mxu0 %v2198
      %v2288 = vpop.f32.mrf.mxu0
      %v2289 = vadd.f32 0.0, %v2288
      %v2290 = vpop.f32.mrf.mxu0
      %v2291 = vpop.f32.mrf.mxu0
      %v2292 = vadd.f32 0.0, %v2291
      %v2293 = vpop.f32.mrf.mxu0
      %2294 = vmatprep.mubr.bf16.mxu0 0
      %2295 = vmatmul.mubr.bf16.gmra.mxu0 %v2201
      %v2296 = vpop.f32.mrf.mxu0
      %v2297 = vadd.f32 0.0, %v2296
      %v2298 = vpop.f32.mrf.mxu0
      %v2299 = vpop.f32.mrf.mxu0
      %v2300 = vpop.f32.mrf.mxu0
      %2301 = vdwg.mxu0
      %v2302 = vadd.f32 %v2109, %v2241
      %v2303 = vadd.f32 %v2110, %v2244
      %v2304 = vadd.f32 %v2111, %v2249
      %v2305 = vadd.f32 %v2112, %v2252
      %v2306 = vadd.f32 %v2113, %v2257
      %v2307 = vadd.f32 %v2114, %v2260
      %v2308 = vadd.f32 %v2115, %v2265
      %v2309 = vadd.f32 %v2116, %v2268
      %v2310 = vadd.f32 %v2117, %v2273
      %v2311 = vadd.f32 %v2118, %v2276
      %v2312 = vadd.f32 %v2119, %v2281
      %v2313 = vadd.f32 %v2120, %v2284
      %v2314 = vadd.f32 %v2121, %v2289
      %v2315 = vadd.f32 %v2122, %v2292
      %v2316 = vadd.f32 %v2123, %v2297
      %2317 = vst.msk [vmem:[#allocation4] sm:$0xff] %vm900, %v2302
      %2318 = vst.msk [vmem:[#allocation4 + $0x8] sm:$0xff] %vm900, %v2303
      %2319 = vst.msk [vmem:[#allocation4 + $0x10] sm:$0xff] %vm900, %v2304
      %2320 = vst.msk [vmem:[#allocation4 + $0x18] sm:$0xff] %vm900, %v2305
      %2321 = vst.msk [vmem:[#allocation4 + $0x20] sm:$0xff] %vm900, %v2306
      %2322 = vst.msk [vmem:[#allocation4 + $0x28] sm:$0xff] %vm900, %v2307
      %2323 = vst.msk [vmem:[#allocation4 + $0x30] sm:$0xff] %vm900, %v2308
      %2324 = vst.msk [vmem:[#allocation4 + $0x38] sm:$0xff] %vm900, %v2309
      %2325 = vst.msk [vmem:[#allocation4 + $0x40] sm:$0xff] %vm900, %v2310
      %2326 = vst.msk [vmem:[#allocation4 + $0x48] sm:$0xff] %vm900, %v2311
      %2327 = vst.msk [vmem:[#allocation4 + $0x50] sm:$0xff] %vm900, %v2312
      %2328 = vst.msk [vmem:[#allocation4 + $0x58] sm:$0xff] %vm900, %v2313
      %2329 = vst.msk [vmem:[#allocation4 + $0x60] sm:$0xff] %vm900, %v2314
      %2330 = vst.msk [vmem:[#allocation4 + $0x68] sm:$0xff] %vm900, %v2315
      %2331 = vst.msk [vmem:[#allocation4 + $0x70] sm:$0xff] %vm900, %v2316
      %v2332 = vld [vmem:[#allocation4] sm:$0xff]
      %v2333 = vld [vmem:[#allocation4 + $0x8] sm:$0xff]
      %v2334 = vld [vmem:[#allocation4 + $0x10] sm:$0xff]
      %v2335 = vld [vmem:[#allocation4 + $0x18] sm:$0xff]
      %v2336 = vld [vmem:[#allocation4 + $0x20] sm:$0xff]
      %v2337 = vld [vmem:[#allocation4 + $0x28] sm:$0xff]
      %v2338 = vld [vmem:[#allocation4 + $0x30] sm:$0xff]
      %v2339 = vld [vmem:[#allocation4 + $0x38] sm:$0xff]
      %v2340 = vld [vmem:[#allocation4 + $0x40] sm:$0xff]
      %v2341 = vld [vmem:[#allocation4 + $0x48] sm:$0xff]
      %v2342 = vld [vmem:[#allocation4 + $0x50] sm:$0xff]
      %v2343 = vld [vmem:[#allocation4 + $0x58] sm:$0xff]
      %v2344 = vld [vmem:[#allocation4 + $0x60] sm:$0xff]
      %v2345 = vld [vmem:[#allocation4 + $0x68] sm:$0xff]
      %v2346 = vld [vmem:[#allocation4 + $0x70] sm:$0xff]
      %v2347 = vld [vmem:[#allocation3 + $0x8] sm:$0xf]
      %v2348 = vld [vmem:[#allocation3 + $0xc] sm:$0xf]
      %v2349 = vld [vmem:[#allocation3 + $0x10] sm:$0xf]
      %v2350 = vld [vmem:[#allocation3 + $0x14] sm:$0xf]
      %v2351 = vld [vmem:[#allocation3 + $0x18] sm:$0xf]
      %v2352 = vld [vmem:[#allocation3 + $0x1c] sm:$0xf]
      %v2353 = vld [vmem:[#allocation3 + $0x20] sm:$0xf]
      %v2354 = vld [vmem:[#allocation3 + $0x24] sm:$0xf]
      %v2355 = vld [vmem:[#allocation3 + $0x28] sm:$0xf]
      %v2356 = vld [vmem:[#allocation3 + $0x2c] sm:$0xf]
      %v2357 = vld [vmem:[#allocation3 + $0x30] sm:$0xf]
      %v2358 = vld [vmem:[#allocation3 + $0x34] sm:$0xf]
      %v2359 = vld [vmem:[#allocation3 + $0x38] sm:$0xf]
      %v2360 = vld [vmem:[#allocation3 + $0x3c] sm:$0xf]
      %v2361 = vld [vmem:[#allocation3 + $0x40] sm:$0xf]
      %v2362 = vld [vmem:[#allocation3 + $0x44] sm:$0x1]
      %s2363 = scalar_lea.vmem %s480, 8
      %v2364 = vld [vmem:[%s2363] sm:$0x3]
      %v2381 = vunpack.c.l.b16 %v2347
      %v2382 = vunpack.c.l.b16 %v2348
      %v2383 = vunpack.c.l.b16 %v2349
      %v2384 = vunpack.c.l.b16 %v2350
      %v2385 = vunpack.c.l.b16 %v2351
      %v2386 = vunpack.c.l.b16 %v2352
      %v2387 = vunpack.c.l.b16 %v2353
      %v2388 = vunpack.c.l.b16 %v2354
      %v2389 = vunpack.c.l.b16 %v2355
      %v2390 = vunpack.c.l.b16 %v2356
      %v2391 = vunpack.c.l.b16 %v2357
      %v2392 = vunpack.c.l.b16 %v2358
      %v2393 = vunpack.c.l.b16 %v2359
      %v2394 = vunpack.c.l.b16 %v2360
      %v2395 = vunpack.c.l.b16 %v2361
      %v2396 = vunpack.c.l.b16 %v2362
      %v2397 = vpack.c.b16 %v2382, %v2381
      %v2398 = vpack.c.b16 %v2384, %v2383
      %v2399 = vpack.c.b16 %v2386, %v2385
      %v2400 = vpack.c.b16 %v2388, %v2387
      %v2401 = vpack.c.b16 %v2390, %v2389
      %v2402 = vpack.c.b16 %v2392, %v2391
      %v2403 = vpack.c.b16 %v2394, %v2393
      %v2404 = vpack.c.b16 %v2396, %v2395
      %v2406 = vshrl.u32 %v2397, 16
      %v2408 = vshll.u32 %v2397, 16
      %v2410 = vrot.slane %v2408, 1
      %v2411 = vor.u32 %v2406, %v2410
      %v2413 = vshll.u32 %v2398, 16
      %v2415 = vrot.slane %v2413, 1
      %v2416 = vsel %vm1650, %v2411, %v2415
      %v2417 = vshrl.u32 %v2398, 16
      %v2419 = vor.u32 %v2417, %v2415
      %v2421 = vshll.u32 %v2399, 16
      %v2423 = vrot.slane %v2421, 1
      %v2424 = vsel %vm1650, %v2419, %v2423
      %v2425 = vshrl.u32 %v2399, 16
      %v2427 = vor.u32 %v2425, %v2423
      %v2429 = vshll.u32 %v2400, 16
      %v2431 = vrot.slane %v2429, 1
      %v2432 = vsel %vm1650, %v2427, %v2431
      %v2433 = vshrl.u32 %v2400, 16
      %v2435 = vor.u32 %v2433, %v2431
      %v2437 = vshll.u32 %v2401, 16
      %v2439 = vrot.slane %v2437, 1
      %v2440 = vsel %vm1650, %v2435, %v2439
      %v2441 = vshrl.u32 %v2401, 16
      %v2443 = vor.u32 %v2441, %v2439
      %v2445 = vshll.u32 %v2402, 16
      %v2447 = vrot.slane %v2445, 1
      %v2448 = vsel %vm1650, %v2443, %v2447
      %v2449 = vshrl.u32 %v2402, 16
      %v2451 = vor.u32 %v2449, %v2447
      %v2453 = vshll.u32 %v2403, 16
      %v2455 = vrot.slane %v2453, 1
      %v2456 = vsel %vm1650, %v2451, %v2455
      %v2457 = vshrl.u32 %v2403, 16
      %v2459 = vor.u32 %v2457, %v2455
      %v2461 = vshll.u32 %v2404, 16
      %v2463 = vrot.slane %v2461, 1
      %v2464 = vsel %vm1650, %v2459, %v2463
      %v2465 = vshrl.u32 %v2404, 16
      %v2467 = vor.u32 %v2465, %v2463
      %v2469 = vsel %vm1437, %v2416, 0
      %v2472 = vsel %vm1437, %v2424, 0
      %v2475 = vsel %vm1437, %v2432, 0
      %v2478 = vsel %vm1437, %v2440, 0
      %v2481 = vsel %vm1437, %v2448, 0
      %v2484 = vsel %vm1437, %v2456, 0
      %v2487 = vsel %vm1437, %v2464, 0
      %v2490 = vsel %vm1437, %v2467, 0
      %v2493 = vsel %vm1462, %v2364, 0
      %2495 = vmatprep.subr.bf16.mxu0 0
      %2496 = vmatpush1.bf16.msra.mxu0 0
      %2497 = vmatprep.subr.bf16.mxu0 0
      %2498 = vmatpush1.bf16.msra.mxu0 0
      %2499 = vmatprep.subr.bf16.mxu0 0
      %2500 = vmatpush1.bf16.msra.mxu0 0
      %2501 = vmatprep.subr.bf16.mxu0 0
      %2502 = vmatpush1.bf16.msra.mxu0 0
      %2503 = vmatprep.subr.bf16.mxu0 0
      %2504 = vmatpush1.bf16.msra.mxu0 0
      %2505 = vmatprep.subr.bf16.mxu0 0
      %2506 = vmatpush1.bf16.msra.mxu0 0
      %2507 = vmatprep.subr.bf16.mxu0 0
      %2508 = vmatpush1.bf16.msra.mxu0 0
      %2509 = vmatprep.subr.bf16.mxu0 0
      %2510 = vmatpush1.bf16.msra.mxu0 %v2493
      %2511 = vmatprep.subr.bf16.mxu0 0
      %2512 = vmatpush2.bf16.msra.mxu0 0
      %2513 = vmatprep.subr.bf16.mxu0 0
      %2514 = vmatpush2.bf16.msra.mxu0 0
      %2515 = vmatprep.subr.bf16.mxu0 0
      %2516 = vmatpush2.bf16.msra.mxu0 0
      %2517 = vmatprep.subr.bf16.mxu0 0
      %2518 = vmatpush2.bf16.msra.mxu0 0
      %2519 = vmatprep.subr.bf16.mxu0 0
      %2520 = vmatpush2.bf16.msra.mxu0 0
      %2521 = vmatprep.subr.bf16.mxu0 0
      %2522 = vmatpush2.bf16.msra.mxu0 0
      %2523 = vmatprep.subr.bf16.mxu0 0
      %2524 = vmatpush2.bf16.msra.mxu0 0
      %2525 = vmatprep.subr.bf16.mxu0 0
      %2526 = vmatpush2.bf16.msra.mxu0 0
      %2527 = vmatprep.mubr.bf16.mxu0 0
      %2528 = vmatmul.mubr.bf16.gmra.mxu0 %v2469
      %v2529 = vpop.f32.mrf.mxu0
      %v2530 = vadd.f32 0.0, %v2529
      %v2531 = vpop.f32.mrf.mxu0
      %v2532 = vpop.f32.mrf.mxu0
      %v2533 = vadd.f32 0.0, %v2532
      %v2534 = vpop.f32.mrf.mxu0
      %2535 = vmatprep.mubr.bf16.mxu0 0
      %2536 = vmatmul.mubr.bf16.gmra.mxu0 %v2472
      %v2537 = vpop.f32.mrf.mxu0
      %v2538 = vadd.f32 0.0, %v2537
      %v2539 = vpop.f32.mrf.mxu0
      %v2540 = vpop.f32.mrf.mxu0
      %v2541 = vadd.f32 0.0, %v2540
      %v2542 = vpop.f32.mrf.mxu0
      %2543 = vmatprep.mubr.bf16.mxu0 0
      %2544 = vmatmul.mubr.bf16.gmra.mxu0 %v2475
      %v2545 = vpop.f32.mrf.mxu0
      %v2546 = vadd.f32 0.0, %v2545
      %v2547 = vpop.f32.mrf.mxu0
      %v2548 = vpop.f32.mrf.mxu0
      %v2549 = vadd.f32 0.0, %v2548
      %v2550 = vpop.f32.mrf.mxu0
      %2551 = vmatprep.mubr.bf16.mxu0 0
      %2552 = vmatmul.mubr.bf16.gmra.mxu0 %v2478
      %v2553 = vpop.f32.mrf.mxu0
      %v2554 = vadd.f32 0.0, %v2553
      %v2555 = vpop.f32.mrf.mxu0
      %v2556 = vpop.f32.mrf.mxu0
      %v2557 = vadd.f32 0.0, %v2556
      %v2558 = vpop.f32.mrf.mxu0
      %2559 = vmatprep.mubr.bf16.mxu0 0
      %2560 = vmatmul.mubr.bf16.gmra.mxu0 %v2481
      %v2561 = vpop.f32.mrf.mxu0
      %v2562 = vadd.f32 0.0, %v2561
      %v2563 = vpop.f32.mrf.mxu0
      %v2564 = vpop.f32.mrf.mxu0
      %v2565 = vadd.f32 0.0, %v2564
      %v2566 = vpop.f32.mrf.mxu0
      %2567 = vmatprep.mubr.bf16.mxu0 0
      %2568 = vmatmul.mubr.bf16.gmra.mxu0 %v2484
      %v2569 = vpop.f32.mrf.mxu0
      %v2570 = vadd.f32 0.0, %v2569
      %v2571 = vpop.f32.mrf.mxu0
      %v2572 = vpop.f32.mrf.mxu0
      %v2573 = vadd.f32 0.0, %v2572
      %v2574 = vpop.f32.mrf.mxu0
      %2575 = vmatprep.mubr.bf16.mxu0 0
      %2576 = vmatmul.mubr.bf16.gmra.mxu0 %v2487
      %v2577 = vpop.f32.mrf.mxu0
      %v2578 = vadd.f32 0.0, %v2577
      %v2579 = vpop.f32.mrf.mxu0
      %v2580 = vpop.f32.mrf.mxu0
      %v2581 = vadd.f32 0.0, %v2580
      %v2582 = vpop.f32.mrf.mxu0
      %2583 = vmatprep.mubr.bf16.mxu0 0
      %2584 = vmatmul.mubr.bf16.gmra.mxu0 %v2490
      %v2585 = vpop.f32.mrf.mxu0
      %v2586 = vadd.f32 0.0, %v2585
      %v2587 = vpop.f32.mrf.mxu0
      %v2588 = vpop.f32.mrf.mxu0
      %v2589 = vpop.f32.mrf.mxu0
      %2590 = vdwg.mxu0
      %v2591 = vadd.f32 %v2332, %v2530
      %v2592 = vadd.f32 %v2333, %v2533
      %v2593 = vadd.f32 %v2334, %v2538
      %v2594 = vadd.f32 %v2335, %v2541
      %v2595 = vadd.f32 %v2336, %v2546
      %v2596 = vadd.f32 %v2337, %v2549
      %v2597 = vadd.f32 %v2338, %v2554
      %v2598 = vadd.f32 %v2339, %v2557
      %v2599 = vadd.f32 %v2340, %v2562
      %v2600 = vadd.f32 %v2341, %v2565
      %v2601 = vadd.f32 %v2342, %v2570
      %v2602 = vadd.f32 %v2343, %v2573
      %v2603 = vadd.f32 %v2344, %v2578
      %v2604 = vadd.f32 %v2345, %v2581
      %v2605 = vadd.f32 %v2346, %v2586
      %2606 = vst.msk [vmem:[#allocation4] sm:$0xff] %vm900, %v2591
      %2607 = vst.msk [vmem:[#allocation4 + $0x8] sm:$0xff] %vm900, %v2592
      %2608 = vst.msk [vmem:[#allocation4 + $0x10] sm:$0xff] %vm900, %v2593
      %2609 = vst.msk [vmem:[#allocation4 + $0x18] sm:$0xff] %vm900, %v2594
      %2610 = vst.msk [vmem:[#allocation4 + $0x20] sm:$0xff] %vm900, %v2595
      %2611 = vst.msk [vmem:[#allocation4 + $0x28] sm:$0xff] %vm900, %v2596
      %2612 = vst.msk [vmem:[#allocation4 + $0x30] sm:$0xff] %vm900, %v2597
      %2613 = vst.msk [vmem:[#allocation4 + $0x38] sm:$0xff] %vm900, %v2598
      %2614 = vst.msk [vmem:[#allocation4 + $0x40] sm:$0xff] %vm900, %v2599
      %2615 = vst.msk [vmem:[#allocation4 + $0x48] sm:$0xff] %vm900, %v2600
      %2616 = vst.msk [vmem:[#allocation4 + $0x50] sm:$0xff] %vm900, %v2601
      %2617 = vst.msk [vmem:[#allocation4 + $0x58] sm:$0xff] %vm900, %v2602
      %2618 = vst.msk [vmem:[#allocation4 + $0x60] sm:$0xff] %vm900, %v2603
      %2619 = vst.msk [vmem:[#allocation4 + $0x68] sm:$0xff] %vm900, %v2604
      %2620 = vst.msk [vmem:[#allocation4 + $0x70] sm:$0xff] %vm900, %v2605
      %v2621 = vld [vmem:[#allocation4] sm:$0xff]
      %v2622 = vld [vmem:[#allocation4 + $0x8] sm:$0xff]
      %v2623 = vld [vmem:[#allocation4 + $0x10] sm:$0xff]
      %v2624 = vld [vmem:[#allocation4 + $0x18] sm:$0xff]
      %v2625 = vld [vmem:[#allocation4 + $0x20] sm:$0xff]
      %v2626 = vld [vmem:[#allocation4 + $0x28] sm:$0xff]
      %v2627 = vld [vmem:[#allocation4 + $0x30] sm:$0xff]
      %v2628 = vld [vmem:[#allocation4 + $0x38] sm:$0xff]
      %v2629 = vld [vmem:[#allocation4 + $0x40] sm:$0xff]
      %v2630 = vld [vmem:[#allocation4 + $0x48] sm:$0xff]
      %v2631 = vld [vmem:[#allocation4 + $0x50] sm:$0xff]
      %v2632 = vld [vmem:[#allocation4 + $0x58] sm:$0xff]
      %v2633 = vld [vmem:[#allocation4 + $0x60] sm:$0xff]
      %v2634 = vld [vmem:[#allocation4 + $0x68] sm:$0xff]
      %v2635 = vld [vmem:[#allocation4 + $0x70] sm:$0xff]
      %v2636 = vld [vmem:[#allocation3 + $0x8] sm:$0xe]
      %v2637 = vld [vmem:[#allocation3 + $0xc] sm:$0xf]
      %v2638 = vld [vmem:[#allocation3 + $0x10] sm:$0xf]
      %v2639 = vld [vmem:[#allocation3 + $0x14] sm:$0xf]
      %v2640 = vld [vmem:[#allocation3 + $0x18] sm:$0xf]
      %v2641 = vld [vmem:[#allocation3 + $0x1c] sm:$0xf]
      %v2642 = vld [vmem:[#allocation3 + $0x20] sm:$0xf]
      %v2643 = vld [vmem:[#allocation3 + $0x24] sm:$0xf]
      %v2644 = vld [vmem:[#allocation3 + $0x28] sm:$0xf]
      %v2645 = vld [vmem:[#allocation3 + $0x2c] sm:$0xf]
      %v2646 = vld [vmem:[#allocation3 + $0x30] sm:$0xf]
      %v2647 = vld [vmem:[#allocation3 + $0x34] sm:$0xf]
      %v2648 = vld [vmem:[#allocation3 + $0x38] sm:$0xf]
      %v2649 = vld [vmem:[#allocation3 + $0x3c] sm:$0xf]
      %v2650 = vld [vmem:[#allocation3 + $0x40] sm:$0xf]
      %v2651 = vld [vmem:[#allocation3 + $0x44] sm:$0x1]
      %s2652 = scalar_lea.vmem %s480, 10
      %v2653 = vld [vmem:[%s2652] sm:$0x3]
      %v2670 = vunpack.c.l.b16 %v2636
      %v2671 = vunpack.c.l.b16 %v2637
      %v2672 = vunpack.c.l.b16 %v2638
      %v2673 = vunpack.c.l.b16 %v2639
      %v2674 = vunpack.c.l.b16 %v2640
      %v2675 = vunpack.c.l.b16 %v2641
      %v2676 = vunpack.c.l.b16 %v2642
      %v2677 = vunpack.c.l.b16 %v2643
      %v2678 = vunpack.c.l.b16 %v2644
      %v2679 = vunpack.c.l.b16 %v2645
      %v2680 = vunpack.c.l.b16 %v2646
      %v2681 = vunpack.c.l.b16 %v2647
      %v2682 = vunpack.c.l.b16 %v2648
      %v2683 = vunpack.c.l.b16 %v2649
      %v2684 = vunpack.c.l.b16 %v2650
      %v2685 = vunpack.c.l.b16 %v2651
      %v2686 = vpack.c.b16 %v2671, %v2670
      %v2687 = vpack.c.b16 %v2673, %v2672
      %v2688 = vpack.c.b16 %v2675, %v2674
      %v2689 = vpack.c.b16 %v2677, %v2676
      %v2690 = vpack.c.b16 %v2679, %v2678
      %v2691 = vpack.c.b16 %v2681, %v2680
      %v2692 = vpack.c.b16 %v2683, %v2682
      %v2693 = vpack.c.b16 %v2685, %v2684
      %v2694 = vrot.slane %v2686, 1
      %v2695 = vrot.slane %v2687, 1
      %v2696 = vsel %vm1940, %v2694, %v2695
      %v2697 = vrot.slane %v2688, 1
      %v2698 = vsel %vm1940, %v2695, %v2697
      %v2699 = vrot.slane %v2689, 1
      %v2700 = vsel %vm1940, %v2697, %v2699
      %v2701 = vrot.slane %v2690, 1
      %v2702 = vsel %vm1940, %v2699, %v2701
      %v2703 = vrot.slane %v2691, 1
      %v2704 = vsel %vm1940, %v2701, %v2703
      %v2705 = vrot.slane %v2692, 1
      %v2706 = vsel %vm1940, %v2703, %v2705
      %v2707 = vrot.slane %v2693, 1
      %v2708 = vsel %vm1940, %v2705, %v2707
      %v2710 = vsel %vm1437, %v2696, 0
      %v2713 = vsel %vm1437, %v2698, 0
      %v2716 = vsel %vm1437, %v2700, 0
      %v2719 = vsel %vm1437, %v2702, 0
      %v2722 = vsel %vm1437, %v2704, 0
      %v2725 = vsel %vm1437, %v2706, 0
      %v2728 = vsel %vm1437, %v2708, 0
      %v2731 = vsel %vm1437, %v2707, 0
      %v2734 = vsel %vm1462, %v2653, 0
      %2736 = vmatprep.subr.bf16.mxu0 0
      %2737 = vmatpush1.bf16.msra.mxu0 0
      %2738 = vmatprep.subr.bf16.mxu0 0
      %2739 = vmatpush1.bf16.msra.mxu0 0
      %2740 = vmatprep.subr.bf16.mxu0 0
      %2741 = vmatpush1.bf16.msra.mxu0 0
      %2742 = vmatprep.subr.bf16.mxu0 0
      %2743 = vmatpush1.bf16.msra.mxu0 0
      %2744 = vmatprep.subr.bf16.mxu0 0
      %2745 = vmatpush1.bf16.msra.mxu0 0
      %2746 = vmatprep.subr.bf16.mxu0 0
      %2747 = vmatpush1.bf16.msra.mxu0 0
      %2748 = vmatprep.subr.bf16.mxu0 0
      %2749 = vmatpush1.bf16.msra.mxu0 0
      %2750 = vmatprep.subr.bf16.mxu0 0
      %2751 = vmatpush1.bf16.msra.mxu0 %v2734
      %2752 = vmatprep.subr.bf16.mxu0 0
      %2753 = vmatpush2.bf16.msra.mxu0 0
      %2754 = vmatprep.subr.bf16.mxu0 0
      %2755 = vmatpush2.bf16.msra.mxu0 0
      %2756 = vmatprep.subr.bf16.mxu0 0
      %2757 = vmatpush2.bf16.msra.mxu0 0
      %2758 = vmatprep.subr.bf16.mxu0 0
      %2759 = vmatpush2.bf16.msra.mxu0 0
      %2760 = vmatprep.subr.bf16.mxu0 0
      %2761 = vmatpush2.bf16.msra.mxu0 0
      %2762 = vmatprep.subr.bf16.mxu0 0
      %2763 = vmatpush2.bf16.msra.mxu0 0
      %2764 = vmatprep.subr.bf16.mxu0 0
      %2765 = vmatpush2.bf16.msra.mxu0 0
      %2766 = vmatprep.subr.bf16.mxu0 0
      %2767 = vmatpush2.bf16.msra.mxu0 0
      %2768 = vmatprep.mubr.bf16.mxu0 0
      %2769 = vmatmul.mubr.bf16.gmra.mxu0 %v2710
      %v2770 = vpop.f32.mrf.mxu0
      %v2771 = vadd.f32 0.0, %v2770
      %v2772 = vpop.f32.mrf.mxu0
      %v2773 = vpop.f32.mrf.mxu0
      %v2774 = vadd.f32 0.0, %v2773
      %v2775 = vpop.f32.mrf.mxu0
      %2776 = vmatprep.mubr.bf16.mxu0 0
      %2777 = vmatmul.mubr.bf16.gmra.mxu0 %v2713
      %v2778 = vpop.f32.mrf.mxu0
      %v2779 = vadd.f32 0.0, %v2778
      %v2780 = vpop.f32.mrf.mxu0
      %v2781 = vpop.f32.mrf.mxu0
      %v2782 = vadd.f32 0.0, %v2781
      %v2783 = vpop.f32.mrf.mxu0
      %2784 = vmatprep.mubr.bf16.mxu0 0
      %2785 = vmatmul.mubr.bf16.gmra.mxu0 %v2716
      %v2786 = vpop.f32.mrf.mxu0
      %v2787 = vadd.f32 0.0, %v2786
      %v2788 = vpop.f32.mrf.mxu0
      %v2789 = vpop.f32.mrf.mxu0
      %v2790 = vadd.f32 0.0, %v2789
      %v2791 = vpop.f32.mrf.mxu0
      %2792 = vmatprep.mubr.bf16.mxu0 0
      %2793 = vmatmul.mubr.bf16.gmra.mxu0 %v2719
      %v2794 = vpop.f32.mrf.mxu0
      %v2795 = vadd.f32 0.0, %v2794
      %v2796 = vpop.f32.mrf.mxu0
      %v2797 = vpop.f32.mrf.mxu0
      %v2798 = vadd.f32 0.0, %v2797
      %v2799 = vpop.f32.mrf.mxu0
      %2800 = vmatprep.mubr.bf16.mxu0 0
      %2801 = vmatmul.mubr.bf16.gmra.mxu0 %v2722
      %v2802 = vpop.f32.mrf.mxu0
      %v2803 = vadd.f32 0.0, %v2802
      %v2804 = vpop.f32.mrf.mxu0
      %v2805 = vpop.f32.mrf.mxu0
      %v2806 = vadd.f32 0.0, %v2805
      %v2807 = vpop.f32.mrf.mxu0
      %2808 = vmatprep.mubr.bf16.mxu0 0
      %2809 = vmatmul.mubr.bf16.gmra.mxu0 %v2725
      %v2810 = vpop.f32.mrf.mxu0
      %v2811 = vadd.f32 0.0, %v2810
      %v2812 = vpop.f32.mrf.mxu0
      %v2813 = vpop.f32.mrf.mxu0
      %v2814 = vadd.f32 0.0, %v2813
      %v2815 = vpop.f32.mrf.mxu0
      %2816 = vmatprep.mubr.bf16.mxu0 0
      %2817 = vmatmul.mubr.bf16.gmra.mxu0 %v2728
      %v2818 = vpop.f32.mrf.mxu0
      %v2819 = vadd.f32 0.0, %v2818
      %v2820 = vpop.f32.mrf.mxu0
      %v2821 = vpop.f32.mrf.mxu0
      %v2822 = vadd.f32 0.0, %v2821
      %v2823 = vpop.f32.mrf.mxu0
      %2824 = vmatprep.mubr.bf16.mxu0 0
      %2825 = vmatmul.mubr.bf16.gmra.mxu0 %v2731
      %v2826 = vpop.f32.mrf.mxu0
      %v2827 = vadd.f32 0.0, %v2826
      %v2828 = vpop.f32.mrf.mxu0
      %v2829 = vpop.f32.mrf.mxu0
      %v2830 = vpop.f32.mrf.mxu0
      %2831 = vdwg.mxu0
      %v2832 = vadd.f32 %v2621, %v2771
      %v2833 = vadd.f32 %v2622, %v2774
      %v2834 = vadd.f32 %v2623, %v2779
      %v2835 = vadd.f32 %v2624, %v2782
      %v2836 = vadd.f32 %v2625, %v2787
      %v2837 = vadd.f32 %v2626, %v2790
      %v2838 = vadd.f32 %v2627, %v2795
      %v2839 = vadd.f32 %v2628, %v2798
      %v2840 = vadd.f32 %v2629, %v2803
      %v2841 = vadd.f32 %v2630, %v2806
      %v2842 = vadd.f32 %v2631, %v2811
      %v2843 = vadd.f32 %v2632, %v2814
      %v2844 = vadd.f32 %v2633, %v2819
      %v2845 = vadd.f32 %v2634, %v2822
      %v2846 = vadd.f32 %v2635, %v2827
      %2847 = vst.msk [vmem:[#allocation4] sm:$0xff] %vm900, %v2832
      %2848 = vst.msk [vmem:[#allocation4 + $0x8] sm:$0xff] %vm900, %v2833
      %2849 = vst.msk [vmem:[#allocation4 + $0x10] sm:$0xff] %vm900, %v2834
      %2850 = vst.msk [vmem:[#allocation4 + $0x18] sm:$0xff] %vm900, %v2835
      %2851 = vst.msk [vmem:[#allocation4 + $0x20] sm:$0xff] %vm900, %v2836
      %2852 = vst.msk [vmem:[#allocation4 + $0x28] sm:$0xff] %vm900, %v2837
      %2853 = vst.msk [vmem:[#allocation4 + $0x30] sm:$0xff] %vm900, %v2838
      %2854 = vst.msk [vmem:[#allocation4 + $0x38] sm:$0xff] %vm900, %v2839
      %2855 = vst.msk [vmem:[#allocation4 + $0x40] sm:$0xff] %vm900, %v2840
      %2856 = vst.msk [vmem:[#allocation4 + $0x48] sm:$0xff] %vm900, %v2841
      %2857 = vst.msk [vmem:[#allocation4 + $0x50] sm:$0xff] %vm900, %v2842
      %2858 = vst.msk [vmem:[#allocation4 + $0x58] sm:$0xff] %vm900, %v2843
      %2859 = vst.msk [vmem:[#allocation4 + $0x60] sm:$0xff] %vm900, %v2844
      %2860 = vst.msk [vmem:[#allocation4 + $0x68] sm:$0xff] %vm900, %v2845
      %2861 = vst.msk [vmem:[#allocation4 + $0x70] sm:$0xff] %vm900, %v2846
      %v2862 = vld [vmem:[#allocation4] sm:$0xff]
      %v2863 = vld [vmem:[#allocation4 + $0x8] sm:$0xff]
      %v2864 = vld [vmem:[#allocation4 + $0x10] sm:$0xff]
      %v2865 = vld [vmem:[#allocation4 + $0x18] sm:$0xff]
      %v2866 = vld [vmem:[#allocation4 + $0x20] sm:$0xff]
      %v2867 = vld [vmem:[#allocation4 + $0x28] sm:$0xff]
      %v2868 = vld [vmem:[#allocation4 + $0x30] sm:$0xff]
      %v2869 = vld [vmem:[#allocation4 + $0x38] sm:$0xff]
      %v2870 = vld [vmem:[#allocation4 + $0x40] sm:$0xff]
      %v2871 = vld [vmem:[#allocation4 + $0x48] sm:$0xff]
      %v2872 = vld [vmem:[#allocation4 + $0x50] sm:$0xff]
      %v2873 = vld [vmem:[#allocation4 + $0x58] sm:$0xff]
      %v2874 = vld [vmem:[#allocation4 + $0x60] sm:$0xff]
      %v2875 = vld [vmem:[#allocation4 + $0x68] sm:$0xff]
      %v2876 = vld [vmem:[#allocation4 + $0x70] sm:$0xff]
      %v2877 = vld [vmem:[#allocation3 + $0x10] sm:$0xf]
      %v2878 = vld [vmem:[#allocation3 + $0x14] sm:$0xf]
      %v2879 = vld [vmem:[#allocation3 + $0x18] sm:$0xf]
      %v2880 = vld [vmem:[#allocation3 + $0x1c] sm:$0xf]
      %v2881 = vld [vmem:[#allocation3 + $0x20] sm:$0xf]
      %v2882 = vld [vmem:[#allocation3 + $0x24] sm:$0xf]
      %v2883 = vld [vmem:[#allocation3 + $0x28] sm:$0xf]
      %v2884 = vld [vmem:[#allocation3 + $0x2c] sm:$0xf]
      %v2885 = vld [vmem:[#allocation3 + $0x30] sm:$0xf]
      %v2886 = vld [vmem:[#allocation3 + $0x34] sm:$0xf]
      %v2887 = vld [vmem:[#allocation3 + $0x38] sm:$0xf]
      %v2888 = vld [vmem:[#allocation3 + $0x3c] sm:$0xf]
      %v2889 = vld [vmem:[#allocation3 + $0x40] sm:$0xf]
      %v2890 = vld [vmem:[#allocation3 + $0x44] sm:$0xf]
      %v2891 = vld [vmem:[#allocation3 + $0x48] sm:$0xf]
      %s2892 = scalar_lea.vmem %s480, 12
      %v2893 = vld [vmem:[%s2892] sm:$0x3]
      %v2909 = vunpack.c.l.b16 %v2877
      %v2910 = vunpack.c.l.b16 %v2878
      %v2911 = vunpack.c.l.b16 %v2879
      %v2912 = vunpack.c.l.b16 %v2880
      %v2913 = vunpack.c.l.b16 %v2881
      %v2914 = vunpack.c.l.b16 %v2882
      %v2915 = vunpack.c.l.b16 %v2883
      %v2916 = vunpack.c.l.b16 %v2884
      %v2917 = vunpack.c.l.b16 %v2885
      %v2918 = vunpack.c.l.b16 %v2886
      %v2919 = vunpack.c.l.b16 %v2887
      %v2920 = vunpack.c.l.b16 %v2888
      %v2921 = vunpack.c.l.b16 %v2889
      %v2922 = vunpack.c.l.b16 %v2890
      %v2923 = vunpack.c.l.b16 %v2891
      %v2924 = vpack.c.b16 %v2910, %v2909
      %v2925 = vpack.c.b16 %v2912, %v2911
      %v2926 = vpack.c.b16 %v2914, %v2913
      %v2927 = vpack.c.b16 %v2916, %v2915
      %v2928 = vpack.c.b16 %v2918, %v2917
      %v2929 = vpack.c.b16 %v2920, %v2919
      %v2930 = vpack.c.b16 %v2922, %v2921
      %v2931 = vpack.c.b16 %v2923, %v2923
      %v2933 = vsel %vm1437, %v2924, 0
      %v2936 = vsel %vm1437, %v2925, 0
      %v2939 = vsel %vm1437, %v2926, 0
      %v2942 = vsel %vm1437, %v2927, 0
      %v2945 = vsel %vm1437, %v2928, 0
      %v2948 = vsel %vm1437, %v2929, 0
      %v2951 = vsel %vm1437, %v2930, 0
      %v2954 = vsel %vm1437, %v2931, 0
      %v2957 = vsel %vm1462, %v2893, 0
      %2959 = vmatprep.subr.bf16.mxu0 0
      %2960 = vmatpush1.bf16.msra.mxu0 0
      %2961 = vmatprep.subr.bf16.mxu0 0
      %2962 = vmatpush1.bf16.msra.mxu0 0
      %2963 = vmatprep.subr.bf16.mxu0 0
      %2964 = vmatpush1.bf16.msra.mxu0 0
      %2965 = vmatprep.subr.bf16.mxu0 0
      %2966 = vmatpush1.bf16.msra.mxu0 0
      %2967 = vmatprep.subr.bf16.mxu0 0
      %2968 = vmatpush1.bf16.msra.mxu0 0
      %2969 = vmatprep.subr.bf16.mxu0 0
      %2970 = vmatpush1.bf16.msra.mxu0 0
      %2971 = vmatprep.subr.bf16.mxu0 0
      %2972 = vmatpush1.bf16.msra.mxu0 0
      %2973 = vmatprep.subr.bf16.mxu0 0
      %2974 = vmatpush1.bf16.msra.mxu0 %v2957
      %2975 = vmatprep.subr.bf16.mxu0 0
      %2976 = vmatpush2.bf16.msra.mxu0 0
      %2977 = vmatprep.subr.bf16.mxu0 0
      %2978 = vmatpush2.bf16.msra.mxu0 0
      %2979 = vmatprep.subr.bf16.mxu0 0
      %2980 = vmatpush2.bf16.msra.mxu0 0
      %2981 = vmatprep.subr.bf16.mxu0 0
      %2982 = vmatpush2.bf16.msra.mxu0 0
      %2983 = vmatprep.subr.bf16.mxu0 0
      %2984 = vmatpush2.bf16.msra.mxu0 0
      %2985 = vmatprep.subr.bf16.mxu0 0
      %2986 = vmatpush2.bf16.msra.mxu0 0
      %2987 = vmatprep.subr.bf16.mxu0 0
      %2988 = vmatpush2.bf16.msra.mxu0 0
      %2989 = vmatprep.subr.bf16.mxu0 0
      %2990 = vmatpush2.bf16.msra.mxu0 0
      %2991 = vmatprep.mubr.bf16.mxu0 0
      %2992 = vmatmul.mubr.bf16.gmra.mxu0 %v2933
      %v2993 = vpop.f32.mrf.mxu0
      %v2994 = vadd.f32 0.0, %v2993
      %v2995 = vpop.f32.mrf.mxu0
      %v2996 = vpop.f32.mrf.mxu0
      %v2997 = vadd.f32 0.0, %v2996
      %v2998 = vpop.f32.mrf.mxu0
      %2999 = vmatprep.mubr.bf16.mxu0 0
      %3000 = vmatmul.mubr.bf16.gmra.mxu0 %v2936
      %v3001 = vpop.f32.mrf.mxu0
      %v3002 = vadd.f32 0.0, %v3001
      %v3003 = vpop.f32.mrf.mxu0
      %v3004 = vpop.f32.mrf.mxu0
      %v3005 = vadd.f32 0.0, %v3004
      %v3006 = vpop.f32.mrf.mxu0
      %3007 = vmatprep.mubr.bf16.mxu0 0
      %3008 = vmatmul.mubr.bf16.gmra.mxu0 %v2939
      %v3009 = vpop.f32.mrf.mxu0
      %v3010 = vadd.f32 0.0, %v3009
      %v3011 = vpop.f32.mrf.mxu0
      %v3012 = vpop.f32.mrf.mxu0
      %v3013 = vadd.f32 0.0, %v3012
      %v3014 = vpop.f32.mrf.mxu0
      %3015 = vmatprep.mubr.bf16.mxu0 0
      %3016 = vmatmul.mubr.bf16.gmra.mxu0 %v2942
      %v3017 = vpop.f32.mrf.mxu0
      %v3018 = vadd.f32 0.0, %v3017
      %v3019 = vpop.f32.mrf.mxu0
      %v3020 = vpop.f32.mrf.mxu0
      %v3021 = vadd.f32 0.0, %v3020
      %v3022 = vpop.f32.mrf.mxu0
      %3023 = vmatprep.mubr.bf16.mxu0 0
      %3024 = vmatmul.mubr.bf16.gmra.mxu0 %v2945
      %v3025 = vpop.f32.mrf.mxu0
      %v3026 = vadd.f32 0.0, %v3025
      %v3027 = vpop.f32.mrf.mxu0
      %v3028 = vpop.f32.mrf.mxu0
      %v3029 = vadd.f32 0.0, %v3028
      %v3030 = vpop.f32.mrf.mxu0
      %3031 = vmatprep.mubr.bf16.mxu0 0
      %3032 = vmatmul.mubr.bf16.gmra.mxu0 %v2948
      %v3033 = vpop.f32.mrf.mxu0
      %v3034 = vadd.f32 0.0, %v3033
      %v3035 = vpop.f32.mrf.mxu0
      %v3036 = vpop.f32.mrf.mxu0
      %v3037 = vadd.f32 0.0, %v3036
      %v3038 = vpop.f32.mrf.mxu0
      %3039 = vmatprep.mubr.bf16.mxu0 0
      %3040 = vmatmul.mubr.bf16.gmra.mxu0 %v2951
      %v3041 = vpop.f32.mrf.mxu0
      %v3042 = vadd.f32 0.0, %v3041
      %v3043 = vpop.f32.mrf.mxu0
      %v3044 = vpop.f32.mrf.mxu0
      %v3045 = vadd.f32 0.0, %v3044
      %v3046 = vpop.f32.mrf.mxu0
      %3047 = vmatprep.mubr.bf16.mxu0 0
      %3048 = vmatmul.mubr.bf16.gmra.mxu0 %v2954
      %v3049 = vpop.f32.mrf.mxu0
      %v3050 = vadd.f32 0.0, %v3049
      %v3051 = vpop.f32.mrf.mxu0
      %v3052 = vpop.f32.mrf.mxu0
      %v3053 = vpop.f32.mrf.mxu0
      %3054 = vdwg.mxu0
      %v3055 = vadd.f32 %v2862, %v2994
      %v3056 = vadd.f32 %v2863, %v2997
      %v3057 = vadd.f32 %v2864, %v3002
      %v3058 = vadd.f32 %v2865, %v3005
      %v3059 = vadd.f32 %v2866, %v3010
      %v3060 = vadd.f32 %v2867, %v3013
      %v3061 = vadd.f32 %v2868, %v3018
      %v3062 = vadd.f32 %v2869, %v3021
      %v3063 = vadd.f32 %v2870, %v3026
      %v3064 = vadd.f32 %v2871, %v3029
      %v3065 = vadd.f32 %v2872, %v3034
      %v3066 = vadd.f32 %v2873, %v3037
      %v3067 = vadd.f32 %v2874, %v3042
      %v3068 = vadd.f32 %v2875, %v3045
      %v3069 = vadd.f32 %v2876, %v3050
      %3070 = vst.msk [vmem:[#allocation4] sm:$0xff] %vm900, %v3055
      %3071 = vst.msk [vmem:[#allocation4 + $0x8] sm:$0xff] %vm900, %v3056
      %3072 = vst.msk [vmem:[#allocation4 + $0x10] sm:$0xff] %vm900, %v3057
      %3073 = vst.msk [vmem:[#allocation4 + $0x18] sm:$0xff] %vm900, %v3058
      %3074 = vst.msk [vmem:[#allocation4 + $0x20] sm:$0xff] %vm900, %v3059
      %3075 = vst.msk [vmem:[#allocation4 + $0x28] sm:$0xff] %vm900, %v3060
      %3076 = vst.msk [vmem:[#allocation4 + $0x30] sm:$0xff] %vm900, %v3061
      %3077 = vst.msk [vmem:[#allocation4 + $0x38] sm:$0xff] %vm900, %v3062
      %3078 = vst.msk [vmem:[#allocation4 + $0x40] sm:$0xff] %vm900, %v3063
      %3079 = vst.msk [vmem:[#allocation4 + $0x48] sm:$0xff] %vm900, %v3064
      %3080 = vst.msk [vmem:[#allocation4 + $0x50] sm:$0xff] %vm900, %v3065
      %3081 = vst.msk [vmem:[#allocation4 + $0x58] sm:$0xff] %vm900, %v3066
      %3082 = vst.msk [vmem:[#allocation4 + $0x60] sm:$0xff] %vm900, %v3067
      %3083 = vst.msk [vmem:[#allocation4 + $0x68] sm:$0xff] %vm900, %v3068
      %3084 = vst.msk [vmem:[#allocation4 + $0x70] sm:$0xff] %vm900, %v3069
      %v3085 = vld [vmem:[#allocation4] sm:$0xff]
      %v3086 = vld [vmem:[#allocation4 + $0x8] sm:$0xff]
      %v3087 = vld [vmem:[#allocation4 + $0x10] sm:$0xff]
      %v3088 = vld [vmem:[#allocation4 + $0x18] sm:$0xff]
      %v3089 = vld [vmem:[#allocation4 + $0x20] sm:$0xff]
      %v3090 = vld [vmem:[#allocation4 + $0x28] sm:$0xff]
      %v3091 = vld [vmem:[#allocation4 + $0x30] sm:$0xff]
      %v3092 = vld [vmem:[#allocation4 + $0x38] sm:$0xff]
      %v3093 = vld [vmem:[#allocation4 + $0x40] sm:$0xff]
      %v3094 = vld [vmem:[#allocation4 + $0x48] sm:$0xff]
      %v3095 = vld [vmem:[#allocation4 + $0x50] sm:$0xff]
      %v3096 = vld [vmem:[#allocation4 + $0x58] sm:$0xff]
      %v3097 = vld [vmem:[#allocation4 + $0x60] sm:$0xff]
      %v3098 = vld [vmem:[#allocation4 + $0x68] sm:$0xff]
      %v3099 = vld [vmem:[#allocation4 + $0x70] sm:$0xff]
      %v3100 = vld [vmem:[#allocation3 + $0x10] sm:$0xf]
      %v3101 = vld [vmem:[#allocation3 + $0x14] sm:$0xf]
      %v3102 = vld [vmem:[#allocation3 + $0x18] sm:$0xf]
      %v3103 = vld [vmem:[#allocation3 + $0x1c] sm:$0xf]
      %v3104 = vld [vmem:[#allocation3 + $0x20] sm:$0xf]
      %v3105 = vld [vmem:[#allocation3 + $0x24] sm:$0xf]
      %v3106 = vld [vmem:[#allocation3 + $0x28] sm:$0xf]
      %v3107 = vld [vmem:[#allocation3 + $0x2c] sm:$0xf]
      %v3108 = vld [vmem:[#allocation3 + $0x30] sm:$0xf]
      %v3109 = vld [vmem:[#allocation3 + $0x34] sm:$0xf]
      %v3110 = vld [vmem:[#allocation3 + $0x38] sm:$0xf]
      %v3111 = vld [vmem:[#allocation3 + $0x3c] sm:$0xf]
      %v3112 = vld [vmem:[#allocation3 + $0x40] sm:$0xf]
      %v3113 = vld [vmem:[#allocation3 + $0x44] sm:$0xf]
      %v3114 = vld [vmem:[#allocation3 + $0x48] sm:$0xf]
      %v3115 = vld [vmem:[#allocation3 + $0x4c] sm:$0x1]
      %s3116 = scalar_lea.vmem %s480, 14
      %v3117 = vld [vmem:[%s3116] sm:$0x3]
      %v3134 = vunpack.c.l.b16 %v3100
      %v3135 = vunpack.c.l.b16 %v3101
      %v3136 = vunpack.c.l.b16 %v3102
      %v3137 = vunpack.c.l.b16 %v3103
      %v3138 = vunpack.c.l.b16 %v3104
      %v3139 = vunpack.c.l.b16 %v3105
      %v3140 = vunpack.c.l.b16 %v3106
      %v3141 = vunpack.c.l.b16 %v3107
      %v3142 = vunpack.c.l.b16 %v3108
      %v3143 = vunpack.c.l.b16 %v3109
      %v3144 = vunpack.c.l.b16 %v3110
      %v3145 = vunpack.c.l.b16 %v3111
      %v3146 = vunpack.c.l.b16 %v3112
      %v3147 = vunpack.c.l.b16 %v3113
      %v3148 = vunpack.c.l.b16 %v3114
      %v3149 = vunpack.c.l.b16 %v3115
      %v3150 = vpack.c.b16 %v3135, %v3134
      %v3151 = vpack.c.b16 %v3137, %v3136
      %v3152 = vpack.c.b16 %v3139, %v3138
      %v3153 = vpack.c.b16 %v3141, %v3140
      %v3154 = vpack.c.b16 %v3143, %v3142
      %v3155 = vpack.c.b16 %v3145, %v3144
      %v3156 = vpack.c.b16 %v3147, %v3146
      %v3157 = vpack.c.b16 %v3149, %v3148
      %v3159 = vshrl.u32 %v3150, 16
      %v3161 = vshll.u32 %v3150, 16
      %v3163 = vrot.slane %v3161, 1
      %v3164 = vor.u32 %v3159, %v3163
      %v3166 = vshll.u32 %v3151, 16
      %v3168 = vrot.slane %v3166, 1
      %v3169 = vsel %vm1650, %v3164, %v3168
      %v3170 = vshrl.u32 %v3151, 16
      %v3172 = vor.u32 %v3170, %v3168
      %v3174 = vshll.u32 %v3152, 16
      %v3176 = vrot.slane %v3174, 1
      %v3177 = vsel %vm1650, %v3172, %v3176
      %v3178 = vshrl.u32 %v3152, 16
      %v3180 = vor.u32 %v3178, %v3176
      %v3182 = vshll.u32 %v3153, 16
      %v3184 = vrot.slane %v3182, 1
      %v3185 = vsel %vm1650, %v3180, %v3184
      %v3186 = vshrl.u32 %v3153, 16
      %v3188 = vor.u32 %v3186, %v3184
      %v3190 = vshll.u32 %v3154, 16
      %v3192 = vrot.slane %v3190, 1
      %v3193 = vsel %vm1650, %v3188, %v3192
      %v3194 = vshrl.u32 %v3154, 16
      %v3196 = vor.u32 %v3194, %v3192
      %v3198 = vshll.u32 %v3155, 16
      %v3200 = vrot.slane %v3198, 1
      %v3201 = vsel %vm1650, %v3196, %v3200
      %v3202 = vshrl.u32 %v3155, 16
      %v3204 = vor.u32 %v3202, %v3200
      %v3206 = vshll.u32 %v3156, 16
      %v3208 = vrot.slane %v3206, 1
      %v3209 = vsel %vm1650, %v3204, %v3208
      %v3210 = vshrl.u32 %v3156, 16
      %v3212 = vor.u32 %v3210, %v3208
      %v3214 = vshll.u32 %v3157, 16
      %v3216 = vrot.slane %v3214, 1
      %v3217 = vsel %vm1650, %v3212, %v3216
      %v3218 = vshrl.u32 %v3157, 16
      %v3220 = vor.u32 %v3218, %v3216
      %v3222 = vsel %vm1437, %v3169, 0
      %v3225 = vsel %vm1437, %v3177, 0
      %v3228 = vsel %vm1437, %v3185, 0
      %v3231 = vsel %vm1437, %v3193, 0
      %v3234 = vsel %vm1437, %v3201, 0
      %v3237 = vsel %vm1437, %v3209, 0
      %v3240 = vsel %vm1437, %v3217, 0
      %v3243 = vsel %vm1437, %v3220, 0
      %v3246 = vsel %vm1462, %v3117, 0
      %3248 = vmatprep.subr.bf16.mxu0 0
      %3249 = vmatpush1.bf16.msra.mxu0 0
      %3250 = vmatprep.subr.bf16.mxu0 0
      %3251 = vmatpush1.bf16.msra.mxu0 0
      %3252 = vmatprep.subr.bf16.mxu0 0
      %3253 = vmatpush1.bf16.msra.mxu0 0
      %3254 = vmatprep.subr.bf16.mxu0 0
      %3255 = vmatpush1.bf16.msra.mxu0 0
      %3256 = vmatprep.subr.bf16.mxu0 0
      %3257 = vmatpush1.bf16.msra.mxu0 0
      %3258 = vmatprep.subr.bf16.mxu0 0
      %3259 = vmatpush1.bf16.msra.mxu0 0
      %3260 = vmatprep.subr.bf16.mxu0 0
      %3261 = vmatpush1.bf16.msra.mxu0 0
      %3262 = vmatprep.subr.bf16.mxu0 0
      %3263 = vmatpush1.bf16.msra.mxu0 %v3246
      %3264 = vmatprep.subr.bf16.mxu0 0
      %3265 = vmatpush2.bf16.msra.mxu0 0
      %3266 = vmatprep.subr.bf16.mxu0 0
      %3267 = vmatpush2.bf16.msra.mxu0 0
      %3268 = vmatprep.subr.bf16.mxu0 0
      %3269 = vmatpush2.bf16.msra.mxu0 0
      %3270 = vmatprep.subr.bf16.mxu0 0
      %3271 = vmatpush2.bf16.msra.mxu0 0
      %3272 = vmatprep.subr.bf16.mxu0 0
      %3273 = vmatpush2.bf16.msra.mxu0 0
      %3274 = vmatprep.subr.bf16.mxu0 0
      %3275 = vmatpush2.bf16.msra.mxu0 0
      %3276 = vmatprep.subr.bf16.mxu0 0
      %3277 = vmatpush2.bf16.msra.mxu0 0
      %3278 = vmatprep.subr.bf16.mxu0 0
      %3279 = vmatpush2.bf16.msra.mxu0 0
      %3280 = vmatprep.mubr.bf16.mxu0 0
      %3281 = vmatmul.mubr.bf16.gmra.mxu0 %v3222
      %v3282 = vpop.f32.mrf.mxu0
      %v3283 = vadd.f32 0.0, %v3282
      %v3284 = vpop.f32.mrf.mxu0
      %v3285 = vpop.f32.mrf.mxu0
      %v3286 = vadd.f32 0.0, %v3285
      %v3287 = vpop.f32.mrf.mxu0
      %3288 = vmatprep.mubr.bf16.mxu0 0
      %3289 = vmatmul.mubr.bf16.gmra.mxu0 %v3225
      %v3290 = vpop.f32.mrf.mxu0
      %v3291 = vadd.f32 0.0, %v3290
      %v3292 = vpop.f32.mrf.mxu0
      %v3293 = vpop.f32.mrf.mxu0
      %v3294 = vadd.f32 0.0, %v3293
      %v3295 = vpop.f32.mrf.mxu0
      %3296 = vmatprep.mubr.bf16.mxu0 0
      %3297 = vmatmul.mubr.bf16.gmra.mxu0 %v3228
      %v3298 = vpop.f32.mrf.mxu0
      %v3299 = vadd.f32 0.0, %v3298
      %v3300 = vpop.f32.mrf.mxu0
      %v3301 = vpop.f32.mrf.mxu0
      %v3302 = vadd.f32 0.0, %v3301
      %v3303 = vpop.f32.mrf.mxu0
      %3304 = vmatprep.mubr.bf16.mxu0 0
      %3305 = vmatmul.mubr.bf16.gmra.mxu0 %v3231
      %v3306 = vpop.f32.mrf.mxu0
      %v3307 = vadd.f32 0.0, %v3306
      %v3308 = vpop.f32.mrf.mxu0
      %v3309 = vpop.f32.mrf.mxu0
      %v3310 = vadd.f32 0.0, %v3309
      %v3311 = vpop.f32.mrf.mxu0
      %3312 = vmatprep.mubr.bf16.mxu0 0
      %3313 = vmatmul.mubr.bf16.gmra.mxu0 %v3234
      %v3314 = vpop.f32.mrf.mxu0
      %v3315 = vadd.f32 0.0, %v3314
      %v3316 = vpop.f32.mrf.mxu0
      %v3317 = vpop.f32.mrf.mxu0
      %v3318 = vadd.f32 0.0, %v3317
      %v3319 = vpop.f32.mrf.mxu0
      %3320 = vmatprep.mubr.bf16.mxu0 0
      %3321 = vmatmul.mubr.bf16.gmra.mxu0 %v3237
      %v3322 = vpop.f32.mrf.mxu0
      %v3323 = vadd.f32 0.0, %v3322
      %v3324 = vpop.f32.mrf.mxu0
      %v3325 = vpop.f32.mrf.mxu0
      %v3326 = vadd.f32 0.0, %v3325
      %v3327 = vpop.f32.mrf.mxu0
      %3328 = vmatprep.mubr.bf16.mxu0 0
      %3329 = vmatmul.mubr.bf16.gmra.mxu0 %v3240
      %v3330 = vpop.f32.mrf.mxu0
      %v3331 = vadd.f32 0.0, %v3330
      %v3332 = vpop.f32.mrf.mxu0
      %v3333 = vpop.f32.mrf.mxu0
      %v3334 = vadd.f32 0.0, %v3333
      %v3335 = vpop.f32.mrf.mxu0
      %3336 = vmatprep.mubr.bf16.mxu0 0
      %3337 = vmatmul.mubr.bf16.gmra.mxu0 %v3243
      %v3338 = vpop.f32.mrf.mxu0
      %v3339 = vadd.f32 0.0, %v3338
      %v3340 = vpop.f32.mrf.mxu0
      %v3341 = vpop.f32.mrf.mxu0
      %v3342 = vpop.f32.mrf.mxu0
      %3343 = vdwg.mxu0
      %v3344 = vadd.f32 %v3085, %v3283
      %v3345 = vadd.f32 %v3086, %v3286
      %v3346 = vadd.f32 %v3087, %v3291
      %v3347 = vadd.f32 %v3088, %v3294
      %v3348 = vadd.f32 %v3089, %v3299
      %v3349 = vadd.f32 %v3090, %v3302
      %v3350 = vadd.f32 %v3091, %v3307
      %v3351 = vadd.f32 %v3092, %v3310
      %v3352 = vadd.f32 %v3093, %v3315
      %v3353 = vadd.f32 %v3094, %v3318
      %v3354 = vadd.f32 %v3095, %v3323
      %v3355 = vadd.f32 %v3096, %v3326
      %v3356 = vadd.f32 %v3097, %v3331
      %v3357 = vadd.f32 %v3098, %v3334
      %v3358 = vadd.f32 %v3099, %v3339
      %3359 = vst.msk [vmem:[#allocation4] sm:$0xff] %vm900, %v3344
      %3360 = vst.msk [vmem:[#allocation4 + $0x8] sm:$0xff] %vm900, %v3345
      %3361 = vst.msk [vmem:[#allocation4 + $0x10] sm:$0xff] %vm900, %v3346
      %3362 = vst.msk [vmem:[#allocation4 + $0x18] sm:$0xff] %vm900, %v3347
      %3363 = vst.msk [vmem:[#allocation4 + $0x20] sm:$0xff] %vm900, %v3348
      %3364 = vst.msk [vmem:[#allocation4 + $0x28] sm:$0xff] %vm900, %v3349
      %3365 = vst.msk [vmem:[#allocation4 + $0x30] sm:$0xff] %vm900, %v3350
      %3366 = vst.msk [vmem:[#allocation4 + $0x38] sm:$0xff] %vm900, %v3351
      %3367 = vst.msk [vmem:[#allocation4 + $0x40] sm:$0xff] %vm900, %v3352
      %3368 = vst.msk [vmem:[#allocation4 + $0x48] sm:$0xff] %vm900, %v3353
      %3369 = vst.msk [vmem:[#allocation4 + $0x50] sm:$0xff] %vm900, %v3354
      %3370 = vst.msk [vmem:[#allocation4 + $0x58] sm:$0xff] %vm900, %v3355
      %3371 = vst.msk [vmem:[#allocation4 + $0x60] sm:$0xff] %vm900, %v3356
      %3372 = vst.msk [vmem:[#allocation4 + $0x68] sm:$0xff] %vm900, %v3357
      %3373 = vst.msk [vmem:[#allocation4 + $0x70] sm:$0xff] %vm900, %v3358
      %v3374 = vld [vmem:[#allocation4] sm:$0xff]
      %v3375 = vld [vmem:[#allocation4 + $0x8] sm:$0xff]
      %v3376 = vld [vmem:[#allocation4 + $0x10] sm:$0xff]
      %v3377 = vld [vmem:[#allocation4 + $0x18] sm:$0xff]
      %v3378 = vld [vmem:[#allocation4 + $0x20] sm:$0xff]
      %v3379 = vld [vmem:[#allocation4 + $0x28] sm:$0xff]
      %v3380 = vld [vmem:[#allocation4 + $0x30] sm:$0xff]
      %v3381 = vld [vmem:[#allocation4 + $0x38] sm:$0xff]
      %v3382 = vld [vmem:[#allocation4 + $0x40] sm:$0xff]
      %v3383 = vld [vmem:[#allocation4 + $0x48] sm:$0xff]
      %v3384 = vld [vmem:[#allocation4 + $0x50] sm:$0xff]
      %v3385 = vld [vmem:[#allocation4 + $0x58] sm:$0xff]
      %v3386 = vld [vmem:[#allocation4 + $0x60] sm:$0xff]
      %v3387 = vld [vmem:[#allocation4 + $0x68] sm:$0xff]
      %v3388 = vld [vmem:[#allocation4 + $0x70] sm:$0xff]
      %v3389 = vld [vmem:[#allocation3 + $0x10] sm:$0xe]
      %v3390 = vld [vmem:[#allocation3 + $0x14] sm:$0xf]
      %v3391 = vld [vmem:[#allocation3 + $0x18] sm:$0xf]
      %v3392 = vld [vmem:[#allocation3 + $0x1c] sm:$0xf]
      %v3393 = vld [vmem:[#allocation3 + $0x20] sm:$0xf]
      %v3394 = vld [vmem:[#allocation3 + $0x24] sm:$0xf]
      %v3395 = vld [vmem:[#allocation3 + $0x28] sm:$0xf]
      %v3396 = vld [vmem:[#allocation3 + $0x2c] sm:$0xf]
      %v3397 = vld [vmem:[#allocation3 + $0x30] sm:$0xf]
      %v3398 = vld [vmem:[#allocation3 + $0x34] sm:$0xf]
      %v3399 = vld [vmem:[#allocation3 + $0x38] sm:$0xf]
      %v3400 = vld [vmem:[#allocation3 + $0x3c] sm:$0xf]
      %v3401 = vld [vmem:[#allocation3 + $0x40] sm:$0xf]
      %v3402 = vld [vmem:[#allocation3 + $0x44] sm:$0xf]
      %v3403 = vld [vmem:[#allocation3 + $0x48] sm:$0xf]
      %v3404 = vld [vmem:[#allocation3 + $0x4c] sm:$0x1]
      %s3405 = scalar_lea.vmem %s480, 16
      %v3406 = vld [vmem:[%s3405] sm:$0x3]
      %v3423 = vunpack.c.l.b16 %v3389
      %v3424 = vunpack.c.l.b16 %v3390
      %v3425 = vunpack.c.l.b16 %v3391
      %v3426 = vunpack.c.l.b16 %v3392
      %v3427 = vunpack.c.l.b16 %v3393
      %v3428 = vunpack.c.l.b16 %v3394
      %v3429 = vunpack.c.l.b16 %v3395
      %v3430 = vunpack.c.l.b16 %v3396
      %v3431 = vunpack.c.l.b16 %v3397
      %v3432 = vunpack.c.l.b16 %v3398
      %v3433 = vunpack.c.l.b16 %v3399
      %v3434 = vunpack.c.l.b16 %v3400
      %v3435 = vunpack.c.l.b16 %v3401
      %v3436 = vunpack.c.l.b16 %v3402
      %v3437 = vunpack.c.l.b16 %v3403
      %v3438 = vunpack.c.l.b16 %v3404
      %v3439 = vpack.c.b16 %v3424, %v3423
      %v3440 = vpack.c.b16 %v3426, %v3425
      %v3441 = vpack.c.b16 %v3428, %v3427
      %v3442 = vpack.c.b16 %v3430, %v3429
      %v3443 = vpack.c.b16 %v3432, %v3431
      %v3444 = vpack.c.b16 %v3434, %v3433
      %v3445 = vpack.c.b16 %v3436, %v3435
      %v3446 = vpack.c.b16 %v3438, %v3437
      %v3447 = vrot.slane %v3439, 1
      %v3448 = vrot.slane %v3440, 1
      %v3449 = vsel %vm1940, %v3447, %v3448
      %v3450 = vrot.slane %v3441, 1
      %v3451 = vsel %vm1940, %v3448, %v3450
      %v3452 = vrot.slane %v3442, 1
      %v3453 = vsel %vm1940, %v3450, %v3452
      %v3454 = vrot.slane %v3443, 1
      %v3455 = vsel %vm1940, %v3452, %v3454
      %v3456 = vrot.slane %v3444, 1
      %v3457 = vsel %vm1940, %v3454, %v3456
      %v3458 = vrot.slane %v3445, 1
      %v3459 = vsel %vm1940, %v3456, %v3458
      %v3460 = vrot.slane %v3446, 1
      %v3461 = vsel %vm1940, %v3458, %v3460
      %v3463 = vsel %vm1437, %v3449, 0
      %v3466 = vsel %vm1437, %v3451, 0
      %v3469 = vsel %vm1437, %v3453, 0
      %v3472 = vsel %vm1437, %v3455, 0
      %v3475 = vsel %vm1437, %v3457, 0
      %v3478 = vsel %vm1437, %v3459, 0
      %v3481 = vsel %vm1437, %v3461, 0
      %v3484 = vsel %vm1437, %v3460, 0
      %v3487 = vsel %vm1462, %v3406, 0
      %3489 = vmatprep.subr.bf16.mxu0 0
      %3490 = vmatpush1.bf16.msra.mxu0 0
      %3491 = vmatprep.subr.bf16.mxu0 0
      %3492 = vmatpush1.bf16.msra.mxu0 0
      %3493 = vmatprep.subr.bf16.mxu0 0
      %3494 = vmatpush1.bf16.msra.mxu0 0
      %3495 = vmatprep.subr.bf16.mxu0 0
      %3496 = vmatpush1.bf16.msra.mxu0 0
      %3497 = vmatprep.subr.bf16.mxu0 0
      %3498 = vmatpush1.bf16.msra.mxu0 0
      %3499 = vmatprep.subr.bf16.mxu0 0
      %3500 = vmatpush1.bf16.msra.mxu0 0
      %3501 = vmatprep.subr.bf16.mxu0 0
      %3502 = vmatpush1.bf16.msra.mxu0 0
      %3503 = vmatprep.subr.bf16.mxu0 0
      %3504 = vmatpush1.bf16.msra.mxu0 %v3487
      %3505 = vmatprep.subr.bf16.mxu0 0
      %3506 = vmatpush2.bf16.msra.mxu0 0
      %3507 = vmatprep.subr.bf16.mxu0 0
      %3508 = vmatpush2.bf16.msra.mxu0 0
      %3509 = vmatprep.subr.bf16.mxu0 0
      %3510 = vmatpush2.bf16.msra.mxu0 0
      %3511 = vmatprep.subr.bf16.mxu0 0
      %3512 = vmatpush2.bf16.msra.mxu0 0
      %3513 = vmatprep.subr.bf16.mxu0 0
      %3514 = vmatpush2.bf16.msra.mxu0 0
      %3515 = vmatprep.subr.bf16.mxu0 0
      %3516 = vmatpush2.bf16.msra.mxu0 0
      %3517 = vmatprep.subr.bf16.mxu0 0
      %3518 = vmatpush2.bf16.msra.mxu0 0
      %3519 = vmatprep.subr.bf16.mxu0 0
      %3520 = vmatpush2.bf16.msra.mxu0 0
      %3521 = vmatprep.mubr.bf16.mxu0 0
      %3522 = vmatmul.mubr.bf16.gmra.mxu0 %v3463
      %v3523 = vpop.f32.mrf.mxu0
      %v3524 = vadd.f32 0.0, %v3523
      %v3525 = vpop.f32.mrf.mxu0
      %v3526 = vpop.f32.mrf.mxu0
      %v3527 = vadd.f32 0.0, %v3526
      %v3528 = vpop.f32.mrf.mxu0
      %3529 = vmatprep.mubr.bf16.mxu0 0
      %3530 = vmatmul.mubr.bf16.gmra.mxu0 %v3466
      %v3531 = vpop.f32.mrf.mxu0
      %v3532 = vadd.f32 0.0, %v3531
      %v3533 = vpop.f32.mrf.mxu0
      %v3534 = vpop.f32.mrf.mxu0
      %v3535 = vadd.f32 0.0, %v3534
      %v3536 = vpop.f32.mrf.mxu0
      %3537 = vmatprep.mubr.bf16.mxu0 0
      %3538 = vmatmul.mubr.bf16.gmra.mxu0 %v3469
      %v3539 = vpop.f32.mrf.mxu0
      %v3540 = vadd.f32 0.0, %v3539
      %v3541 = vpop.f32.mrf.mxu0
      %v3542 = vpop.f32.mrf.mxu0
      %v3543 = vadd.f32 0.0, %v3542
      %v3544 = vpop.f32.mrf.mxu0
      %3545 = vmatprep.mubr.bf16.mxu0 0
      %3546 = vmatmul.mubr.bf16.gmra.mxu0 %v3472
      %v3547 = vpop.f32.mrf.mxu0
      %v3548 = vadd.f32 0.0, %v3547
      %v3549 = vpop.f32.mrf.mxu0
      %v3550 = vpop.f32.mrf.mxu0
      %v3551 = vadd.f32 0.0, %v3550
      %v3552 = vpop.f32.mrf.mxu0
      %3553 = vmatprep.mubr.bf16.mxu0 0
      %3554 = vmatmul.mubr.bf16.gmra.mxu0 %v3475
      %v3555 = vpop.f32.mrf.mxu0
      %v3556 = vadd.f32 0.0, %v3555
      %v3557 = vpop.f32.mrf.mxu0
      %v3558 = vpop.f32.mrf.mxu0
      %v3559 = vadd.f32 0.0, %v3558
      %v3560 = vpop.f32.mrf.mxu0
      %3561 = vmatprep.mubr.bf16.mxu0 0
      %3562 = vmatmul.mubr.bf16.gmra.mxu0 %v3478
      %v3563 = vpop.f32.mrf.mxu0
      %v3564 = vadd.f32 0.0, %v3563
      %v3565 = vpop.f32.mrf.mxu0
      %v3566 = vpop.f32.mrf.mxu0
      %v3567 = vadd.f32 0.0, %v3566
      %v3568 = vpop.f32.mrf.mxu0
      %3569 = vmatprep.mubr.bf16.mxu0 0
      %3570 = vmatmul.mubr.bf16.gmra.mxu0 %v3481
      %v3571 = vpop.f32.mrf.mxu0
      %v3572 = vadd.f32 0.0, %v3571
      %v3573 = vpop.f32.mrf.mxu0
      %v3574 = vpop.f32.mrf.mxu0
      %v3575 = vadd.f32 0.0, %v3574
      %v3576 = vpop.f32.mrf.mxu0
      %3577 = vmatprep.mubr.bf16.mxu0 0
      %3578 = vmatmul.mubr.bf16.gmra.mxu0 %v3484
      %v3579 = vpop.f32.mrf.mxu0
      %v3580 = vadd.f32 0.0, %v3579
      %v3581 = vpop.f32.mrf.mxu0
      %v3582 = vpop.f32.mrf.mxu0
      %v3583 = vpop.f32.mrf.mxu0
      %3584 = vdwg.mxu0
      %v3585 = vadd.f32 %v3374, %v3524
      %v3586 = vadd.f32 %v3375, %v3527
      %v3587 = vadd.f32 %v3376, %v3532
      %v3588 = vadd.f32 %v3377, %v3535
      %v3589 = vadd.f32 %v3378, %v3540
      %v3590 = vadd.f32 %v3379, %v3543
      %v3591 = vadd.f32 %v3380, %v3548
      %v3592 = vadd.f32 %v3381, %v3551
      %v3593 = vadd.f32 %v3382, %v3556
      %v3594 = vadd.f32 %v3383, %v3559
      %v3595 = vadd.f32 %v3384, %v3564
      %v3596 = vadd.f32 %v3385, %v3567
      %v3597 = vadd.f32 %v3386, %v3572
      %v3598 = vadd.f32 %v3387, %v3575
      %v3599 = vadd.f32 %v3388, %v3580
      %3600 = vst.msk [vmem:[#allocation4] sm:$0xff] %vm900, %v3585
      %3601 = vst.msk [vmem:[#allocation4 + $0x8] sm:$0xff] %vm900, %v3586
      %3602 = vst.msk [vmem:[#allocation4 + $0x10] sm:$0xff] %vm900, %v3587
      %3603 = vst.msk [vmem:[#allocation4 + $0x18] sm:$0xff] %vm900, %v3588
      %3604 = vst.msk [vmem:[#allocation4 + $0x20] sm:$0xff] %vm900, %v3589
      %3605 = vst.msk [vmem:[#allocation4 + $0x28] sm:$0xff] %vm900, %v3590
      %3606 = vst.msk [vmem:[#allocation4 + $0x30] sm:$0xff] %vm900, %v3591
      %3607 = vst.msk [vmem:[#allocation4 + $0x38] sm:$0xff] %vm900, %v3592
      %3608 = vst.msk [vmem:[#allocation4 + $0x40] sm:$0xff] %vm900, %v3593
      %3609 = vst.msk [vmem:[#allocation4 + $0x48] sm:$0xff] %vm900, %v3594
      %3610 = vst.msk [vmem:[#allocation4 + $0x50] sm:$0xff] %vm900, %v3595
      %3611 = vst.msk [vmem:[#allocation4 + $0x58] sm:$0xff] %vm900, %v3596
      %3612 = vst.msk [vmem:[#allocation4 + $0x60] sm:$0xff] %vm900, %v3597
      %3613 = vst.msk [vmem:[#allocation4 + $0x68] sm:$0xff] %vm900, %v3598
      %3614 = vst.msk [vmem:[#allocation4 + $0x70] sm:$0xff] %vm900, %v3599
      %v3615 = vld [vmem:[#allocation4] sm:$0xff]
      %v3616 = vld [vmem:[#allocation4 + $0x8] sm:$0xff]
      %v3617 = vld [vmem:[#allocation4 + $0x10] sm:$0xff]
      %v3618 = vld [vmem:[#allocation4 + $0x18] sm:$0xff]
      %v3619 = vld [vmem:[#allocation4 + $0x20] sm:$0xff]
      %v3620 = vld [vmem:[#allocation4 + $0x28] sm:$0xff]
      %v3621 = vld [vmem:[#allocation4 + $0x30] sm:$0xff]
      %v3622 = vld [vmem:[#allocation4 + $0x38] sm:$0xff]
      %v3623 = vld [vmem:[#allocation4 + $0x40] sm:$0xff]
      %v3624 = vld [vmem:[#allocation4 + $0x48] sm:$0xff]
      %v3625 = vld [vmem:[#allocation4 + $0x50] sm:$0xff]
      %v3626 = vld [vmem:[#allocation4 + $0x58] sm:$0xff]
      %v3627 = vld [vmem:[#allocation4 + $0x60] sm:$0xff]
      %v3628 = vld [vmem:[#allocation4 + $0x68] sm:$0xff]
      %v3629 = vld [vmem:[#allocation4 + $0x70] sm:$0xff]
      %v3630 = vld [vmem:[%s483] sm:$0x1]
      %v3632 = vlaneseq
      %v3633 = vshrl.u32 %v3632, 7
      %v3634 = vsub.s32 0, %v3633
      %v3635 = vrot.slane %v3630, %v3634
      %v3637 = vmul.f32 %v3615, %v3635
      %v3638 = vmul.f32 %v3616, %v3635
      %v3639 = vmul.f32 %v3617, %v3635
      %v3640 = vmul.f32 %v3618, %v3635
      %v3641 = vmul.f32 %v3619, %v3635
      %v3642 = vmul.f32 %v3620, %v3635
      %v3643 = vmul.f32 %v3621, %v3635
      %v3644 = vmul.f32 %v3622, %v3635
      %v3645 = vmul.f32 %v3623, %v3635
      %v3646 = vmul.f32 %v3624, %v3635
      %v3647 = vmul.f32 %v3625, %v3635
      %v3648 = vmul.f32 %v3626, %v3635
      %v3649 = vmul.f32 %v3627, %v3635
      %v3650 = vmul.f32 %v3628, %v3635
      %v3651 = vmul.f32 %v3629, %v3635
      %v3652 = vld [vmem:[%s486] sm:$0x1]
      %v3654 = vlaneseq
      %v3655 = vshrl.u32 %v3654, 7
      %v3656 = vsub.s32 0, %v3655
      %v3657 = vrot.slane %v3652, %v3656
      %v3659 = vadd.f32 %v3637, %v3657
      %v3660 = vadd.f32 %v3638, %v3657
      %v3661 = vadd.f32 %v3639, %v3657
      %v3662 = vadd.f32 %v3640, %v3657
      %v3663 = vadd.f32 %v3641, %v3657
      %v3664 = vadd.f32 %v3642, %v3657
      %v3665 = vadd.f32 %v3643, %v3657
      %v3666 = vadd.f32 %v3644, %v3657
      %v3667 = vadd.f32 %v3645, %v3657
      %v3668 = vadd.f32 %v3646, %v3657
      %v3669 = vadd.f32 %v3647, %v3657
      %v3670 = vadd.f32 %v3648, %v3657
      %v3671 = vadd.f32 %v3649, %v3657
      %v3672 = vadd.f32 %v3650, %v3657
      %v3673 = vadd.f32 %v3651, %v3657
      %v3674 = vmul.f32 %v3659, 0.1
      %v3675 = vmul.f32 %v3660, 0.1
      %v3676 = vmul.f32 %v3661, 0.1
      %v3677 = vmul.f32 %v3662, 0.1
      %v3678 = vmul.f32 %v3663, 0.1
      %v3679 = vmul.f32 %v3664, 0.1
      %v3680 = vmul.f32 %v3665, 0.1
      %v3681 = vmul.f32 %v3666, 0.1
      %v3682 = vmul.f32 %v3667, 0.1
      %v3683 = vmul.f32 %v3668, 0.1
      %v3684 = vmul.f32 %v3669, 0.1
      %v3685 = vmul.f32 %v3670, 0.1
      %v3686 = vmul.f32 %v3671, 0.1
      %v3687 = vmul.f32 %v3672, 0.1
      %v3688 = vmul.f32 %v3673, 0.1
      %v3689 = vmax.f32 %v3659, %v3674
      %v3690 = vmax.f32 %v3660, %v3675
      %v3691 = vmax.f32 %v3661, %v3676
      %v3692 = vmax.f32 %v3662, %v3677
      %v3693 = vmax.f32 %v3663, %v3678
      %v3694 = vmax.f32 %v3664, %v3679
      %v3695 = vmax.f32 %v3665, %v3680
      %v3696 = vmax.f32 %v3666, %v3681
      %v3697 = vmax.f32 %v3667, %v3682
      %v3698 = vmax.f32 %v3668, %v3683
      %v3699 = vmax.f32 %v3669, %v3684
      %v3700 = vmax.f32 %v3670, %v3685
      %v3701 = vmax.f32 %v3671, %v3686
      %v3702 = vmax.f32 %v3672, %v3687
      %v3703 = vmax.f32 %v3673, %v3688
      %v3704 = vld [vmem:[#allocation2 + $0x11] sm:$0xff]
      %v3705 = vld [vmem:[#allocation2 + $0x19] sm:$0xff]
      %v3706 = vld [vmem:[#allocation2 + $0x21] sm:$0xff]
      %v3707 = vld [vmem:[#allocation2 + $0x29] sm:$0xff]
      %v3708 = vld [vmem:[#allocation2 + $0x31] sm:$0xff]
      %v3709 = vld [vmem:[#allocation2 + $0x39] sm:$0xff]
      %v3710 = vld [vmem:[#allocation2 + $0x41] sm:$0xff]
      %v3711 = vld [vmem:[#allocation2 + $0x49] sm:$0xff]
      %v3712 = vld [vmem:[#allocation2 + $0x51] sm:$0xff]
      %v3713 = vld [vmem:[#allocation2 + $0x59] sm:$0xff]
      %v3714 = vld [vmem:[#allocation2 + $0x61] sm:$0xff]
      %v3715 = vld [vmem:[#allocation2 + $0x69] sm:$0xff]
      %v3716 = vld [vmem:[#allocation2 + $0x71] sm:$0xff]
      %v3717 = vld [vmem:[#allocation2 + $0x79] sm:$0xff]
      %v3718 = vld [vmem:[#allocation2 + $0x81] sm:$0xff]
      %v3719 = vadd.f32 %v3704, %v3689
      %v3720 = vadd.f32 %v3705, %v3690
      %v3721 = vadd.f32 %v3706, %v3691
      %v3722 = vadd.f32 %v3707, %v3692
      %v3723 = vadd.f32 %v3708, %v3693
      %v3724 = vadd.f32 %v3709, %v3694
      %v3725 = vadd.f32 %v3710, %v3695
      %v3726 = vadd.f32 %v3711, %v3696
      %v3727 = vadd.f32 %v3712, %v3697
      %v3728 = vadd.f32 %v3713, %v3698
      %v3729 = vadd.f32 %v3714, %v3699
      %v3730 = vadd.f32 %v3715, %v3700
      %v3731 = vadd.f32 %v3716, %v3701
      %v3732 = vadd.f32 %v3717, %v3702
      %v3733 = vadd.f32 %v3718, %v3703
      %3734 = vst.msk [vmem:[#allocation2 + $0x11] sm:$0xff] %vm900, %v3719
      %3735 = vst.msk [vmem:[#allocation2 + $0x19] sm:$0xff] %vm900, %v3720
      %3736 = vst.msk [vmem:[#allocation2 + $0x21] sm:$0xff] %vm900, %v3721
      %3737 = vst.msk [vmem:[#allocation2 + $0x29] sm:$0xff] %vm900, %v3722
      %3738 = vst.msk [vmem:[#allocation2 + $0x31] sm:$0xff] %vm900, %v3723
      %3739 = vst.msk [vmem:[#allocation2 + $0x39] sm:$0xff] %vm900, %v3724
      %3740 = vst.msk [vmem:[#allocation2 + $0x41] sm:$0xff] %vm900, %v3725
      %3741 = vst.msk [vmem:[#allocation2 + $0x49] sm:$0xff] %vm900, %v3726
      %3742 = vst.msk [vmem:[#allocation2 + $0x51] sm:$0xff] %vm900, %v3727
      %3743 = vst.msk [vmem:[#allocation2 + $0x59] sm:$0xff] %vm900, %v3728
      %3744 = vst.msk [vmem:[#allocation2 + $0x61] sm:$0xff] %vm900, %v3729
      %3745 = vst.msk [vmem:[#allocation2 + $0x69] sm:$0xff] %vm900, %v3730
      %3746 = vst.msk [vmem:[#allocation2 + $0x71] sm:$0xff] %vm900, %v3731
      %3747 = vst.msk [vmem:[#allocation2 + $0x79] sm:$0xff] %vm900, %v3732
      %3748 = vst.msk [vmem:[#allocation2 + $0x81] sm:$0xff] %vm900, %v3733
      %p3749 = scmp.eq.s32.totalorder %s27, 1
      // Predicated region
      $region69: #{resblock_pallas.1} parent=63 // pred_check
        %p3750 = pneg %p3749
      $region70: #{resblock_pallas.1} parent=63 // pred_check_branch
        %3752 = sbr.rel (%p3750) target = $region72
      $region71: #{resblock_pallas.1} parent=63 // pred_region
        %v3753 = vld [vmem:[#allocation2 + $0x10] sm:$0xff]
        %v3754 = vld [vmem:[#allocation2 + $0x18] sm:$0xff]
        %v3755 = vld [vmem:[#allocation2 + $0x20] sm:$0xff]
        %v3756 = vld [vmem:[#allocation2 + $0x28] sm:$0xff]
        %v3757 = vld [vmem:[#allocation2 + $0x30] sm:$0xff]
        %v3758 = vld [vmem:[#allocation2 + $0x38] sm:$0xff]
        %v3759 = vld [vmem:[#allocation2 + $0x40] sm:$0xff]
        %v3760 = vld [vmem:[#allocation2 + $0x48] sm:$0xff]
        %v3761 = vld [vmem:[#allocation2 + $0x50] sm:$0xff]
        %v3762 = vld [vmem:[#allocation2 + $0x58] sm:$0xff]
        %v3763 = vld [vmem:[#allocation2 + $0x60] sm:$0xff]
        %v3764 = vld [vmem:[#allocation2 + $0x68] sm:$0xff]
        %v3765 = vld [vmem:[#allocation2 + $0x70] sm:$0xff]
        %v3766 = vld [vmem:[#allocation2 + $0x78] sm:$0xff]
        %v3767 = vld [vmem:[#allocation2 + $0x80] sm:$0xff]
        %v3768 = vld [vmem:[#allocation2 + $0x88] sm:$0xff]
        %3769 = vst.msk [vmem:[%s491] sm:$0xff] %vm900, %v3753
        %3770 = vst.msk [vmem:[%s491 + $0x8] sm:$0xff] %vm900, %v3754
        %3771 = vst.msk [vmem:[%s491 + $0x10] sm:$0xff] %vm900, %v3755
        %3772 = vst.msk [vmem:[%s491 + $0x18] sm:$0xff] %vm900, %v3756
        %3773 = vst.msk [vmem:[%s491 + $0x20] sm:$0xff] %vm900, %v3757
        %3774 = vst.msk [vmem:[%s491 + $0x28] sm:$0xff] %vm900, %v3758
        %3775 = vst.msk [vmem:[%s491 + $0x30] sm:$0xff] %vm900, %v3759
        %3776 = vst.msk [vmem:[%s491 + $0x38] sm:$0xff] %vm900, %v3760
        %3777 = vst.msk [vmem:[%s491 + $0x40] sm:$0xff] %vm900, %v3761
        %3778 = vst.msk [vmem:[%s491 + $0x48] sm:$0xff] %vm900, %v3762
        %3779 = vst.msk [vmem:[%s491 + $0x50] sm:$0xff] %vm900, %v3763
        %3780 = vst.msk [vmem:[%s491 + $0x58] sm:$0xff] %vm900, %v3764
        %3781 = vst.msk [vmem:[%s491 + $0x60] sm:$0xff] %vm900, %v3765
        %3782 = vst.msk [vmem:[%s491 + $0x68] sm:$0xff] %vm900, %v3766
        %3783 = vst.msk [vmem:[%s491 + $0x70] sm:$0xff] %vm900, %v3767
        %3784 = vst.msk [vmem:[%s491 + $0x78] sm:$0xff] %vm900, %v3768
      $region72: #{resblock_pallas.1} parent=63 // pred_fallthru
        _
      %p3785 = scmp.lt.s32.totalorder %s26, 1
      %s3786 = scalar_select %p3785, %s26, 1
      %s3787 = smul.addr %s3786, 16
      %s3788 = smul.addr %s3787, 8
      %s3789 = scalar_lea.vmem %s11, %s3788
      // Predicated region
      $region73: #{resblock_pallas.1} parent=63 // pred_check
        %p3790 = pneg %p318
      $region74: #{resblock_pallas.1} parent=63 // pred_check_branch
        %3792 = sbr.rel (%p3790) target = $region76
      $region75: #{resblock_pallas.1} parent=63 // pred_region
        _
      $region76: #{resblock_pallas.1} parent=63 // pred_fallthru
        _
    $region64: #{resblock_pallas.1} parent=5 // pred_fallthru
      _
    %p3793 = scmp.le.s32.totalorder 2, %s17
    // Predicated region
    $region77: #{resblock_pallas.1} parent=5 // pred_check
      %p3794 = pneg %p3793
    $region78: #{resblock_pallas.1} parent=5 // pred_check_branch
      %3796 = sbr.rel (%p3794) target = $region80
    $region79: #{resblock_pallas.1} parent=5 // pred_region
      %s3797 = ssub.s32 %s17, 2
      // Predicated region
      $region81: #{resblock_pallas.1} parent=79 // pred_check
        %p3798 = pneg %p324
      $region82: #{resblock_pallas.1} parent=79 // pred_check_branch
        %3800 = sbr.rel (%p3798) target = $region84
      $region83: #{resblock_pallas.1} parent=79 // pred_region
        %p3801 = scmp.lt.s32.totalorder %s28, 1
        %s3802 = scalar_select %p3801, %s28, 1
        %s3803 = smul.addr %s3802, 16
        %s3804 = smul.addr %s3803, 8
        %s3805 = scalar_lea.vmem %s11, %s3804
      $region84: #{resblock_pallas.1} parent=79 // pred_fallthru
        _
    $region80: #{resblock_pallas.1} parent=5 // pred_fallthru
      _
  $region6: #{resblock_pallas.1} parent=0 // loop_footer
    %s21 = sadd.s32 1, %s17
  $region7: #{resblock_pallas.1} parent=0 // loop_footer_branch
    %16 = sbr.rel target = $region3
  $region8: #{resblock_pallas.1} parent=0 // loop_exit
    _

</llo_original>
